<compile_context>
chip_gen: v6e
topology: v6e:2x2x1
jax: 0.10.0
libtpu: 0.0.40
codegen_flags: <defaults>
</compile_context>

<pallas_src>
import functools

import jax
import jax.numpy as jnp
import numpy as np
from jax import lax
from jax.experimental import pallas as pl
from jax.experimental.pallas import tpu as pltpu

# ----------------------------- configuration ------------------------------
IN_CHANNELS = 8          # channels of the skip (res_hidden_states) tensor
PREV_OUT = 8             # prev_output_channel
OUT_CHANNELS = 8
TEMB_CHANNELS = 16
NUM_RES_BLOCKS = 1
GROUPS = 4               # norm_num_groups
EPS = 1e-6


# --------------------------- in-kernel helpers -----------------------------
def _group_norm_silu(x, gamma, beta, groups, eps):
    """GroupNorm + SiLU on channel-major (C, S) activations (f32).

    One fused lane reduction per statistic over the whole (C, S) tensor; the remaining
    per-group reductions only touch (C, 1) columns.  Two-pass (subtract-mean) variance.
    """
    C, S = x.shape
    cg = C // groups
    n = float(cg * S)

    row_sum = jnp.sum(x, axis=1, keepdims=True)                         # (C, 1)
    mean_c = jnp.concatenate(
        [jnp.full((cg, 1), jnp.sum(row_sum[g * cg:(g + 1) * cg, :]) / n, x.dtype)
         for g in range(groups)], axis=0)                               # (C, 1)
    d = x - mean_c
    sq_sum = jnp.sum(d * d, axis=1, keepdims=True)                      # (C, 1)
    inv_c = jnp.concatenate(
        [jnp.full((cg, 1),
                  lax.rsqrt(jnp.sum(sq_sum[g * cg:(g + 1) * cg, :]) / n + eps),
                  x.dtype)
         for g in range(groups)], axis=0)                               # (C, 1)
    y = d * (inv_c * gamma) + beta
    return y * jax.nn.sigmoid(y)                                        # SiLU -> EUP


def _build_patches(x, mask_rows, patches_ref, H, W):
    """im2col for a 3x3x3 'same' conv on channel-major (C, S) activations.

    Each tap is a lane rotation (XLU) of x zeroed at the volume border by a 0/1 mask
    (so roll's wrap-around never leaks), stored straight into the persistent VMEM
    scratch at rows [k*C, (k+1)*C) (tap-major / channel-minor, matching the packed
    weights).  S = D*H*W flattened row-major (d, h, w).
    """
    C, S = x.shape
    HW = H * W
    k = 0
    for dd in (-1, 0, 1):
        for dh in (-1, 0, 1):
            for dw in (-1, 0, 1):
                off = dd * HW + dh * W + dw
                if off == 0:
                    tap = x                               # center tap: always valid
                else:
                    tap = pltpu.roll(x, (-off) % S, 1) * mask_rows[k]
                patches_ref[pl.ds(k * C, C), :] = tap
                k += 1


# ------------------------------ fused kernel -------------------------------
def _upblock_kernel(hid_ref, res_ref, bias1_ref, prm_ref,
                    w1_ref, w2s_ref, wup_ref, mask_ref,
                    out_ref, patches_ref, *,
                    cin, cout, H, W, groups, eps):
    """Whole UpBlock forward for one batch element; everything stays in VMEM."""
    # concat([hidden, skip]) along channels -> (Cin, S); lane axis = flattened spatial.
    x = jnp.concatenate([hid_ref[0], res_ref[0]], axis=0).astype(jnp.float32)

    masks = mask_ref[...]
    mask_rows = [masks[k:k + 1, :] for k in range(27)]

    # Unpack the single packed parameter column (all offsets static, 8-row aligned).
    o = 0
    g1 = prm_ref[pl.ds(o, cin), :];       o += cin
    b1 = prm_ref[pl.ds(o, cin), :];       o += cin
    g2 = prm_ref[pl.ds(o, cout), :];      o += cout
    b2 = prm_ref[pl.ds(o, cout), :];      o += cout
    cb2 = prm_ref[pl.ds(o, cout), :];     o += cout   # conv2 bias + skip bias
    upb = prm_ref[pl.ds(o, 4 * cout), :]              # upsampler bias, tiled per phase

    def conv(w_ref, rows, bias):
        # bf16 MXU operands, f32 accumulation.
        p = patches_ref[pl.ds(0, rows), :].astype(jnp.bfloat16)
        return jnp.dot(w_ref[...], p, preferred_element_type=jnp.float32) + bias

    # ---- ResnetBlock ----
    h = _group_norm_silu(x, g1, b1, groups, eps)
    _build_patches(h, mask_rows, patches_ref, H, W)
    h = conv(w1_ref, 27 * cin, bias1_ref[0])           # conv1 (+ temb folded into bias)

    h = _group_norm_silu(h, g2, b2, groups, eps)
    _build_patches(h, mask_rows, patches_ref, H, W)
    patches_ref[pl.ds(27 * cout, cin), :] = x          # fuse 1x1x1 skip conv into conv2
    h = conv(w2s_ref, 27 * cout + cin, cb2)            # conv2 + skip, combined bias

    # ---- Upsampler: nearest x2 (H, W) folded into the conv via 4 sub-pixel phases ----
    _build_patches(h, mask_rows, patches_ref, H, W)
    y = conv(wup_ref, 27 * cout, upb)                  # (4*Cout, S) phase slab

    out_ref[0] = y.astype(out_ref.dtype)


# ----------------------------- host-side packing ----------------------------
def _pack_conv_weight(w):
    """(O, I, kD, kH, kW) -> (O, 27*I) matching the im2col row order (tap-major, ci-minor)."""
    return jnp.transpose(w, (0, 2, 3, 4, 1)).reshape(w.shape[0], -1)


def _fold_axis(w, axis, phase):
    """Fold a nearest-x2 output phase (0 = even, 1 = odd) into one kernel axis."""
    def take(i):
        s = [slice(None)] * w.ndim
        s[axis] = slice(i, i + 1)
        return w[tuple(s)]
    lo, mid, hi = take(0), take(1), take(2)
    z = jnp.zeros_like(lo)
    if phase == 0:
        return jnp.concatenate([lo, mid + hi, z], axis=axis)    # offsets -1, 0, (+1 unused)
    return jnp.concatenate([z, lo + mid, hi], axis=axis)        # offsets (-1 unused), 0, +1


def _pack_upsample_phase_weight(w):
    """Sub-pixel fold: (O, I, 3, 3, 3) -> (4*O, 27*I).

    Row block (a*2+b) holds the effective LOW-res 3x3x3 conv producing high-res outputs
    at rows 2h+a, cols 2w+b of the x2 nearest-upsampled-then-convolved result.
    """
    phases = []
    for a in (0, 1):
        wa = _fold_axis(w, 3, a)          # kH axis
        for b in (0, 1):
            phases.append(_pack_conv_weight(_fold_axis(wa, 4, b)))   # kW axis
    return jnp.concatenate(phases, axis=0)


def _make_conv_masks(D, H, W):
    """(27, D*H*W) 0/1 validity masks for each 3x3x3 tap (implements zero padding)."""
    d = np.arange(D)[:, None, None]
    h = np.arange(H)[None, :, None]
    w = np.arange(W)[None, None, :]
    rows = []
    for dd in (-1, 0, 1):
        for dh in (-1, 0, 1):
            for dw in (-1, 0, 1):
                valid = ((d + dd >= 0) & (d + dd < D) &
                         (h + dh >= 0) & (h + dh < H) &
                         (w + dw >= 0) & (w + dw < W))
                rows.append(valid.reshape(-1))
    return jnp.asarray(np.stack(rows).astype(np.float32))


# ------------------------------ module forward ------------------------------
def upblock_forward(hidden, res_hidden_states_list, temb, params):
    """hidden: (B, C_prev, D, H, W) NCDHW; res list of NCDHW tensors; temb: (B, T)."""
    assert len(params["resnets"]) == 1 and len(res_hidden_states_list) == 1
    rp = params["resnets"][0]
    up = params["upsampler"]

    B, Cprev, D, H, W = hidden.shape
    res = res_hidden_states_list[-1]
    Cskip = res.shape[1]
    Cin = Cprev + Cskip
    Cout = up["w"].shape[0]
    S = D * H * W

    # Tiny time-embedding projection in plain JAX; fold it with conv1's bias into a
    # per-batch per-channel bias (a pallas_call launch costs more than this matmul).
    tproj = jax.nn.silu(temb) @ rp["temb_w"].T + rp["temb_b"]              # (B, Cout)
    bias1 = (rp["conv1_b"][None, :] + tproj).reshape(B, Cout, 1).astype(jnp.float32)

    # NCDHW is already channel-major -> flattening spatial dims is a free reshape.
    hid2 = hidden.reshape(B, Cprev, S)
    res2 = res.reshape(B, Cskip, S)

    # Packed bf16 MXU weights.
    w1 = _pack_conv_weight(rp["conv1_w"]).astype(jnp.bfloat16)             # (Cout, 27*Cin)
    w2s = jnp.concatenate(
        [_pack_conv_weight(rp["conv2_w"]), rp["skip_w"].reshape(Cout, Cin)],
        axis=1).astype(jnp.bfloat16)                                       # (Cout, 27*Cout+Cin)
    wup = _pack_upsample_phase_weight(up["w"]).astype(jnp.bfloat16)        # (4*Cout, 27*Cout)

    # One packed column for all the tiny per-channel params.
    prm = jnp.concatenate([rp["norm1_g"], rp["norm1_b"],
                           rp["norm2_g"], rp["norm2_b"],
                           rp["conv2_b"] + rp["skip_b"],
                           jnp.tile(up["b"], 4)]).reshape(-1, 1).astype(jnp.float32)

    mlo = _make_conv_masks(D, H, W)                                        # (27, S)

    scratch_rows = max(27 * Cin, 27 * Cout + Cin)
    batched3 = lambda b: (b, 0, 0)
    const2 = lambda b: (0, 0)

    kernel = functools.partial(_upblock_kernel, cin=Cin, cout=Cout,
                               H=H, W=W, groups=GROUPS, eps=EPS)

    out = pl.pallas_call(
        kernel,
        out_shape=jax.ShapeDtypeStruct((B, 4 * Cout, S), hidden.dtype),
        grid=(B,),
        in_specs=[
            pl.BlockSpec((1, Cprev, S), batched3),        # hidden
            pl.BlockSpec((1, Cskip, S), batched3),        # skip (res_hidden_states)
            pl.BlockSpec((1, Cout, 1), batched3),         # conv1 bias + temb (per batch)
            pl.BlockSpec(prm.shape, const2),              # packed gammas/betas/biases
            pl.BlockSpec(w1.shape, const2),               # conv1 weight (packed, bf16)
            pl.BlockSpec(w2s.shape, const2),              # conv2 + skip weight (packed, bf16)
            pl.BlockSpec(wup.shape, const2),              # upsampler phase weight (bf16)
            pl.BlockSpec(mlo.shape, const2),              # low-res conv border masks
        ],
        out_specs=pl.BlockSpec((1, 4 * Cout, S), batched3),
        scratch_shapes=[pltpu.VMEM((scratch_rows, S), jnp.float32)],   # im2col scratch
        compiler_params=pltpu.CompilerParams(
            dimension_semantics=("parallel",)),           # use both TCs on v7x
    )(hid2, res2, bias1, prm, w1, w2s, wup, mlo)

    # Phase slab -> NCDHW: out[b, o, d, 2h+a, 2w+b'] = phase(a,b')[b, o, d, h, w].
    out = out.reshape(B, 2, 2, Cout, D, H, W)
    out = jnp.transpose(out, (0, 3, 4, 5, 1, 6, 2))       # (B, Cout, D, H, a, W, b')
    return out.reshape(B, Cout, D, 2 * H, 2 * W)


# ---------------------------- pure-JAX reference ----------------------------
def _ref_group_norm(x, gamma, beta, groups, eps):
    B, C = x.shape[:2]
    xg = x.reshape(B, groups, -1)
    mean = xg.mean(axis=2, keepdims=True)
    var = ((xg - mean) ** 2).mean(axis=2, keepdims=True)
    xn = ((xg - mean) / jnp.sqrt(var + eps)).reshape(x.shape)
    return xn * gamma.reshape(1, C, 1, 1, 1) + beta.reshape(1, C, 1, 1, 1)


def _ref_conv3(x, w, b):
    y = lax.conv_general_dilated(x, w, (1, 1, 1), ((1, 1), (1, 1), (1, 1)),
                                 dimension_numbers=("NCDHW", "OIDHW", "NCDHW"))
    return y + b.reshape(1, -1, 1, 1, 1)


def _ref_resnet(x, temb, p):
    h = jax.nn.silu(_ref_group_norm(x, p["norm1_g"], p["norm1_b"], GROUPS, EPS))
    h = _ref_conv3(h, p["conv1_w"], p["conv1_b"])
    tp = jax.nn.silu(temb) @ p["temb_w"].T + p["temb_b"]
    h = h + tp[:, :, None, None, None]
    h = jax.nn.silu(_ref_group_norm(h, p["norm2_g"], p["norm2_b"], GROUPS, EPS))
    h = _ref_conv3(h, p["conv2_w"], p["conv2_b"])
    if "skip_w" in p:
        cout, cin = p["skip_w"].shape[:2]
        skip = jnp.einsum("bidhw,oi->bodhw", x, p["skip_w"].reshape(cout, cin))
        skip = skip + p["skip_b"].reshape(1, -1, 1, 1, 1)
    else:
        skip = x
    return skip + h


def ref_forward(hidden, res_hidden_states_list, temb, params):
    h = hidden
    res_list = list(res_hidden_states_list)
    for rp in params["resnets"]:
        res = res_list.pop()
        h = jnp.concatenate([h, res], axis=1)
        h = _ref_resnet(h, temb, rp)
    up = params["upsampler"]
    h = jnp.repeat(jnp.repeat(h, 2, axis=3), 2, axis=4)   # nearest x2 on H, W (D unchanged)
    return _ref_conv3(h, up["w"], up["b"])


# ------------------------------ param init ---------------------------------
def init_params(key):
    def nrm(k, shape, scale=0.1):
        return (scale * jax.random.normal(k, shape)).astype(jnp.float32)

    keys = iter(jax.random.split(key, 32))
    cin = PREV_OUT + IN_CHANNELS
    cout = OUT_CHANNELS
    rp = {
        "norm1_g": 1.0 + nrm(next(keys), (cin,)),
        "norm1_b": nrm(next(keys), (cin,)),
        "conv1_w": nrm(next(keys), (cout, cin, 3, 3, 3)),
        "conv1_b": nrm(next(keys), (cout,)),
        "temb_w": nrm(next(keys), (cout, TEMB_CHANNELS)),
        "temb_b": nrm(next(keys), (cout,)),
        "norm2_g": 1.0 + nrm(next(keys), (cout,)),
        "norm2_b": nrm(next(keys), (cout,)),
        # NOTE: the PyTorch module zero-inits conv2 (zero_module); forward semantics are
        # identical for any parameter values, so small random values are used here to
        # actually exercise that path in the correctness check.
        "conv2_w": nrm(next(keys), (cout, cout, 3, 3, 3), 0.05),
        "conv2_b": nrm(next(keys), (cout,), 0.05),
        # skip 1x1x1 conv exists because in_channels (16) != out_channels (8)
        "skip_w": nrm(next(keys), (cout, cin, 1, 1, 1)),
        "skip_b": nrm(next(keys), (cout,)),
    }
    up = {"w": nrm(next(keys), (cout, cout, 3, 3, 3)), "b": nrm(next(keys), (cout,))}
    return {"resnets": [rp], "upsampler": up}


# ---------------------------------- main ------------------------------------
if __name__ == "__main__":
    key = jax.random.PRNGKey(0)
    kp, kh, kr, kt = jax.random.split(key, 4)
    params = init_params(kp)

    B, D, H, W = 2, 4, 8, 8
    hidden = jax.random.normal(kh, (B, PREV_OUT, D, H, W), jnp.float32)
    res_hidden_list = [jax.random.normal(kr, (B, IN_CHANNELS, D, H, W), jnp.float32)]
    temb = jax.random.normal(kt, (B, TEMB_CHANNELS), jnp.float32)

    fwd = jax.jit(lambda h, r, t: upblock_forward(h, r, t, params))
    out = jax.block_until_ready(fwd(hidden, res_hidden_list, temb))

    ref = ref_forward(hidden, res_hidden_list, temb, params)
    # Tolerance covers bf16 MXU operands (f32 accumulation) through three chained convs;
    # real bugs (wrong roll sign / phase fold / mask / offsets) produce O(0.1-1) errors.
    np.testing.assert_allclose(np.asarray(out), np.asarray(ref), atol=5e-2, rtol=5e-2)
    assert out.shape == (B, OUT_CHANNELS, D, 2 * H, 2 * W)
    print("KERNEL_OK")
</pallas_src>

<mosaic_0001>
module attributes {stable_mosaic.version = 11 : i64} {
  func.func @_upblock_kernel(%arg0: i32, %arg1: memref<1x8x256xf32, #tpu.memory_space<vmem>>, %arg2: memref<1x8x256xf32, #tpu.memory_space<vmem>>, %arg3: memref<1x8x1xf32, #tpu.memory_space<vmem>>, %arg4: memref<88x1xf32, #tpu.memory_space<vmem>>, %arg5: memref<8x432xbf16, #tpu.memory_space<vmem>>, %arg6: memref<8x232xbf16, #tpu.memory_space<vmem>>, %arg7: memref<32x216xbf16, #tpu.memory_space<vmem>>, %arg8: memref<27x256xf32, #tpu.memory_space<vmem>>, %arg9: memref<1x32x256xf32, #tpu.memory_space<vmem>>, %arg10: memref<432x256xf32, #tpu.memory_space<vmem>>) attributes {dimension_semantics = [#tpu.dimension_semantics<parallel>], iteration_bounds = array<i64: 2>, scalar_prefetch = 0 : i64, scratch_operands = 1 : i64, tpu.core_type = #tpu.core_type<tc>, window_params = [{transform_indices = @transform_0, window_bounds = array<i64: 1, 8, 256>}, {transform_indices = @transform_1, window_bounds = array<i64: 1, 8, 256>}, {transform_indices = @transform_2, window_bounds = array<i64: 1, 8, 1>}, {pipeline_mode = #tpu.pipeline_mode<synchronous>, transform_indices = @transform_3, window_bounds = array<i64: 88, 1>}, {pipeline_mode = #tpu.pipeline_mode<synchronous>, transform_indices = @transform_4, window_bounds = array<i64: 8, 432>}, {pipeline_mode = #tpu.pipeline_mode<synchronous>, transform_indices = @transform_5, window_bounds = array<i64: 8, 232>}, {pipeline_mode = #tpu.pipeline_mode<synchronous>, transform_indices = @transform_6, window_bounds = array<i64: 32, 216>}, {pipeline_mode = #tpu.pipeline_mode<synchronous>, transform_indices = @transform_7, window_bounds = array<i64: 27, 256>}, {transform_indices = @transform_8, window_bounds = array<i64: 1, 32, 256>}]} {
    %c0 = arith.constant 0 : index
    %c0_0 = arith.constant 0 : index
    %c0_1 = arith.constant 0 : index
    %0 = vector.load %arg1[%c0, %c0_0, %c0_1] : memref<1x8x256xf32, #tpu.memory_space<vmem>>, vector<1x8x256xf32>
    %1 = vector.shape_cast %0 : vector<1x8x256xf32> to vector<8x256xf32>
    %c0_2 = arith.constant 0 : index
    %c0_3 = arith.constant 0 : index
    %c0_4 = arith.constant 0 : index
    %2 = vector.load %arg2[%c0_2, %c0_3, %c0_4] : memref<1x8x256xf32, #tpu.memory_space<vmem>>, vector<1x8x256xf32>
    %3 = vector.shape_cast %2 : vector<1x8x256xf32> to vector<8x256xf32>
    %4 = tpu.concatenate %1, %3 in 0 : vector<8x256xf32>, vector<8x256xf32> -> vector<16x256xf32>
    %c0_5 = arith.constant 0 : index
    %c0_6 = arith.constant 0 : index
    %5 = vector.load %arg8[%c0_5, %c0_6] : memref<27x256xf32, #tpu.memory_space<vmem>>, vector<27x256xf32>
    %6 = vector.extract_strided_slice %5 {offsets = [0, 0], sizes = [1, 256], strides = [1, 1]} : vector<27x256xf32> to vector<1x256xf32>
    %7 = vector.extract_strided_slice %5 {offsets = [1, 0], sizes = [1, 256], strides = [1, 1]} : vector<27x256xf32> to vector<1x256xf32>
    %8 = vector.extract_strided_slice %5 {offsets = [2, 0], sizes = [1, 256], strides = [1, 1]} : vector<27x256xf32> to vector<1x256xf32>
    %9 = vector.extract_strided_slice %5 {offsets = [3, 0], sizes = [1, 256], strides = [1, 1]} : vector<27x256xf32> to vector<1x256xf32>
    %10 = vector.extract_strided_slice %5 {offsets = [4, 0], sizes = [1, 256], strides = [1, 1]} : vector<27x256xf32> to vector<1x256xf32>
    %11 = vector.extract_strided_slice %5 {offsets = [5, 0], sizes = [1, 256], strides = [1, 1]} : vector<27x256xf32> to vector<1x256xf32>
    %12 = vector.extract_strided_slice %5 {offsets = [6, 0], sizes = [1, 256], strides = [1, 1]} : vector<27x256xf32> to vector<1x256xf32>
    %13 = vector.extract_strided_slice %5 {offsets = [7, 0], sizes = [1, 256], strides = [1, 1]} : vector<27x256xf32> to vector<1x256xf32>
    %14 = vector.extract_strided_slice %5 {offsets = [8, 0], sizes = [1, 256], strides = [1, 1]} : vector<27x256xf32> to vector<1x256xf32>
    %15 = vector.extract_strided_slice %5 {offsets = [9, 0], sizes = [1, 256], strides = [1, 1]} : vector<27x256xf32> to vector<1x256xf32>
    %16 = vector.extract_strided_slice %5 {offsets = [10, 0], sizes = [1, 256], strides = [1, 1]} : vector<27x256xf32> to vector<1x256xf32>
    %17 = vector.extract_strided_slice %5 {offsets = [11, 0], sizes = [1, 256], strides = [1, 1]} : vector<27x256xf32> to vector<1x256xf32>
    %18 = vector.extract_strided_slice %5 {offsets = [12, 0], sizes = [1, 256], strides = [1, 1]} : vector<27x256xf32> to vector<1x256xf32>
    %19 = vector.extract_strided_slice %5 {offsets = [14, 0], sizes = [1, 256], strides = [1, 1]} : vector<27x256xf32> to vector<1x256xf32>
    %20 = vector.extract_strided_slice %5 {offsets = [15, 0], sizes = [1, 256], strides = [1, 1]} : vector<27x256xf32> to vector<1x256xf32>
    %21 = vector.extract_strided_slice %5 {offsets = [16, 0], sizes = [1, 256], strides = [1, 1]} : vector<27x256xf32> to vector<1x256xf32>
    %22 = vector.extract_strided_slice %5 {offsets = [17, 0], sizes = [1, 256], strides = [1, 1]} : vector<27x256xf32> to vector<1x256xf32>
    %23 = vector.extract_strided_slice %5 {offsets = [18, 0], sizes = [1, 256], strides = [1, 1]} : vector<27x256xf32> to vector<1x256xf32>
    %24 = vector.extract_strided_slice %5 {offsets = [19, 0], sizes = [1, 256], strides = [1, 1]} : vector<27x256xf32> to vector<1x256xf32>
    %25 = vector.extract_strided_slice %5 {offsets = [20, 0], sizes = [1, 256], strides = [1, 1]} : vector<27x256xf32> to vector<1x256xf32>
    %26 = vector.extract_strided_slice %5 {offsets = [21, 0], sizes = [1, 256], strides = [1, 1]} : vector<27x256xf32> to vector<1x256xf32>
    %27 = vector.extract_strided_slice %5 {offsets = [22, 0], sizes = [1, 256], strides = [1, 1]} : vector<27x256xf32> to vector<1x256xf32>
    %28 = vector.extract_strided_slice %5 {offsets = [23, 0], sizes = [1, 256], strides = [1, 1]} : vector<27x256xf32> to vector<1x256xf32>
    %29 = vector.extract_strided_slice %5 {offsets = [24, 0], sizes = [1, 256], strides = [1, 1]} : vector<27x256xf32> to vector<1x256xf32>
    %30 = vector.extract_strided_slice %5 {offsets = [25, 0], sizes = [1, 256], strides = [1, 1]} : vector<27x256xf32> to vector<1x256xf32>
    %31 = vector.extract_strided_slice %5 {offsets = [26, 0], sizes = [1, 256], strides = [1, 1]} : vector<27x256xf32> to vector<1x256xf32>
    %c0_7 = arith.constant 0 : index
    %c0_8 = arith.constant 0 : index
    %32 = vector.load %arg4[%c0_7, %c0_8] : memref<88x1xf32, #tpu.memory_space<vmem>>, vector<16x1xf32>
    %c16 = arith.constant 16 : index
    %c0_9 = arith.constant 0 : index
    %33 = vector.load %arg4[%c16, %c0_9] : memref<88x1xf32, #tpu.memory_space<vmem>>, vector<16x1xf32>
    %c32 = arith.constant 32 : index
    %c0_10 = arith.constant 0 : index
    %34 = vector.load %arg4[%c32, %c0_10] : memref<88x1xf32, #tpu.memory_space<vmem>>, vector<8x1xf32>
    %c40 = arith.constant 40 : index
    %c0_11 = arith.constant 0 : index
    %35 = vector.load %arg4[%c40, %c0_11] : memref<88x1xf32, #tpu.memory_space<vmem>>, vector<8x1xf32>
    %c48 = arith.constant 48 : index
    %c0_12 = arith.constant 0 : index
    %36 = vector.load %arg4[%c48, %c0_12] : memref<88x1xf32, #tpu.memory_space<vmem>>, vector<8x1xf32>
    %c56 = arith.constant 56 : index
    %c0_13 = arith.constant 0 : index
    %37 = vector.load %arg4[%c56, %c0_13] : memref<88x1xf32, #tpu.memory_space<vmem>>, vector<32x1xf32>
    %cst = arith.constant dense<0.000000e+00> : vector<16xf32>
    %38 = vector.multi_reduction <add>, %4, %cst [1] : vector<16x256xf32> to vector<16xf32>
    %39 = vector.shape_cast %38 : vector<16xf32> to vector<16x1xf32>
    %40 = vector.extract_strided_slice %39 {offsets = [0, 0], sizes = [4, 1], strides = [1, 1]} : vector<16x1xf32> to vector<4x1xf32>
    %41 = vector.shape_cast %40 : vector<4x1xf32> to vector<1x4x1xf32>
    %cst_14 = arith.constant dense<0.000000e+00> : vector<1xf32>
    %42 = vector.multi_reduction <add>, %41, %cst_14 [1, 2] : vector<1x4x1xf32> to vector<1xf32>
    %43 = vector.shape_cast %42 : vector<1xf32> to vector<1x1x1xf32>
    %44 = vector.extract %43[0, 0, 0] : f32 from vector<1x1x1xf32>
    %cst_15 = arith.constant 1.024000e+03 : f32
    %45 = arith.divf %44, %cst_15 : f32
    %46 = vector.broadcast %45 : f32 to vector<4x1xf32>
    %47 = vector.extract_strided_slice %39 {offsets = [4, 0], sizes = [4, 1], strides = [1, 1]} : vector<16x1xf32> to vector<4x1xf32>
    %48 = vector.shape_cast %47 : vector<4x1xf32> to vector<1x4x1xf32>
    %cst_16 = arith.constant dense<0.000000e+00> : vector<1xf32>
    %49 = vector.multi_reduction <add>, %48, %cst_16 [1, 2] : vector<1x4x1xf32> to vector<1xf32>
    %50 = vector.shape_cast %49 : vector<1xf32> to vector<1x1x1xf32>
    %51 = vector.extract %50[0, 0, 0] : f32 from vector<1x1x1xf32>
    %cst_17 = arith.constant 1.024000e+03 : f32
    %52 = arith.divf %51, %cst_17 : f32
    %53 = vector.broadcast %52 : f32 to vector<4x1xf32>
    %54 = vector.extract_strided_slice %39 {offsets = [8, 0], sizes = [4, 1], strides = [1, 1]} : vector<16x1xf32> to vector<4x1xf32>
    %55 = vector.shape_cast %54 : vector<4x1xf32> to vector<1x4x1xf32>
    %cst_18 = arith.constant dense<0.000000e+00> : vector<1xf32>
    %56 = vector.multi_reduction <add>, %55, %cst_18 [1, 2] : vector<1x4x1xf32> to vector<1xf32>
    %57 = vector.shape_cast %56 : vector<1xf32> to vector<1x1x1xf32>
    %58 = vector.extract %57[0, 0, 0] : f32 from vector<1x1x1xf32>
    %cst_19 = arith.constant 1.024000e+03 : f32
    %59 = arith.divf %58, %cst_19 : f32
    %60 = vector.broadcast %59 : f32 to vector<4x1xf32>
    %61 = vector.extract_strided_slice %39 {offsets = [12, 0], sizes = [4, 1], strides = [1, 1]} : vector<16x1xf32> to vector<4x1xf32>
    %62 = vector.shape_cast %61 : vector<4x1xf32> to vector<1x4x1xf32>
    %cst_20 = arith.constant dense<0.000000e+00> : vector<1xf32>
    %63 = vector.multi_reduction <add>, %62, %cst_20 [1, 2] : vector<1x4x1xf32> to vector<1xf32>
    %64 = vector.shape_cast %63 : vector<1xf32> to vector<1x1x1xf32>
    %65 = vector.extract %64[0, 0, 0] : f32 from vector<1x1x1xf32>
    %cst_21 = arith.constant 1.024000e+03 : f32
    %66 = arith.divf %65, %cst_21 : f32
    %67 = vector.broadcast %66 : f32 to vector<4x1xf32>
    %68 = tpu.concatenate %46, %53, %60, %67 in 0 : vector<4x1xf32>, vector<4x1xf32>, vector<4x1xf32>, vector<4x1xf32> -> vector<16x1xf32>
    %69 = vector.broadcast %68 : vector<16x1xf32> to vector<16x256xf32>
    %70 = arith.subf %4, %69 : vector<16x256xf32>
    %71 = arith.mulf %70, %70 : vector<16x256xf32>
    %cst_22 = arith.constant dense<0.000000e+00> : vector<16xf32>
    %72 = vector.multi_reduction <add>, %71, %cst_22 [1] : vector<16x256xf32> to vector<16xf32>
    %73 = vector.shape_cast %72 : vector<16xf32> to vector<16x1xf32>
    %74 = vector.extract_strided_slice %73 {offsets = [0, 0], sizes = [4, 1], strides = [1, 1]} : vector<16x1xf32> to vector<4x1xf32>
    %75 = vector.shape_cast %74 : vector<4x1xf32> to vector<1x4x1xf32>
    %cst_23 = arith.constant dense<0.000000e+00> : vector<1xf32>
    %76 = vector.multi_reduction <add>, %75, %cst_23 [1, 2] : vector<1x4x1xf32> to vector<1xf32>
    %77 = vector.shape_cast %76 : vector<1xf32> to vector<1x1x1xf32>
    %78 = vector.extract %77[0, 0, 0] : f32 from vector<1x1x1xf32>
    %cst_24 = arith.constant 1.024000e+03 : f32
    %79 = arith.divf %78, %cst_24 : f32
    %cst_25 = arith.constant 9.99999997E-7 : f32
    %80 = arith.addf %79, %cst_25 : f32
    %81 = math.rsqrt %80 : f32
    %82 = vector.broadcast %81 : f32 to vector<4x1xf32>
    %83 = vector.extract_strided_slice %73 {offsets = [4, 0], sizes = [4, 1], strides = [1, 1]} : vector<16x1xf32> to vector<4x1xf32>
    %84 = vector.shape_cast %83 : vector<4x1xf32> to vector<1x4x1xf32>
    %cst_26 = arith.constant dense<0.000000e+00> : vector<1xf32>
    %85 = vector.multi_reduction <add>, %84, %cst_26 [1, 2] : vector<1x4x1xf32> to vector<1xf32>
    %86 = vector.shape_cast %85 : vector<1xf32> to vector<1x1x1xf32>
    %87 = vector.extract %86[0, 0, 0] : f32 from vector<1x1x1xf32>
    %cst_27 = arith.constant 1.024000e+03 : f32
    %88 = arith.divf %87, %cst_27 : f32
    %cst_28 = arith.constant 9.99999997E-7 : f32
    %89 = arith.addf %88, %cst_28 : f32
    %90 = math.rsqrt %89 : f32
    %91 = vector.broadcast %90 : f32 to vector<4x1xf32>
    %92 = vector.extract_strided_slice %73 {offsets = [8, 0], sizes = [4, 1], strides = [1, 1]} : vector<16x1xf32> to vector<4x1xf32>
    %93 = vector.shape_cast %92 : vector<4x1xf32> to vector<1x4x1xf32>
    %cst_29 = arith.constant dense<0.000000e+00> : vector<1xf32>
    %94 = vector.multi_reduction <add>, %93, %cst_29 [1, 2] : vector<1x4x1xf32> to vector<1xf32>
    %95 = vector.shape_cast %94 : vector<1xf32> to vector<1x1x1xf32>
    %96 = vector.extract %95[0, 0, 0] : f32 from vector<1x1x1xf32>
    %cst_30 = arith.constant 1.024000e+03 : f32
    %97 = arith.divf %96, %cst_30 : f32
    %cst_31 = arith.constant 9.99999997E-7 : f32
    %98 = arith.addf %97, %cst_31 : f32
    %99 = math.rsqrt %98 : f32
    %100 = vector.broadcast %99 : f32 to vector<4x1xf32>
    %101 = vector.extract_strided_slice %73 {offsets = [12, 0], sizes = [4, 1], strides = [1, 1]} : vector<16x1xf32> to vector<4x1xf32>
    %102 = vector.shape_cast %101 : vector<4x1xf32> to vector<1x4x1xf32>
    %cst_32 = arith.constant dense<0.000000e+00> : vector<1xf32>
    %103 = vector.multi_reduction <add>, %102, %cst_32 [1, 2] : vector<1x4x1xf32> to vector<1xf32>
    %104 = vector.shape_cast %103 : vector<1xf32> to vector<1x1x1xf32>
    %105 = vector.extract %104[0, 0, 0] : f32 from vector<1x1x1xf32>
    %cst_33 = arith.constant 1.024000e+03 : f32
    %106 = arith.divf %105, %cst_33 : f32
    %cst_34 = arith.constant 9.99999997E-7 : f32
    %107 = arith.addf %106, %cst_34 : f32
    %108 = math.rsqrt %107 : f32
    %109 = vector.broadcast %108 : f32 to vector<4x1xf32>
    %110 = tpu.concatenate %82, %91, %100, %109 in 0 : vector<4x1xf32>, vector<4x1xf32>, vector<4x1xf32>, vector<4x1xf32> -> vector<16x1xf32>
    %111 = arith.mulf %110, %32 : vector<16x1xf32>
    %112 = vector.broadcast %111 : vector<16x1xf32> to vector<16x256xf32>
    %113 = arith.mulf %70, %112 : vector<16x256xf32>
    %114 = vector.broadcast %33 : vector<16x1xf32> to vector<16x256xf32>
    %115 = arith.addf %113, %114 : vector<16x256xf32>
    %116 = arith.negf %115 : vector<16x256xf32>
    %117 = math.exp %116 : vector<16x256xf32>
    %cst_35 = arith.constant 1.000000e+00 : f32
    %118 = vector.broadcast %cst_35 : f32 to vector<16x256xf32>
    %119 = arith.addf %118, %117 : vector<16x256xf32>
    %120 = arith.divf %118, %119 : vector<16x256xf32>
    %121 = arith.mulf %115, %120 : vector<16x256xf32>
    %c73_i32 = arith.constant 73 : i32
    %122 = tpu.dynamic_rotate %121 by %c73_i32 dim 1 : vector<16x256xf32>, i32 -> vector<16x256xf32>
    %123 = vector.broadcast %6 : vector<1x256xf32> to vector<16x256xf32>
    %124 = arith.mulf %122, %123 : vector<16x256xf32>
    %c0_36 = arith.constant 0 : index
    %c0_37 = arith.constant 0 : index
    %125 = vector.load %arg10[%c0_36, %c0_37] : memref<432x256xf32, #tpu.memory_space<vmem>>, vector<16x256xf32>
    tpu.vector_store %arg10[%c0_36, %c0_37], %124 {strides = array<i32>} : memref<432x256xf32, #tpu.memory_space<vmem>>, vector<16x256xf32>,
    %c72_i32 = arith.constant 72 : i32
    %126 = tpu.dynamic_rotate %121 by %c72_i32 dim 1 : vector<16x256xf32>, i32 -> vector<16x256xf32>
    %127 = vector.broadcast %7 : vector<1x256xf32> to vector<16x256xf32>
    %128 = arith.mulf %126, %127 : vector<16x256xf32>
    %c16_38 = arith.constant 16 : index
    %c0_39 = arith.constant 0 : index
    %129 = vector.load %arg10[%c16_38, %c0_39] : memref<432x256xf32, #tpu.memory_space<vmem>>, vector<16x256xf32>
    tpu.vector_store %arg10[%c16_38, %c0_39], %128 {strides = array<i32>} : memref<432x256xf32, #tpu.memory_space<vmem>>, vector<16x256xf32>,
    %c71_i32 = arith.constant 71 : i32
    %130 = tpu.dynamic_rotate %121 by %c71_i32 dim 1 : vector<16x256xf32>, i32 -> vector<16x256xf32>
    %131 = vector.broadcast %8 : vector<1x256xf32> to vector<16x256xf32>
    %132 = arith.mulf %130, %131 : vector<16x256xf32>
    %c32_40 = arith.constant 32 : index
    %c0_41 = arith.constant 0 : index
    %133 = vector.load %arg10[%c32_40, %c0_41] : memref<432x256xf32, #tpu.memory_space<vmem>>, vector<16x256xf32>
    tpu.vector_store %arg10[%c32_40, %c0_41], %132 {strides = array<i32>} : memref<432x256xf32, #tpu.memory_space<vmem>>, vector<16x256xf32>,
    %c65_i32 = arith.constant 65 : i32
    %134 = tpu.dynamic_rotate %121 by %c65_i32 dim 1 : vector<16x256xf32>, i32 -> vector<16x256xf32>
    %135 = vector.broadcast %9 : vector<1x256xf32> to vector<16x256xf32>
    %136 = arith.mulf %134, %135 : vector<16x256xf32>
    %c48_42 = arith.constant 48 : index
    %c0_43 = arith.constant 0 : index
    %137 = vector.load %arg10[%c48_42, %c0_43] : memref<432x256xf32, #tpu.memory_space<vmem>>, vector<16x256xf32>
    tpu.vector_store %arg10[%c48_42, %c0_43], %136 {strides = array<i32>} : memref<432x256xf32, #tpu.memory_space<vmem>>, vector<16x256xf32>,
    %c64_i32 = arith.constant 64 : i32
    %138 = tpu.dynamic_rotate %121 by %c64_i32 dim 1 : vector<16x256xf32>, i32 -> vector<16x256xf32>
    %139 = vector.broadcast %10 : vector<1x256xf32> to vector<16x256xf32>
    %140 = arith.mulf %138, %139 : vector<16x256xf32>
    %c64 = arith.constant 64 : index
    %c0_44 = arith.constant 0 : index
    %141 = vector.load %arg10[%c64, %c0_44] : memref<432x256xf32, #tpu.memory_space<vmem>>, vector<16x256xf32>
    tpu.vector_store %arg10[%c64, %c0_44], %140 {strides = array<i32>} : memref<432x256xf32, #tpu.memory_space<vmem>>, vector<16x256xf32>,
    %c63_i32 = arith.constant 63 : i32
    %142 = tpu.dynamic_rotate %121 by %c63_i32 dim 1 : vector<16x256xf32>, i32 -> vector<16x256xf32>
    %143 = vector.broadcast %11 : vector<1x256xf32> to vector<16x256xf32>
    %144 = arith.mulf %142, %143 : vector<16x256xf32>
    %c80 = arith.constant 80 : index
    %c0_45 = arith.constant 0 : index
    %145 = vector.load %arg10[%c80, %c0_45] : memref<432x256xf32, #tpu.memory_space<vmem>>, vector<16x256xf32>
    tpu.vector_store %arg10[%c80, %c0_45], %144 {strides = array<i32>} : memref<432x256xf32, #tpu.memory_space<vmem>>, vector<16x256xf32>,
    %c57_i32 = arith.constant 57 : i32
    %146 = tpu.dynamic_rotate %121 by %c57_i32 dim 1 : vector<16x256xf32>, i32 -> vector<16x256xf32>
    %147 = vector.broadcast %12 : vector<1x256xf32> to vector<16x256xf32>
    %148 = arith.mulf %146, %147 : vector<16x256xf32>
    %c96 = arith.constant 96 : index
    %c0_46 = arith.constant 0 : index
    %149 = vector.load %arg10[%c96, %c0_46] : memref<432x256xf32, #tpu.memory_space<vmem>>, vector<16x256xf32>
    tpu.vector_store %arg10[%c96, %c0_46], %148 {strides = array<i32>} : memref<432x256xf32, #tpu.memory_space<vmem>>, vector<16x256xf32>,
    %c56_i32 = arith.constant 56 : i32
    %150 = tpu.dynamic_rotate %121 by %c56_i32 dim 1 : vector<16x256xf32>, i32 -> vector<16x256xf32>
    %151 = vector.broadcast %13 : vector<1x256xf32> to vector<16x256xf32>
    %152 = arith.mulf %150, %151 : vector<16x256xf32>
    %c112 = arith.constant 112 : index
    %c0_47 = arith.constant 0 : index
    %153 = vector.load %arg10[%c112, %c0_47] : memref<432x256xf32, #tpu.memory_space<vmem>>, vector<16x256xf32>
    tpu.vector_store %arg10[%c112, %c0_47], %152 {strides = array<i32>} : memref<432x256xf32, #tpu.memory_space<vmem>>, vector<16x256xf32>,
    %c55_i32 = arith.constant 55 : i32
    %154 = tpu.dynamic_rotate %121 by %c55_i32 dim 1 : vector<16x256xf32>, i32 -> vector<16x256xf32>
    %155 = vector.broadcast %14 : vector<1x256xf32> to vector<16x256xf32>
    %156 = arith.mulf %154, %155 : vector<16x256xf32>
    %c128 = arith.constant 128 : index
    %c0_48 = arith.constant 0 : index
    %157 = vector.load %arg10[%c128, %c0_48] : memref<432x256xf32, #tpu.memory_space<vmem>>, vector<16x256xf32>
    tpu.vector_store %arg10[%c128, %c0_48], %156 {strides = array<i32>} : memref<432x256xf32, #tpu.memory_space<vmem>>, vector<16x256xf32>,
    %c9_i32 = arith.constant 9 : i32
    %158 = tpu.dynamic_rotate %121 by %c9_i32 dim 1 : vector<16x256xf32>, i32 -> vector<16x256xf32>
    %159 = vector.broadcast %15 : vector<1x256xf32> to vector<16x256xf32>
    %160 = arith.mulf %158, %159 : vector<16x256xf32>
    %c144 = arith.constant 144 : index
    %c0_49 = arith.constant 0 : index
    %161 = vector.load %arg10[%c144, %c0_49] : memref<432x256xf32, #tpu.memory_space<vmem>>, vector<16x256xf32>
    tpu.vector_store %arg10[%c144, %c0_49], %160 {strides = array<i32>} : memref<432x256xf32, #tpu.memory_space<vmem>>, vector<16x256xf32>,
    %c8_i32 = arith.constant 8 : i32
    %162 = tpu.dynamic_rotate %121 by %c8_i32 dim 1 : vector<16x256xf32>, i32 -> vector<16x256xf32>
    %163 = vector.broadcast %16 : vector<1x256xf32> to vector<16x256xf32>
    %164 = arith.mulf %162, %163 : vector<16x256xf32>
    %c160 = arith.constant 160 : index
    %c0_50 = arith.constant 0 : index
    %165 = vector.load %arg10[%c160, %c0_50] : memref<432x256xf32, #tpu.memory_space<vmem>>, vector<16x256xf32>
    tpu.vector_store %arg10[%c160, %c0_50], %164 {strides = array<i32>} : memref<432x256xf32, #tpu.memory_space<vmem>>, vector<16x256xf32>,
    %c7_i32 = arith.constant 7 : i32
    %166 = tpu.dynamic_rotate %121 by %c7_i32 dim 1 : vector<16x256xf32>, i32 -> vector<16x256xf32>
    %167 = vector.broadcast %17 : vector<1x256xf32> to vector<16x256xf32>
    %168 = arith.mulf %166, %167 : vector<16x256xf32>
    %c176 = arith.constant 176 : index
    %c0_51 = arith.constant 0 : index
    %169 = vector.load %arg10[%c176, %c0_51] : memref<432x256xf32, #tpu.memory_space<vmem>>, vector<16x256xf32>
    tpu.vector_store %arg10[%c176, %c0_51], %168 {strides = array<i32>} : memref<432x256xf32, #tpu.memory_space<vmem>>, vector<16x256xf32>,
    %c1_i32 = arith.constant 1 : i32
    %170 = tpu.dynamic_rotate %121 by %c1_i32 dim 1 : vector<16x256xf32>, i32 -> vector<16x256xf32>
    %171 = vector.broadcast %18 : vector<1x256xf32> to vector<16x256xf32>
    %172 = arith.mulf %170, %171 : vector<16x256xf32>
    %c192 = arith.constant 192 : index
    %c0_52 = arith.constant 0 : index
    %173 = vector.load %arg10[%c192, %c0_52] : memref<432x256xf32, #tpu.memory_space<vmem>>, vector<16x256xf32>
    tpu.vector_store %arg10[%c192, %c0_52], %172 {strides = array<i32>} : memref<432x256xf32, #tpu.memory_space<vmem>>, vector<16x256xf32>,
    %c208 = arith.constant 208 : index
    %c0_53 = arith.constant 0 : index
    %174 = vector.load %arg10[%c208, %c0_53] : memref<432x256xf32, #tpu.memory_space<vmem>>, vector<16x256xf32>
    tpu.vector_store %arg10[%c208, %c0_53], %121 {strides = array<i32>} : memref<432x256xf32, #tpu.memory_space<vmem>>, vector<16x256xf32>,
    %c255_i32 = arith.constant 255 : i32
    %175 = tpu.dynamic_rotate %121 by %c255_i32 dim 1 : vector<16x256xf32>, i32 -> vector<16x256xf32>
    %176 = vector.broadcast %19 : vector<1x256xf32> to vector<16x256xf32>
    %177 = arith.mulf %175, %176 : vector<16x256xf32>
    %c224 = arith.constant 224 : index
    %c0_54 = arith.constant 0 : index
    %178 = vector.load %arg10[%c224, %c0_54] : memref<432x256xf32, #tpu.memory_space<vmem>>, vector<16x256xf32>
    tpu.vector_store %arg10[%c224, %c0_54], %177 {strides = array<i32>} : memref<432x256xf32, #tpu.memory_space<vmem>>, vector<16x256xf32>,
    %c249_i32 = arith.constant 249 : i32
    %179 = tpu.dynamic_rotate %121 by %c249_i32 dim 1 : vector<16x256xf32>, i32 -> vector<16x256xf32>
    %180 = vector.broadcast %20 : vector<1x256xf32> to vector<16x256xf32>
    %181 = arith.mulf %179, %180 : vector<16x256xf32>
    %c240 = arith.constant 240 : index
    %c0_55 = arith.constant 0 : index
    %182 = vector.load %arg10[%c240, %c0_55] : memref<432x256xf32, #tpu.memory_space<vmem>>, vector<16x256xf32>
    tpu.vector_store %arg10[%c240, %c0_55], %181 {strides = array<i32>} : memref<432x256xf32, #tpu.memory_space<vmem>>, vector<16x256xf32>,
    %c248_i32 = arith.constant 248 : i32
    %183 = tpu.dynamic_rotate %121 by %c248_i32 dim 1 : vector<16x256xf32>, i32 -> vector<16x256xf32>
    %184 = vector.broadcast %21 : vector<1x256xf32> to vector<16x256xf32>
    %185 = arith.mulf %183, %184 : vector<16x256xf32>
    %c256 = arith.constant 256 : index
    %c0_56 = arith.constant 0 : index
    %186 = vector.load %arg10[%c256, %c0_56] : memref<432x256xf32, #tpu.memory_space<vmem>>, vector<16x256xf32>
    tpu.vector_store %arg10[%c256, %c0_56], %185 {strides = array<i32>} : memref<432x256xf32, #tpu.memory_space<vmem>>, vector<16x256xf32>,
    %c247_i32 = arith.constant 247 : i32
    %187 = tpu.dynamic_rotate %121 by %c247_i32 dim 1 : vector<16x256xf32>, i32 -> vector<16x256xf32>
    %188 = vector.broadcast %22 : vector<1x256xf32> to vector<16x256xf32>
    %189 = arith.mulf %187, %188 : vector<16x256xf32>
    %c272 = arith.constant 272 : index
    %c0_57 = arith.constant 0 : index
    %190 = vector.load %arg10[%c272, %c0_57] : memref<432x256xf32, #tpu.memory_space<vmem>>, vector<16x256xf32>
    tpu.vector_store %arg10[%c272, %c0_57], %189 {strides = array<i32>} : memref<432x256xf32, #tpu.memory_space<vmem>>, vector<16x256xf32>,
    %c201_i32 = arith.constant 201 : i32
    %191 = tpu.dynamic_rotate %121 by %c201_i32 dim 1 : vector<16x256xf32>, i32 -> vector<16x256xf32>
    %192 = vector.broadcast %23 : vector<1x256xf32> to vector<16x256xf32>
    %193 = arith.mulf %191, %192 : vector<16x256xf32>
    %c288 = arith.constant 288 : index
    %c0_58 = arith.constant 0 : index
    %194 = vector.load %arg10[%c288, %c0_58] : memref<432x256xf32, #tpu.memory_space<vmem>>, vector<16x256xf32>
    tpu.vector_store %arg10[%c288, %c0_58], %193 {strides = array<i32>} : memref<432x256xf32, #tpu.memory_space<vmem>>, vector<16x256xf32>,
    %c200_i32 = arith.constant 200 : i32
    %195 = tpu.dynamic_rotate %121 by %c200_i32 dim 1 : vector<16x256xf32>, i32 -> vector<16x256xf32>
    %196 = vector.broadcast %24 : vector<1x256xf32> to vector<16x256xf32>
    %197 = arith.mulf %195, %196 : vector<16x256xf32>
    %c304 = arith.constant 304 : index
    %c0_59 = arith.constant 0 : index
    %198 = vector.load %arg10[%c304, %c0_59] : memref<432x256xf32, #tpu.memory_space<vmem>>, vector<16x256xf32>
    tpu.vector_store %arg10[%c304, %c0_59], %197 {strides = array<i32>} : memref<432x256xf32, #tpu.memory_space<vmem>>, vector<16x256xf32>,
    %c199_i32 = arith.constant 199 : i32
    %199 = tpu.dynamic_rotate %121 by %c199_i32 dim 1 : vector<16x256xf32>, i32 -> vector<16x256xf32>
    %200 = vector.broadcast %25 : vector<1x256xf32> to vector<16x256xf32>
    %201 = arith.mulf %199, %200 : vector<16x256xf32>
    %c320 = arith.constant 320 : index
    %c0_60 = arith.constant 0 : index
    %202 = vector.load %arg10[%c320, %c0_60] : memref<432x256xf32, #tpu.memory_space<vmem>>, vector<16x256xf32>
    tpu.vector_store %arg10[%c320, %c0_60], %201 {strides = array<i32>} : memref<432x256xf32, #tpu.memory_space<vmem>>, vector<16x256xf32>,
    %c193_i32 = arith.constant 193 : i32
    %203 = tpu.dynamic_rotate %121 by %c193_i32 dim 1 : vector<16x256xf32>, i32 -> vector<16x256xf32>
    %204 = vector.broadcast %26 : vector<1x256xf32> to vector<16x256xf32>
    %205 = arith.mulf %203, %204 : vector<16x256xf32>
    %c336 = arith.constant 336 : index
    %c0_61 = arith.constant 0 : index
    %206 = vector.load %arg10[%c336, %c0_61] : memref<432x256xf32, #tpu.memory_space<vmem>>, vector<16x256xf32>
    tpu.vector_store %arg10[%c336, %c0_61], %205 {strides = array<i32>} : memref<432x256xf32, #tpu.memory_space<vmem>>, vector<16x256xf32>,
    %c192_i32 = arith.constant 192 : i32
    %207 = tpu.dynamic_rotate %121 by %c192_i32 dim 1 : vector<16x256xf32>, i32 -> vector<16x256xf32>
    %208 = vector.broadcast %27 : vector<1x256xf32> to vector<16x256xf32>
    %209 = arith.mulf %207, %208 : vector<16x256xf32>
    %c352 = arith.constant 352 : index
    %c0_62 = arith.constant 0 : index
    %210 = vector.load %arg10[%c352, %c0_62] : memref<432x256xf32, #tpu.memory_space<vmem>>, vector<16x256xf32>
    tpu.vector_store %arg10[%c352, %c0_62], %209 {strides = array<i32>} : memref<432x256xf32, #tpu.memory_space<vmem>>, vector<16x256xf32>,
    %c191_i32 = arith.constant 191 : i32
    %211 = tpu.dynamic_rotate %121 by %c191_i32 dim 1 : vector<16x256xf32>, i32 -> vector<16x256xf32>
    %212 = vector.broadcast %28 : vector<1x256xf32> to vector<16x256xf32>
    %213 = arith.mulf %211, %212 : vector<16x256xf32>
    %c368 = arith.constant 368 : index
    %c0_63 = arith.constant 0 : index
    %214 = vector.load %arg10[%c368, %c0_63] : memref<432x256xf32, #tpu.memory_space<vmem>>, vector<16x256xf32>
    tpu.vector_store %arg10[%c368, %c0_63], %213 {strides = array<i32>} : memref<432x256xf32, #tpu.memory_space<vmem>>, vector<16x256xf32>,
    %c185_i32 = arith.constant 185 : i32
    %215 = tpu.dynamic_rotate %121 by %c185_i32 dim 1 : vector<16x256xf32>, i32 -> vector<16x256xf32>
    %216 = vector.broadcast %29 : vector<1x256xf32> to vector<16x256xf32>
    %217 = arith.mulf %215, %216 : vector<16x256xf32>
    %c384 = arith.constant 384 : index
    %c0_64 = arith.constant 0 : index
    %218 = vector.load %arg10[%c384, %c0_64] : memref<432x256xf32, #tpu.memory_space<vmem>>, vector<16x256xf32>
    tpu.vector_store %arg10[%c384, %c0_64], %217 {strides = array<i32>} : memref<432x256xf32, #tpu.memory_space<vmem>>, vector<16x256xf32>,
    %c184_i32 = arith.constant 184 : i32
    %219 = tpu.dynamic_rotate %121 by %c184_i32 dim 1 : vector<16x256xf32>, i32 -> vector<16x256xf32>
    %220 = vector.broadcast %30 : vector<1x256xf32> to vector<16x256xf32>
    %221 = arith.mulf %219, %220 : vector<16x256xf32>
    %c400 = arith.constant 400 : index
    %c0_65 = arith.constant 0 : index
    %222 = vector.load %arg10[%c400, %c0_65] : memref<432x256xf32, #tpu.memory_space<vmem>>, vector<16x256xf32>
    tpu.vector_store %arg10[%c400, %c0_65], %221 {strides = array<i32>} : memref<432x256xf32, #tpu.memory_space<vmem>>, vector<16x256xf32>,
    %c183_i32 = arith.constant 183 : i32
    %223 = tpu.dynamic_rotate %121 by %c183_i32 dim 1 : vector<16x256xf32>, i32 -> vector<16x256xf32>
    %224 = vector.broadcast %31 : vector<1x256xf32> to vector<16x256xf32>
    %225 = arith.mulf %223, %224 : vector<16x256xf32>
    %c416 = arith.constant 416 : index
    %c0_66 = arith.constant 0 : index
    %226 = vector.load %arg10[%c416, %c0_66] : memref<432x256xf32, #tpu.memory_space<vmem>>, vector<16x256xf32>
    tpu.vector_store %arg10[%c416, %c0_66], %225 {strides = array<i32>} : memref<432x256xf32, #tpu.memory_space<vmem>>, vector<16x256xf32>,
    %c0_67 = arith.constant 0 : index
    %c0_68 = arith.constant 0 : index
    %c0_69 = arith.constant 0 : index
    %227 = vector.load %arg3[%c0_67, %c0_68, %c0_69] : memref<1x8x1xf32, #tpu.memory_space<vmem>>, vector<1x8x1xf32>
    %228 = vector.shape_cast %227 : vector<1x8x1xf32> to vector<8x1xf32>
    %c0_70 = arith.constant 0 : index
    %c0_71 = arith.constant 0 : index
    %229 = vector.load %arg10[%c0_70, %c0_71] : memref<432x256xf32, #tpu.memory_space<vmem>>, vector<432x256xf32>
    %230 = arith.truncf %229 : vector<432x256xf32> to vector<432x256xbf16>
    %c0_72 = arith.constant 0 : index
    %c0_73 = arith.constant 0 : index
    %231 = vector.load %arg5[%c0_72, %c0_73] : memref<8x432xbf16, #tpu.memory_space<vmem>>, vector<8x432xbf16>
    %cst_74 = arith.constant dense<0.000000e+00> : vector<8x256xf32>
    %232 = tpu.matmul %231, %230, %cst_74 {dimension_numbers = #tpu.dot_dimension_numbers<[1], [0], [0], [1], [0, 0, 1, 1], [], []>} : vector<8x432xbf16>, vector<432x256xbf16>, vector<8x256xf32> -> vector<8x256xf32>
    %233 = vector.broadcast %228 : vector<8x1xf32> to vector<8x256xf32>
    %234 = arith.addf %232, %233 : vector<8x256xf32>
    %cst_75 = arith.constant dense<0.000000e+00> : vector<8xf32>
    %235 = vector.multi_reduction <add>, %234, %cst_75 [1] : vector<8x256xf32> to vector<8xf32>
    %236 = vector.shape_cast %235 : vector<8xf32> to vector<8x1xf32>
    %237 = vector.extract_strided_slice %236 {offsets = [0, 0], sizes = [2, 1], strides = [1, 1]} : vector<8x1xf32> to vector<2x1xf32>
    %238 = vector.shape_cast %237 : vector<2x1xf32> to vector<1x2x1xf32>
    %cst_76 = arith.constant dense<0.000000e+00> : vector<1xf32>
    %239 = vector.multi_reduction <add>, %238, %cst_76 [1, 2] : vector<1x2x1xf32> to vector<1xf32>
    %240 = vector.shape_cast %239 : vector<1xf32> to vector<1x1x1xf32>
    %241 = vector.extract %240[0, 0, 0] : f32 from vector<1x1x1xf32>
    %cst_77 = arith.constant 5.120000e+02 : f32
    %242 = arith.divf %241, %cst_77 : f32
    %243 = vector.broadcast %242 : f32 to vector<2x1xf32>
    %244 = vector.extract_strided_slice %236 {offsets = [2, 0], sizes = [2, 1], strides = [1, 1]} : vector<8x1xf32> to vector<2x1xf32>
    %245 = vector.shape_cast %244 : vector<2x1xf32> to vector<1x2x1xf32>
    %cst_78 = arith.constant dense<0.000000e+00> : vector<1xf32>
    %246 = vector.multi_reduction <add>, %245, %cst_78 [1, 2] : vector<1x2x1xf32> to vector<1xf32>
    %247 = vector.shape_cast %246 : vector<1xf32> to vector<1x1x1xf32>
    %248 = vector.extract %247[0, 0, 0] : f32 from vector<1x1x1xf32>
    %cst_79 = arith.constant 5.120000e+02 : f32
    %249 = arith.divf %248, %cst_79 : f32
    %250 = vector.broadcast %249 : f32 to vector<2x1xf32>
    %251 = vector.extract_strided_slice %236 {offsets = [4, 0], sizes = [2, 1], strides = [1, 1]} : vector<8x1xf32> to vector<2x1xf32>
    %252 = vector.shape_cast %251 : vector<2x1xf32> to vector<1x2x1xf32>
    %cst_80 = arith.constant dense<0.000000e+00> : vector<1xf32>
    %253 = vector.multi_reduction <add>, %252, %cst_80 [1, 2] : vector<1x2x1xf32> to vector<1xf32>
    %254 = vector.shape_cast %253 : vector<1xf32> to vector<1x1x1xf32>
    %255 = vector.extract %254[0, 0, 0] : f32 from vector<1x1x1xf32>
    %cst_81 = arith.constant 5.120000e+02 : f32
    %256 = arith.divf %255, %cst_81 : f32
    %257 = vector.broadcast %256 : f32 to vector<2x1xf32>
    %258 = vector.extract_strided_slice %236 {offsets = [6, 0], sizes = [2, 1], strides = [1, 1]} : vector<8x1xf32> to vector<2x1xf32>
    %259 = vector.shape_cast %258 : vector<2x1xf32> to vector<1x2x1xf32>
    %cst_82 = arith.constant dense<0.000000e+00> : vector<1xf32>
    %260 = vector.multi_reduction <add>, %259, %cst_82 [1, 2] : vector<1x2x1xf32> to vector<1xf32>
    %261 = vector.shape_cast %260 : vector<1xf32> to vector<1x1x1xf32>
    %262 = vector.extract %261[0, 0, 0] : f32 from vector<1x1x1xf32>
    %cst_83 = arith.constant 5.120000e+02 : f32
    %263 = arith.divf %262, %cst_83 : f32
    %264 = vector.broadcast %263 : f32 to vector<2x1xf32>
    %265 = tpu.concatenate %243, %250, %257, %264 in 0 : vector<2x1xf32>, vector<2x1xf32>, vector<2x1xf32>, vector<2x1xf32> -> vector<8x1xf32>
    %266 = vector.broadcast %265 : vector<8x1xf32> to vector<8x256xf32>
    %267 = arith.subf %234, %266 : vector<8x256xf32>
    %268 = arith.mulf %267, %267 : vector<8x256xf32>
    %cst_84 = arith.constant dense<0.000000e+00> : vector<8xf32>
    %269 = vector.multi_reduction <add>, %268, %cst_84 [1] : vector<8x256xf32> to vector<8xf32>
    %270 = vector.shape_cast %269 : vector<8xf32> to vector<8x1xf32>
    %271 = vector.extract_strided_slice %270 {offsets = [0, 0], sizes = [2, 1], strides = [1, 1]} : vector<8x1xf32> to vector<2x1xf32>
    %272 = vector.shape_cast %271 : vector<2x1xf32> to vector<1x2x1xf32>
    %cst_85 = arith.constant dense<0.000000e+00> : vector<1xf32>
    %273 = vector.multi_reduction <add>, %272, %cst_85 [1, 2] : vector<1x2x1xf32> to vector<1xf32>
    %274 = vector.shape_cast %273 : vector<1xf32> to vector<1x1x1xf32>
    %275 = vector.extract %274[0, 0, 0] : f32 from vector<1x1x1xf32>
    %cst_86 = arith.constant 5.120000e+02 : f32
    %276 = arith.divf %275, %cst_86 : f32
    %cst_87 = arith.constant 9.99999997E-7 : f32
    %277 = arith.addf %276, %cst_87 : f32
    %278 = math.rsqrt %277 : f32
    %279 = vector.broadcast %278 : f32 to vector<2x1xf32>
    %280 = vector.extract_strided_slice %270 {offsets = [2, 0], sizes = [2, 1], strides = [1, 1]} : vector<8x1xf32> to vector<2x1xf32>
    %281 = vector.shape_cast %280 : vector<2x1xf32> to vector<1x2x1xf32>
    %cst_88 = arith.constant dense<0.000000e+00> : vector<1xf32>
    %282 = vector.multi_reduction <add>, %281, %cst_88 [1, 2] : vector<1x2x1xf32> to vector<1xf32>
    %283 = vector.shape_cast %282 : vector<1xf32> to vector<1x1x1xf32>
    %284 = vector.extract %283[0, 0, 0] : f32 from vector<1x1x1xf32>
    %cst_89 = arith.constant 5.120000e+02 : f32
    %285 = arith.divf %284, %cst_89 : f32
    %cst_90 = arith.constant 9.99999997E-7 : f32
    %286 = arith.addf %285, %cst_90 : f32
    %287 = math.rsqrt %286 : f32
    %288 = vector.broadcast %287 : f32 to vector<2x1xf32>
    %289 = vector.extract_strided_slice %270 {offsets = [4, 0], sizes = [2, 1], strides = [1, 1]} : vector<8x1xf32> to vector<2x1xf32>
    %290 = vector.shape_cast %289 : vector<2x1xf32> to vector<1x2x1xf32>
    %cst_91 = arith.constant dense<0.000000e+00> : vector<1xf32>
    %291 = vector.multi_reduction <add>, %290, %cst_91 [1, 2] : vector<1x2x1xf32> to vector<1xf32>
    %292 = vector.shape_cast %291 : vector<1xf32> to vector<1x1x1xf32>
    %293 = vector.extract %292[0, 0, 0] : f32 from vector<1x1x1xf32>
    %cst_92 = arith.constant 5.120000e+02 : f32
    %294 = arith.divf %293, %cst_92 : f32
    %cst_93 = arith.constant 9.99999997E-7 : f32
    %295 = arith.addf %294, %cst_93 : f32
    %296 = math.rsqrt %295 : f32
    %297 = vector.broadcast %296 : f32 to vector<2x1xf32>
    %298 = vector.extract_strided_slice %270 {offsets = [6, 0], sizes = [2, 1], strides = [1, 1]} : vector<8x1xf32> to vector<2x1xf32>
    %299 = vector.shape_cast %298 : vector<2x1xf32> to vector<1x2x1xf32>
    %cst_94 = arith.constant dense<0.000000e+00> : vector<1xf32>
    %300 = vector.multi_reduction <add>, %299, %cst_94 [1, 2] : vector<1x2x1xf32> to vector<1xf32>
    %301 = vector.shape_cast %300 : vector<1xf32> to vector<1x1x1xf32>
    %302 = vector.extract %301[0, 0, 0] : f32 from vector<1x1x1xf32>
    %cst_95 = arith.constant 5.120000e+02 : f32
    %303 = arith.divf %302, %cst_95 : f32
    %cst_96 = arith.constant 9.99999997E-7 : f32
    %304 = arith.addf %303, %cst_96 : f32
    %305 = math.rsqrt %304 : f32
    %306 = vector.broadcast %305 : f32 to vector<2x1xf32>
    %307 = tpu.concatenate %279, %288, %297, %306 in 0 : vector<2x1xf32>, vector<2x1xf32>, vector<2x1xf32>, vector<2x1xf32> -> vector<8x1xf32>
    %308 = arith.mulf %307, %34 : vector<8x1xf32>
    %309 = vector.broadcast %308 : vector<8x1xf32> to vector<8x256xf32>
    %310 = arith.mulf %267, %309 : vector<8x256xf32>
    %311 = vector.broadcast %35 : vector<8x1xf32> to vector<8x256xf32>
    %312 = arith.addf %310, %311 : vector<8x256xf32>
    %313 = arith.negf %312 : vector<8x256xf32>
    %314 = math.exp %313 : vector<8x256xf32>
    %cst_97 = arith.constant 1.000000e+00 : f32
    %315 = vector.broadcast %cst_97 : f32 to vector<8x256xf32>
    %316 = arith.addf %315, %314 : vector<8x256xf32>
    %317 = arith.divf %315, %316 : vector<8x256xf32>
    %318 = arith.mulf %312, %317 : vector<8x256xf32>
    %c73_i32_98 = arith.constant 73 : i32
    %319 = tpu.dynamic_rotate %318 by %c73_i32_98 dim 1 : vector<8x256xf32>, i32 -> vector<8x256xf32>
    %320 = vector.broadcast %6 : vector<1x256xf32> to vector<8x256xf32>
    %321 = arith.mulf %319, %320 : vector<8x256xf32>
    %c0_99 = arith.constant 0 : index
    %c0_100 = arith.constant 0 : index
    %322 = vector.load %arg10[%c0_99, %c0_100] : memref<432x256xf32, #tpu.memory_space<vmem>>, vector<8x256xf32>
    tpu.vector_store %arg10[%c0_99, %c0_100], %321 {strides = array<i32>} : memref<432x256xf32, #tpu.memory_space<vmem>>, vector<8x256xf32>,
    %c72_i32_101 = arith.constant 72 : i32
    %323 = tpu.dynamic_rotate %318 by %c72_i32_101 dim 1 : vector<8x256xf32>, i32 -> vector<8x256xf32>
    %324 = vector.broadcast %7 : vector<1x256xf32> to vector<8x256xf32>
    %325 = arith.mulf %323, %324 : vector<8x256xf32>
    %c8 = arith.constant 8 : index
    %c0_102 = arith.constant 0 : index
    %326 = vector.load %arg10[%c8, %c0_102] : memref<432x256xf32, #tpu.memory_space<vmem>>, vector<8x256xf32>
    tpu.vector_store %arg10[%c8, %c0_102], %325 {strides = array<i32>} : memref<432x256xf32, #tpu.memory_space<vmem>>, vector<8x256xf32>,
    %c71_i32_103 = arith.constant 71 : i32
    %327 = tpu.dynamic_rotate %318 by %c71_i32_103 dim 1 : vector<8x256xf32>, i32 -> vector<8x256xf32>
    %328 = vector.broadcast %8 : vector<1x256xf32> to vector<8x256xf32>
    %329 = arith.mulf %327, %328 : vector<8x256xf32>
    %c16_104 = arith.constant 16 : index
    %c0_105 = arith.constant 0 : index
    %330 = vector.load %arg10[%c16_104, %c0_105] : memref<432x256xf32, #tpu.memory_space<vmem>>, vector<8x256xf32>
    tpu.vector_store %arg10[%c16_104, %c0_105], %329 {strides = array<i32>} : memref<432x256xf32, #tpu.memory_space<vmem>>, vector<8x256xf32>,
    %c65_i32_106 = arith.constant 65 : i32
    %331 = tpu.dynamic_rotate %318 by %c65_i32_106 dim 1 : vector<8x256xf32>, i32 -> vector<8x256xf32>
    %332 = vector.broadcast %9 : vector<1x256xf32> to vector<8x256xf32>
    %333 = arith.mulf %331, %332 : vector<8x256xf32>
    %c24 = arith.constant 24 : index
    %c0_107 = arith.constant 0 : index
    %334 = vector.load %arg10[%c24, %c0_107] : memref<432x256xf32, #tpu.memory_space<vmem>>, vector<8x256xf32>
    tpu.vector_store %arg10[%c24, %c0_107], %333 {strides = array<i32>} : memref<432x256xf32, #tpu.memory_space<vmem>>, vector<8x256xf32>,
    %c64_i32_108 = arith.constant 64 : i32
    %335 = tpu.dynamic_rotate %318 by %c64_i32_108 dim 1 : vector<8x256xf32>, i32 -> vector<8x256xf32>
    %336 = vector.broadcast %10 : vector<1x256xf32> to vector<8x256xf32>
    %337 = arith.mulf %335, %336 : vector<8x256xf32>
    %c32_109 = arith.constant 32 : index
    %c0_110 = arith.constant 0 : index
    %338 = vector.load %arg10[%c32_109, %c0_110] : memref<432x256xf32, #tpu.memory_space<vmem>>, vector<8x256xf32>
    tpu.vector_store %arg10[%c32_109, %c0_110], %337 {strides = array<i32>} : memref<432x256xf32, #tpu.memory_space<vmem>>, vector<8x256xf32>,
    %c63_i32_111 = arith.constant 63 : i32
    %339 = tpu.dynamic_rotate %318 by %c63_i32_111 dim 1 : vector<8x256xf32>, i32 -> vector<8x256xf32>
    %340 = vector.broadcast %11 : vector<1x256xf32> to vector<8x256xf32>
    %341 = arith.mulf %339, %340 : vector<8x256xf32>
    %c40_112 = arith.constant 40 : index
    %c0_113 = arith.constant 0 : index
    %342 = vector.load %arg10[%c40_112, %c0_113] : memref<432x256xf32, #tpu.memory_space<vmem>>, vector<8x256xf32>
    tpu.vector_store %arg10[%c40_112, %c0_113], %341 {strides = array<i32>} : memref<432x256xf32, #tpu.memory_space<vmem>>, vector<8x256xf32>,
    %c57_i32_114 = arith.constant 57 : i32
    %343 = tpu.dynamic_rotate %318 by %c57_i32_114 dim 1 : vector<8x256xf32>, i32 -> vector<8x256xf32>
    %344 = vector.broadcast %12 : vector<1x256xf32> to vector<8x256xf32>
    %345 = arith.mulf %343, %344 : vector<8x256xf32>
    %c48_115 = arith.constant 48 : index
    %c0_116 = arith.constant 0 : index
    %346 = vector.load %arg10[%c48_115, %c0_116] : memref<432x256xf32, #tpu.memory_space<vmem>>, vector<8x256xf32>
    tpu.vector_store %arg10[%c48_115, %c0_116], %345 {strides = array<i32>} : memref<432x256xf32, #tpu.memory_space<vmem>>, vector<8x256xf32>,
    %c56_i32_117 = arith.constant 56 : i32
    %347 = tpu.dynamic_rotate %318 by %c56_i32_117 dim 1 : vector<8x256xf32>, i32 -> vector<8x256xf32>
    %348 = vector.broadcast %13 : vector<1x256xf32> to vector<8x256xf32>
    %349 = arith.mulf %347, %348 : vector<8x256xf32>
    %c56_118 = arith.constant 56 : index
    %c0_119 = arith.constant 0 : index
    %350 = vector.load %arg10[%c56_118, %c0_119] : memref<432x256xf32, #tpu.memory_space<vmem>>, vector<8x256xf32>
    tpu.vector_store %arg10[%c56_118, %c0_119], %349 {strides = array<i32>} : memref<432x256xf32, #tpu.memory_space<vmem>>, vector<8x256xf32>,
    %c55_i32_120 = arith.constant 55 : i32
    %351 = tpu.dynamic_rotate %318 by %c55_i32_120 dim 1 : vector<8x256xf32>, i32 -> vector<8x256xf32>
    %352 = vector.broadcast %14 : vector<1x256xf32> to vector<8x256xf32>
    %353 = arith.mulf %351, %352 : vector<8x256xf32>
    %c64_121 = arith.constant 64 : index
    %c0_122 = arith.constant 0 : index
    %354 = vector.load %arg10[%c64_121, %c0_122] : memref<432x256xf32, #tpu.memory_space<vmem>>, vector<8x256xf32>
    tpu.vector_store %arg10[%c64_121, %c0_122], %353 {strides = array<i32>} : memref<432x256xf32, #tpu.memory_space<vmem>>, vector<8x256xf32>,
    %c9_i32_123 = arith.constant 9 : i32
    %355 = tpu.dynamic_rotate %318 by %c9_i32_123 dim 1 : vector<8x256xf32>, i32 -> vector<8x256xf32>
    %356 = vector.broadcast %15 : vector<1x256xf32> to vector<8x256xf32>
    %357 = arith.mulf %355, %356 : vector<8x256xf32>
    %c72 = arith.constant 72 : index
    %c0_124 = arith.constant 0 : index
    %358 = vector.load %arg10[%c72, %c0_124] : memref<432x256xf32, #tpu.memory_space<vmem>>, vector<8x256xf32>
    tpu.vector_store %arg10[%c72, %c0_124], %357 {strides = array<i32>} : memref<432x256xf32, #tpu.memory_space<vmem>>, vector<8x256xf32>,
    %c8_i32_125 = arith.constant 8 : i32
    %359 = tpu.dynamic_rotate %318 by %c8_i32_125 dim 1 : vector<8x256xf32>, i32 -> vector<8x256xf32>
    %360 = vector.broadcast %16 : vector<1x256xf32> to vector<8x256xf32>
    %361 = arith.mulf %359, %360 : vector<8x256xf32>
    %c80_126 = arith.constant 80 : index
    %c0_127 = arith.constant 0 : index
    %362 = vector.load %arg10[%c80_126, %c0_127] : memref<432x256xf32, #tpu.memory_space<vmem>>, vector<8x256xf32>
    tpu.vector_store %arg10[%c80_126, %c0_127], %361 {strides = array<i32>} : memref<432x256xf32, #tpu.memory_space<vmem>>, vector<8x256xf32>,
    %c7_i32_128 = arith.constant 7 : i32
    %363 = tpu.dynamic_rotate %318 by %c7_i32_128 dim 1 : vector<8x256xf32>, i32 -> vector<8x256xf32>
    %364 = vector.broadcast %17 : vector<1x256xf32> to vector<8x256xf32>
    %365 = arith.mulf %363, %364 : vector<8x256xf32>
    %c88 = arith.constant 88 : index
    %c0_129 = arith.constant 0 : index
    %366 = vector.load %arg10[%c88, %c0_129] : memref<432x256xf32, #tpu.memory_space<vmem>>, vector<8x256xf32>
    tpu.vector_store %arg10[%c88, %c0_129], %365 {strides = array<i32>} : memref<432x256xf32, #tpu.memory_space<vmem>>, vector<8x256xf32>,
    %c1_i32_130 = arith.constant 1 : i32
    %367 = tpu.dynamic_rotate %318 by %c1_i32_130 dim 1 : vector<8x256xf32>, i32 -> vector<8x256xf32>
    %368 = vector.broadcast %18 : vector<1x256xf32> to vector<8x256xf32>
    %369 = arith.mulf %367, %368 : vector<8x256xf32>
    %c96_131 = arith.constant 96 : index
    %c0_132 = arith.constant 0 : index
    %370 = vector.load %arg10[%c96_131, %c0_132] : memref<432x256xf32, #tpu.memory_space<vmem>>, vector<8x256xf32>
    tpu.vector_store %arg10[%c96_131, %c0_132], %369 {strides = array<i32>} : memref<432x256xf32, #tpu.memory_space<vmem>>, vector<8x256xf32>,
    %c104 = arith.constant 104 : index
    %c0_133 = arith.constant 0 : index
    %371 = vector.load %arg10[%c104, %c0_133] : memref<432x256xf32, #tpu.memory_space<vmem>>, vector<8x256xf32>
    tpu.vector_store %arg10[%c104, %c0_133], %318 {strides = array<i32>} : memref<432x256xf32, #tpu.memory_space<vmem>>, vector<8x256xf32>,
    %c255_i32_134 = arith.constant 255 : i32
    %372 = tpu.dynamic_rotate %318 by %c255_i32_134 dim 1 : vector<8x256xf32>, i32 -> vector<8x256xf32>
    %373 = vector.broadcast %19 : vector<1x256xf32> to vector<8x256xf32>
    %374 = arith.mulf %372, %373 : vector<8x256xf32>
    %c112_135 = arith.constant 112 : index
    %c0_136 = arith.constant 0 : index
    %375 = vector.load %arg10[%c112_135, %c0_136] : memref<432x256xf32, #tpu.memory_space<vmem>>, vector<8x256xf32>
    tpu.vector_store %arg10[%c112_135, %c0_136], %374 {strides = array<i32>} : memref<432x256xf32, #tpu.memory_space<vmem>>, vector<8x256xf32>,
    %c249_i32_137 = arith.constant 249 : i32
    %376 = tpu.dynamic_rotate %318 by %c249_i32_137 dim 1 : vector<8x256xf32>, i32 -> vector<8x256xf32>
    %377 = vector.broadcast %20 : vector<1x256xf32> to vector<8x256xf32>
    %378 = arith.mulf %376, %377 : vector<8x256xf32>
    %c120 = arith.constant 120 : index
    %c0_138 = arith.constant 0 : index
    %379 = vector.load %arg10[%c120, %c0_138] : memref<432x256xf32, #tpu.memory_space<vmem>>, vector<8x256xf32>
    tpu.vector_store %arg10[%c120, %c0_138], %378 {strides = array<i32>} : memref<432x256xf32, #tpu.memory_space<vmem>>, vector<8x256xf32>,
    %c248_i32_139 = arith.constant 248 : i32
    %380 = tpu.dynamic_rotate %318 by %c248_i32_139 dim 1 : vector<8x256xf32>, i32 -> vector<8x256xf32>
    %381 = vector.broadcast %21 : vector<1x256xf32> to vector<8x256xf32>
    %382 = arith.mulf %380, %381 : vector<8x256xf32>
    %c128_140 = arith.constant 128 : index
    %c0_141 = arith.constant 0 : index
    %383 = vector.load %arg10[%c128_140, %c0_141] : memref<432x256xf32, #tpu.memory_space<vmem>>, vector<8x256xf32>
    tpu.vector_store %arg10[%c128_140, %c0_141], %382 {strides = array<i32>} : memref<432x256xf32, #tpu.memory_space<vmem>>, vector<8x256xf32>,
    %c247_i32_142 = arith.constant 247 : i32
    %384 = tpu.dynamic_rotate %318 by %c247_i32_142 dim 1 : vector<8x256xf32>, i32 -> vector<8x256xf32>
    %385 = vector.broadcast %22 : vector<1x256xf32> to vector<8x256xf32>
    %386 = arith.mulf %384, %385 : vector<8x256xf32>
    %c136 = arith.constant 136 : index
    %c0_143 = arith.constant 0 : index
    %387 = vector.load %arg10[%c136, %c0_143] : memref<432x256xf32, #tpu.memory_space<vmem>>, vector<8x256xf32>
    tpu.vector_store %arg10[%c136, %c0_143], %386 {strides = array<i32>} : memref<432x256xf32, #tpu.memory_space<vmem>>, vector<8x256xf32>,
    %c201_i32_144 = arith.constant 201 : i32
    %388 = tpu.dynamic_rotate %318 by %c201_i32_144 dim 1 : vector<8x256xf32>, i32 -> vector<8x256xf32>
    %389 = vector.broadcast %23 : vector<1x256xf32> to vector<8x256xf32>
    %390 = arith.mulf %388, %389 : vector<8x256xf32>
    %c144_145 = arith.constant 144 : index
    %c0_146 = arith.constant 0 : index
    %391 = vector.load %arg10[%c144_145, %c0_146] : memref<432x256xf32, #tpu.memory_space<vmem>>, vector<8x256xf32>
    tpu.vector_store %arg10[%c144_145, %c0_146], %390 {strides = array<i32>} : memref<432x256xf32, #tpu.memory_space<vmem>>, vector<8x256xf32>,
    %c200_i32_147 = arith.constant 200 : i32
    %392 = tpu.dynamic_rotate %318 by %c200_i32_147 dim 1 : vector<8x256xf32>, i32 -> vector<8x256xf32>
    %393 = vector.broadcast %24 : vector<1x256xf32> to vector<8x256xf32>
    %394 = arith.mulf %392, %393 : vector<8x256xf32>
    %c152 = arith.constant 152 : index
    %c0_148 = arith.constant 0 : index
    %395 = vector.load %arg10[%c152, %c0_148] : memref<432x256xf32, #tpu.memory_space<vmem>>, vector<8x256xf32>
    tpu.vector_store %arg10[%c152, %c0_148], %394 {strides = array<i32>} : memref<432x256xf32, #tpu.memory_space<vmem>>, vector<8x256xf32>,
    %c199_i32_149 = arith.constant 199 : i32
    %396 = tpu.dynamic_rotate %318 by %c199_i32_149 dim 1 : vector<8x256xf32>, i32 -> vector<8x256xf32>
    %397 = vector.broadcast %25 : vector<1x256xf32> to vector<8x256xf32>
    %398 = arith.mulf %396, %397 : vector<8x256xf32>
    %c160_150 = arith.constant 160 : index
    %c0_151 = arith.constant 0 : index
    %399 = vector.load %arg10[%c160_150, %c0_151] : memref<432x256xf32, #tpu.memory_space<vmem>>, vector<8x256xf32>
    tpu.vector_store %arg10[%c160_150, %c0_151], %398 {strides = array<i32>} : memref<432x256xf32, #tpu.memory_space<vmem>>, vector<8x256xf32>,
    %c193_i32_152 = arith.constant 193 : i32
    %400 = tpu.dynamic_rotate %318 by %c193_i32_152 dim 1 : vector<8x256xf32>, i32 -> vector<8x256xf32>
    %401 = vector.broadcast %26 : vector<1x256xf32> to vector<8x256xf32>
    %402 = arith.mulf %400, %401 : vector<8x256xf32>
    %c168 = arith.constant 168 : index
    %c0_153 = arith.constant 0 : index
    %403 = vector.load %arg10[%c168, %c0_153] : memref<432x256xf32, #tpu.memory_space<vmem>>, vector<8x256xf32>
    tpu.vector_store %arg10[%c168, %c0_153], %402 {strides = array<i32>} : memref<432x256xf32, #tpu.memory_space<vmem>>, vector<8x256xf32>,
    %c192_i32_154 = arith.constant 192 : i32
    %404 = tpu.dynamic_rotate %318 by %c192_i32_154 dim 1 : vector<8x256xf32>, i32 -> vector<8x256xf32>
    %405 = vector.broadcast %27 : vector<1x256xf32> to vector<8x256xf32>
    %406 = arith.mulf %404, %405 : vector<8x256xf32>
    %c176_155 = arith.constant 176 : index
    %c0_156 = arith.constant 0 : index
    %407 = vector.load %arg10[%c176_155, %c0_156] : memref<432x256xf32, #tpu.memory_space<vmem>>, vector<8x256xf32>
    tpu.vector_store %arg10[%c176_155, %c0_156], %406 {strides = array<i32>} : memref<432x256xf32, #tpu.memory_space<vmem>>, vector<8x256xf32>,
    %c191_i32_157 = arith.constant 191 : i32
    %408 = tpu.dynamic_rotate %318 by %c191_i32_157 dim 1 : vector<8x256xf32>, i32 -> vector<8x256xf32>
    %409 = vector.broadcast %28 : vector<1x256xf32> to vector<8x256xf32>
    %410 = arith.mulf %408, %409 : vector<8x256xf32>
    %c184 = arith.constant 184 : index
    %c0_158 = arith.constant 0 : index
    %411 = vector.load %arg10[%c184, %c0_158] : memref<432x256xf32, #tpu.memory_space<vmem>>, vector<8x256xf32>
    tpu.vector_store %arg10[%c184, %c0_158], %410 {strides = array<i32>} : memref<432x256xf32, #tpu.memory_space<vmem>>, vector<8x256xf32>,
    %c185_i32_159 = arith.constant 185 : i32
    %412 = tpu.dynamic_rotate %318 by %c185_i32_159 dim 1 : vector<8x256xf32>, i32 -> vector<8x256xf32>
    %413 = vector.broadcast %29 : vector<1x256xf32> to vector<8x256xf32>
    %414 = arith.mulf %412, %413 : vector<8x256xf32>
    %c192_160 = arith.constant 192 : index
    %c0_161 = arith.constant 0 : index
    %415 = vector.load %arg10[%c192_160, %c0_161] : memref<432x256xf32, #tpu.memory_space<vmem>>, vector<8x256xf32>
    tpu.vector_store %arg10[%c192_160, %c0_161], %414 {strides = array<i32>} : memref<432x256xf32, #tpu.memory_space<vmem>>, vector<8x256xf32>,
    %c184_i32_162 = arith.constant 184 : i32
    %416 = tpu.dynamic_rotate %318 by %c184_i32_162 dim 1 : vector<8x256xf32>, i32 -> vector<8x256xf32>
    %417 = vector.broadcast %30 : vector<1x256xf32> to vector<8x256xf32>
    %418 = arith.mulf %416, %417 : vector<8x256xf32>
    %c200 = arith.constant 200 : index
    %c0_163 = arith.constant 0 : index
    %419 = vector.load %arg10[%c200, %c0_163] : memref<432x256xf32, #tpu.memory_space<vmem>>, vector<8x256xf32>
    tpu.vector_store %arg10[%c200, %c0_163], %418 {strides = array<i32>} : memref<432x256xf32, #tpu.memory_space<vmem>>, vector<8x256xf32>,
    %c183_i32_164 = arith.constant 183 : i32
    %420 = tpu.dynamic_rotate %318 by %c183_i32_164 dim 1 : vector<8x256xf32>, i32 -> vector<8x256xf32>
    %421 = vector.broadcast %31 : vector<1x256xf32> to vector<8x256xf32>
    %422 = arith.mulf %420, %421 : vector<8x256xf32>
    %c208_165 = arith.constant 208 : index
    %c0_166 = arith.constant 0 : index
    %423 = vector.load %arg10[%c208_165, %c0_166] : memref<432x256xf32, #tpu.memory_space<vmem>>, vector<8x256xf32>
    tpu.vector_store %arg10[%c208_165, %c0_166], %422 {strides = array<i32>} : memref<432x256xf32, #tpu.memory_space<vmem>>, vector<8x256xf32>,
    %c216 = arith.constant 216 : index
    %c0_167 = arith.constant 0 : index
    %424 = vector.load %arg10[%c216, %c0_167] : memref<432x256xf32, #tpu.memory_space<vmem>>, vector<16x256xf32>
    tpu.vector_store %arg10[%c216, %c0_167], %4 {strides = array<i32>} : memref<432x256xf32, #tpu.memory_space<vmem>>, vector<16x256xf32>,
    %c0_168 = arith.constant 0 : index
    %c0_169 = arith.constant 0 : index
    %425 = vector.load %arg10[%c0_168, %c0_169] : memref<432x256xf32, #tpu.memory_space<vmem>>, vector<232x256xf32>
    %426 = arith.truncf %425 : vector<232x256xf32> to vector<232x256xbf16>
    %c0_170 = arith.constant 0 : index
    %c0_171 = arith.constant 0 : index
    %427 = vector.load %arg6[%c0_170, %c0_171] : memref<8x232xbf16, #tpu.memory_space<vmem>>, vector<8x232xbf16>
    %cst_172 = arith.constant dense<0.000000e+00> : vector<8x256xf32>
    %428 = tpu.matmul %427, %426, %cst_172 {dimension_numbers = #tpu.dot_dimension_numbers<[1], [0], [0], [1], [0, 0, 1, 1], [], []>} : vector<8x232xbf16>, vector<232x256xbf16>, vector<8x256xf32> -> vector<8x256xf32>
    %429 = vector.broadcast %36 : vector<8x1xf32> to vector<8x256xf32>
    %430 = arith.addf %428, %429 : vector<8x256xf32>
    %c73_i32_173 = arith.constant 73 : i32
    %431 = tpu.dynamic_rotate %430 by %c73_i32_173 dim 1 : vector<8x256xf32>, i32 -> vector<8x256xf32>
    %432 = vector.broadcast %6 : vector<1x256xf32> to vector<8x256xf32>
    %433 = arith.mulf %431, %432 : vector<8x256xf32>
    %c0_174 = arith.constant 0 : index
    %c0_175 = arith.constant 0 : index
    %434 = vector.load %arg10[%c0_174, %c0_175] : memref<432x256xf32, #tpu.memory_space<vmem>>, vector<8x256xf32>
    tpu.vector_store %arg10[%c0_174, %c0_175], %433 {strides = array<i32>} : memref<432x256xf32, #tpu.memory_space<vmem>>, vector<8x256xf32>,
    %c72_i32_176 = arith.constant 72 : i32
    %435 = tpu.dynamic_rotate %430 by %c72_i32_176 dim 1 : vector<8x256xf32>, i32 -> vector<8x256xf32>
    %436 = vector.broadcast %7 : vector<1x256xf32> to vector<8x256xf32>
    %437 = arith.mulf %435, %436 : vector<8x256xf32>
    %c8_177 = arith.constant 8 : index
    %c0_178 = arith.constant 0 : index
    %438 = vector.load %arg10[%c8_177, %c0_178] : memref<432x256xf32, #tpu.memory_space<vmem>>, vector<8x256xf32>
    tpu.vector_store %arg10[%c8_177, %c0_178], %437 {strides = array<i32>} : memref<432x256xf32, #tpu.memory_space<vmem>>, vector<8x256xf32>,
    %c71_i32_179 = arith.constant 71 : i32
    %439 = tpu.dynamic_rotate %430 by %c71_i32_179 dim 1 : vector<8x256xf32>, i32 -> vector<8x256xf32>
    %440 = vector.broadcast %8 : vector<1x256xf32> to vector<8x256xf32>
    %441 = arith.mulf %439, %440 : vector<8x256xf32>
    %c16_180 = arith.constant 16 : index
    %c0_181 = arith.constant 0 : index
    %442 = vector.load %arg10[%c16_180, %c0_181] : memref<432x256xf32, #tpu.memory_space<vmem>>, vector<8x256xf32>
    tpu.vector_store %arg10[%c16_180, %c0_181], %441 {strides = array<i32>} : memref<432x256xf32, #tpu.memory_space<vmem>>, vector<8x256xf32>,
    %c65_i32_182 = arith.constant 65 : i32
    %443 = tpu.dynamic_rotate %430 by %c65_i32_182 dim 1 : vector<8x256xf32>, i32 -> vector<8x256xf32>
    %444 = vector.broadcast %9 : vector<1x256xf32> to vector<8x256xf32>
    %445 = arith.mulf %443, %444 : vector<8x256xf32>
    %c24_183 = arith.constant 24 : index
    %c0_184 = arith.constant 0 : index
    %446 = vector.load %arg10[%c24_183, %c0_184] : memref<432x256xf32, #tpu.memory_space<vmem>>, vector<8x256xf32>
    tpu.vector_store %arg10[%c24_183, %c0_184], %445 {strides = array<i32>} : memref<432x256xf32, #tpu.memory_space<vmem>>, vector<8x256xf32>,
    %c64_i32_185 = arith.constant 64 : i32
    %447 = tpu.dynamic_rotate %430 by %c64_i32_185 dim 1 : vector<8x256xf32>, i32 -> vector<8x256xf32>
    %448 = vector.broadcast %10 : vector<1x256xf32> to vector<8x256xf32>
    %449 = arith.mulf %447, %448 : vector<8x256xf32>
    %c32_186 = arith.constant 32 : index
    %c0_187 = arith.constant 0 : index
    %450 = vector.load %arg10[%c32_186, %c0_187] : memref<432x256xf32, #tpu.memory_space<vmem>>, vector<8x256xf32>
    tpu.vector_store %arg10[%c32_186, %c0_187], %449 {strides = array<i32>} : memref<432x256xf32, #tpu.memory_space<vmem>>, vector<8x256xf32>,
    %c63_i32_188 = arith.constant 63 : i32
    %451 = tpu.dynamic_rotate %430 by %c63_i32_188 dim 1 : vector<8x256xf32>, i32 -> vector<8x256xf32>
    %452 = vector.broadcast %11 : vector<1x256xf32> to vector<8x256xf32>
    %453 = arith.mulf %451, %452 : vector<8x256xf32>
    %c40_189 = arith.constant 40 : index
    %c0_190 = arith.constant 0 : index
    %454 = vector.load %arg10[%c40_189, %c0_190] : memref<432x256xf32, #tpu.memory_space<vmem>>, vector<8x256xf32>
    tpu.vector_store %arg10[%c40_189, %c0_190], %453 {strides = array<i32>} : memref<432x256xf32, #tpu.memory_space<vmem>>, vector<8x256xf32>,
    %c57_i32_191 = arith.constant 57 : i32
    %455 = tpu.dynamic_rotate %430 by %c57_i32_191 dim 1 : vector<8x256xf32>, i32 -> vector<8x256xf32>
    %456 = vector.broadcast %12 : vector<1x256xf32> to vector<8x256xf32>
    %457 = arith.mulf %455, %456 : vector<8x256xf32>
    %c48_192 = arith.constant 48 : index
    %c0_193 = arith.constant 0 : index
    %458 = vector.load %arg10[%c48_192, %c0_193] : memref<432x256xf32, #tpu.memory_space<vmem>>, vector<8x256xf32>
    tpu.vector_store %arg10[%c48_192, %c0_193], %457 {strides = array<i32>} : memref<432x256xf32, #tpu.memory_space<vmem>>, vector<8x256xf32>,
    %c56_i32_194 = arith.constant 56 : i32
    %459 = tpu.dynamic_rotate %430 by %c56_i32_194 dim 1 : vector<8x256xf32>, i32 -> vector<8x256xf32>
    %460 = vector.broadcast %13 : vector<1x256xf32> to vector<8x256xf32>
    %461 = arith.mulf %459, %460 : vector<8x256xf32>
    %c56_195 = arith.constant 56 : index
    %c0_196 = arith.constant 0 : index
    %462 = vector.load %arg10[%c56_195, %c0_196] : memref<432x256xf32, #tpu.memory_space<vmem>>, vector<8x256xf32>
    tpu.vector_store %arg10[%c56_195, %c0_196], %461 {strides = array<i32>} : memref<432x256xf32, #tpu.memory_space<vmem>>, vector<8x256xf32>,
    %c55_i32_197 = arith.constant 55 : i32
    %463 = tpu.dynamic_rotate %430 by %c55_i32_197 dim 1 : vector<8x256xf32>, i32 -> vector<8x256xf32>
    %464 = vector.broadcast %14 : vector<1x256xf32> to vector<8x256xf32>
    %465 = arith.mulf %463, %464 : vector<8x256xf32>
    %c64_198 = arith.constant 64 : index
    %c0_199 = arith.constant 0 : index
    %466 = vector.load %arg10[%c64_198, %c0_199] : memref<432x256xf32, #tpu.memory_space<vmem>>, vector<8x256xf32>
    tpu.vector_store %arg10[%c64_198, %c0_199], %465 {strides = array<i32>} : memref<432x256xf32, #tpu.memory_space<vmem>>, vector<8x256xf32>,
    %c9_i32_200 = arith.constant 9 : i32
    %467 = tpu.dynamic_rotate %430 by %c9_i32_200 dim 1 : vector<8x256xf32>, i32 -> vector<8x256xf32>
    %468 = vector.broadcast %15 : vector<1x256xf32> to vector<8x256xf32>
    %469 = arith.mulf %467, %468 : vector<8x256xf32>
    %c72_201 = arith.constant 72 : index
    %c0_202 = arith.constant 0 : index
    %470 = vector.load %arg10[%c72_201, %c0_202] : memref<432x256xf32, #tpu.memory_space<vmem>>, vector<8x256xf32>
    tpu.vector_store %arg10[%c72_201, %c0_202], %469 {strides = array<i32>} : memref<432x256xf32, #tpu.memory_space<vmem>>, vector<8x256xf32>,
    %c8_i32_203 = arith.constant 8 : i32
    %471 = tpu.dynamic_rotate %430 by %c8_i32_203 dim 1 : vector<8x256xf32>, i32 -> vector<8x256xf32>
    %472 = vector.broadcast %16 : vector<1x256xf32> to vector<8x256xf32>
    %473 = arith.mulf %471, %472 : vector<8x256xf32>
    %c80_204 = arith.constant 80 : index
    %c0_205 = arith.constant 0 : index
    %474 = vector.load %arg10[%c80_204, %c0_205] : memref<432x256xf32, #tpu.memory_space<vmem>>, vector<8x256xf32>
    tpu.vector_store %arg10[%c80_204, %c0_205], %473 {strides = array<i32>} : memref<432x256xf32, #tpu.memory_space<vmem>>, vector<8x256xf32>,
    %c7_i32_206 = arith.constant 7 : i32
    %475 = tpu.dynamic_rotate %430 by %c7_i32_206 dim 1 : vector<8x256xf32>, i32 -> vector<8x256xf32>
    %476 = vector.broadcast %17 : vector<1x256xf32> to vector<8x256xf32>
    %477 = arith.mulf %475, %476 : vector<8x256xf32>
    %c88_207 = arith.constant 88 : index
    %c0_208 = arith.constant 0 : index
    %478 = vector.load %arg10[%c88_207, %c0_208] : memref<432x256xf32, #tpu.memory_space<vmem>>, vector<8x256xf32>
    tpu.vector_store %arg10[%c88_207, %c0_208], %477 {strides = array<i32>} : memref<432x256xf32, #tpu.memory_space<vmem>>, vector<8x256xf32>,
    %c1_i32_209 = arith.constant 1 : i32
    %479 = tpu.dynamic_rotate %430 by %c1_i32_209 dim 1 : vector<8x256xf32>, i32 -> vector<8x256xf32>
    %480 = vector.broadcast %18 : vector<1x256xf32> to vector<8x256xf32>
    %481 = arith.mulf %479, %480 : vector<8x256xf32>
    %c96_210 = arith.constant 96 : index
    %c0_211 = arith.constant 0 : index
    %482 = vector.load %arg10[%c96_210, %c0_211] : memref<432x256xf32, #tpu.memory_space<vmem>>, vector<8x256xf32>
    tpu.vector_store %arg10[%c96_210, %c0_211], %481 {strides = array<i32>} : memref<432x256xf32, #tpu.memory_space<vmem>>, vector<8x256xf32>,
    %c104_212 = arith.constant 104 : index
    %c0_213 = arith.constant 0 : index
    %483 = vector.load %arg10[%c104_212, %c0_213] : memref<432x256xf32, #tpu.memory_space<vmem>>, vector<8x256xf32>
    tpu.vector_store %arg10[%c104_212, %c0_213], %430 {strides = array<i32>} : memref<432x256xf32, #tpu.memory_space<vmem>>, vector<8x256xf32>,
    %c255_i32_214 = arith.constant 255 : i32
    %484 = tpu.dynamic_rotate %430 by %c255_i32_214 dim 1 : vector<8x256xf32>, i32 -> vector<8x256xf32>
    %485 = vector.broadcast %19 : vector<1x256xf32> to vector<8x256xf32>
    %486 = arith.mulf %484, %485 : vector<8x256xf32>
    %c112_215 = arith.constant 112 : index
    %c0_216 = arith.constant 0 : index
    %487 = vector.load %arg10[%c112_215, %c0_216] : memref<432x256xf32, #tpu.memory_space<vmem>>, vector<8x256xf32>
    tpu.vector_store %arg10[%c112_215, %c0_216], %486 {strides = array<i32>} : memref<432x256xf32, #tpu.memory_space<vmem>>, vector<8x256xf32>,
    %c249_i32_217 = arith.constant 249 : i32
    %488 = tpu.dynamic_rotate %430 by %c249_i32_217 dim 1 : vector<8x256xf32>, i32 -> vector<8x256xf32>
    %489 = vector.broadcast %20 : vector<1x256xf32> to vector<8x256xf32>
    %490 = arith.mulf %488, %489 : vector<8x256xf32>
    %c120_218 = arith.constant 120 : index
    %c0_219 = arith.constant 0 : index
    %491 = vector.load %arg10[%c120_218, %c0_219] : memref<432x256xf32, #tpu.memory_space<vmem>>, vector<8x256xf32>
    tpu.vector_store %arg10[%c120_218, %c0_219], %490 {strides = array<i32>} : memref<432x256xf32, #tpu.memory_space<vmem>>, vector<8x256xf32>,
    %c248_i32_220 = arith.constant 248 : i32
    %492 = tpu.dynamic_rotate %430 by %c248_i32_220 dim 1 : vector<8x256xf32>, i32 -> vector<8x256xf32>
    %493 = vector.broadcast %21 : vector<1x256xf32> to vector<8x256xf32>
    %494 = arith.mulf %492, %493 : vector<8x256xf32>
    %c128_221 = arith.constant 128 : index
    %c0_222 = arith.constant 0 : index
    %495 = vector.load %arg10[%c128_221, %c0_222] : memref<432x256xf32, #tpu.memory_space<vmem>>, vector<8x256xf32>
    tpu.vector_store %arg10[%c128_221, %c0_222], %494 {strides = array<i32>} : memref<432x256xf32, #tpu.memory_space<vmem>>, vector<8x256xf32>,
    %c247_i32_223 = arith.constant 247 : i32
    %496 = tpu.dynamic_rotate %430 by %c247_i32_223 dim 1 : vector<8x256xf32>, i32 -> vector<8x256xf32>
    %497 = vector.broadcast %22 : vector<1x256xf32> to vector<8x256xf32>
    %498 = arith.mulf %496, %497 : vector<8x256xf32>
    %c136_224 = arith.constant 136 : index
    %c0_225 = arith.constant 0 : index
    %499 = vector.load %arg10[%c136_224, %c0_225] : memref<432x256xf32, #tpu.memory_space<vmem>>, vector<8x256xf32>
    tpu.vector_store %arg10[%c136_224, %c0_225], %498 {strides = array<i32>} : memref<432x256xf32, #tpu.memory_space<vmem>>, vector<8x256xf32>,
    %c201_i32_226 = arith.constant 201 : i32
    %500 = tpu.dynamic_rotate %430 by %c201_i32_226 dim 1 : vector<8x256xf32>, i32 -> vector<8x256xf32>
    %501 = vector.broadcast %23 : vector<1x256xf32> to vector<8x256xf32>
    %502 = arith.mulf %500, %501 : vector<8x256xf32>
    %c144_227 = arith.constant 144 : index
    %c0_228 = arith.constant 0 : index
    %503 = vector.load %arg10[%c144_227, %c0_228] : memref<432x256xf32, #tpu.memory_space<vmem>>, vector<8x256xf32>
    tpu.vector_store %arg10[%c144_227, %c0_228], %502 {strides = array<i32>} : memref<432x256xf32, #tpu.memory_space<vmem>>, vector<8x256xf32>,
    %c200_i32_229 = arith.constant 200 : i32
    %504 = tpu.dynamic_rotate %430 by %c200_i32_229 dim 1 : vector<8x256xf32>, i32 -> vector<8x256xf32>
    %505 = vector.broadcast %24 : vector<1x256xf32> to vector<8x256xf32>
    %506 = arith.mulf %504, %505 : vector<8x256xf32>
    %c152_230 = arith.constant 152 : index
    %c0_231 = arith.constant 0 : index
    %507 = vector.load %arg10[%c152_230, %c0_231] : memref<432x256xf32, #tpu.memory_space<vmem>>, vector<8x256xf32>
    tpu.vector_store %arg10[%c152_230, %c0_231], %506 {strides = array<i32>} : memref<432x256xf32, #tpu.memory_space<vmem>>, vector<8x256xf32>,
    %c199_i32_232 = arith.constant 199 : i32
    %508 = tpu.dynamic_rotate %430 by %c199_i32_232 dim 1 : vector<8x256xf32>, i32 -> vector<8x256xf32>
    %509 = vector.broadcast %25 : vector<1x256xf32> to vector<8x256xf32>
    %510 = arith.mulf %508, %509 : vector<8x256xf32>
    %c160_233 = arith.constant 160 : index
    %c0_234 = arith.constant 0 : index
    %511 = vector.load %arg10[%c160_233, %c0_234] : memref<432x256xf32, #tpu.memory_space<vmem>>, vector<8x256xf32>
    tpu.vector_store %arg10[%c160_233, %c0_234], %510 {strides = array<i32>} : memref<432x256xf32, #tpu.memory_space<vmem>>, vector<8x256xf32>,
    %c193_i32_235 = arith.constant 193 : i32
    %512 = tpu.dynamic_rotate %430 by %c193_i32_235 dim 1 : vector<8x256xf32>, i32 -> vector<8x256xf32>
    %513 = vector.broadcast %26 : vector<1x256xf32> to vector<8x256xf32>
    %514 = arith.mulf %512, %513 : vector<8x256xf32>
    %c168_236 = arith.constant 168 : index
    %c0_237 = arith.constant 0 : index
    %515 = vector.load %arg10[%c168_236, %c0_237] : memref<432x256xf32, #tpu.memory_space<vmem>>, vector<8x256xf32>
    tpu.vector_store %arg10[%c168_236, %c0_237], %514 {strides = array<i32>} : memref<432x256xf32, #tpu.memory_space<vmem>>, vector<8x256xf32>,
    %c192_i32_238 = arith.constant 192 : i32
    %516 = tpu.dynamic_rotate %430 by %c192_i32_238 dim 1 : vector<8x256xf32>, i32 -> vector<8x256xf32>
    %517 = vector.broadcast %27 : vector<1x256xf32> to vector<8x256xf32>
    %518 = arith.mulf %516, %517 : vector<8x256xf32>
    %c176_239 = arith.constant 176 : index
    %c0_240 = arith.constant 0 : index
    %519 = vector.load %arg10[%c176_239, %c0_240] : memref<432x256xf32, #tpu.memory_space<vmem>>, vector<8x256xf32>
    tpu.vector_store %arg10[%c176_239, %c0_240], %518 {strides = array<i32>} : memref<432x256xf32, #tpu.memory_space<vmem>>, vector<8x256xf32>,
    %c191_i32_241 = arith.constant 191 : i32
    %520 = tpu.dynamic_rotate %430 by %c191_i32_241 dim 1 : vector<8x256xf32>, i32 -> vector<8x256xf32>
    %521 = vector.broadcast %28 : vector<1x256xf32> to vector<8x256xf32>
    %522 = arith.mulf %520, %521 : vector<8x256xf32>
    %c184_242 = arith.constant 184 : index
    %c0_243 = arith.constant 0 : index
    %523 = vector.load %arg10[%c184_242, %c0_243] : memref<432x256xf32, #tpu.memory_space<vmem>>, vector<8x256xf32>
    tpu.vector_store %arg10[%c184_242, %c0_243], %522 {strides = array<i32>} : memref<432x256xf32, #tpu.memory_space<vmem>>, vector<8x256xf32>,
    %c185_i32_244 = arith.constant 185 : i32
    %524 = tpu.dynamic_rotate %430 by %c185_i32_244 dim 1 : vector<8x256xf32>, i32 -> vector<8x256xf32>
    %525 = vector.broadcast %29 : vector<1x256xf32> to vector<8x256xf32>
    %526 = arith.mulf %524, %525 : vector<8x256xf32>
    %c192_245 = arith.constant 192 : index
    %c0_246 = arith.constant 0 : index
    %527 = vector.load %arg10[%c192_245, %c0_246] : memref<432x256xf32, #tpu.memory_space<vmem>>, vector<8x256xf32>
    tpu.vector_store %arg10[%c192_245, %c0_246], %526 {strides = array<i32>} : memref<432x256xf32, #tpu.memory_space<vmem>>, vector<8x256xf32>,
    %c184_i32_247 = arith.constant 184 : i32
    %528 = tpu.dynamic_rotate %430 by %c184_i32_247 dim 1 : vector<8x256xf32>, i32 -> vector<8x256xf32>
    %529 = vector.broadcast %30 : vector<1x256xf32> to vector<8x256xf32>
    %530 = arith.mulf %528, %529 : vector<8x256xf32>
    %c200_248 = arith.constant 200 : index
    %c0_249 = arith.constant 0 : index
    %531 = vector.load %arg10[%c200_248, %c0_249] : memref<432x256xf32, #tpu.memory_space<vmem>>, vector<8x256xf32>
    tpu.vector_store %arg10[%c200_248, %c0_249], %530 {strides = array<i32>} : memref<432x256xf32, #tpu.memory_space<vmem>>, vector<8x256xf32>,
    %c183_i32_250 = arith.constant 183 : i32
    %532 = tpu.dynamic_rotate %430 by %c183_i32_250 dim 1 : vector<8x256xf32>, i32 -> vector<8x256xf32>
    %533 = vector.broadcast %31 : vector<1x256xf32> to vector<8x256xf32>
    %534 = arith.mulf %532, %533 : vector<8x256xf32>
    %c208_251 = arith.constant 208 : index
    %c0_252 = arith.constant 0 : index
    %535 = vector.load %arg10[%c208_251, %c0_252] : memref<432x256xf32, #tpu.memory_space<vmem>>, vector<8x256xf32>
    tpu.vector_store %arg10[%c208_251, %c0_252], %534 {strides = array<i32>} : memref<432x256xf32, #tpu.memory_space<vmem>>, vector<8x256xf32>,
    %c0_253 = arith.constant 0 : index
    %c0_254 = arith.constant 0 : index
    %536 = vector.load %arg10[%c0_253, %c0_254] : memref<432x256xf32, #tpu.memory_space<vmem>>, vector<216x256xf32>
    %537 = arith.truncf %536 : vector<216x256xf32> to vector<216x256xbf16>
    %c0_255 = arith.constant 0 : index
    %c0_256 = arith.constant 0 : index
    %538 = vector.load %arg7[%c0_255, %c0_256] : memref<32x216xbf16, #tpu.memory_space<vmem>>, vector<32x216xbf16>
    %cst_257 = arith.constant dense<0.000000e+00> : vector<32x256xf32>
    %539 = tpu.matmul %538, %537, %cst_257 {dimension_numbers = #tpu.dot_dimension_numbers<[1], [0], [0], [1], [0, 0, 1, 1], [], []>} : vector<32x216xbf16>, vector<216x256xbf16>, vector<32x256xf32> -> vector<32x256xf32>
    %540 = vector.broadcast %37 : vector<32x1xf32> to vector<32x256xf32>
    %541 = arith.addf %539, %540 : vector<32x256xf32>
    %c0_258 = arith.constant 0 : index
    %c0_259 = arith.constant 0 : index
    %c0_260 = arith.constant 0 : index
    %542 = vector.load %arg9[%c0_258, %c0_259, %c0_260] : memref<1x32x256xf32, #tpu.memory_space<vmem>>, vector<1x32x256xf32>
    %543 = vector.shape_cast %542 : vector<1x32x256xf32> to vector<32x256xf32>
    %544 = vector.shape_cast %541 : vector<32x256xf32> to vector<1x32x256xf32>
    tpu.vector_store %arg9[%c0_258, %c0_259, %c0_260], %544 {strides = array<i32>} : memref<1x32x256xf32, #tpu.memory_space<vmem>>, vector<1x32x256xf32>,
    return
  }
  func.func @transform_0(%arg0: i32) -> (i32, i32, i32) {
    %c0_i32 = arith.constant 0 : i32
    %c0_i32_0 = arith.constant 0 : i32
    %c0_i32_1 = arith.constant 0 : i32
    return %arg0, %c0_i32, %c0_i32_0 : i32, i32, i32
  }
  func.func @transform_1(%arg0: i32) -> (i32, i32, i32) {
    %c0_i32 = arith.constant 0 : i32
    %c0_i32_0 = arith.constant 0 : i32
    %c0_i32_1 = arith.constant 0 : i32
    return %arg0, %c0_i32, %c0_i32_0 : i32, i32, i32
  }
  func.func @transform_2(%arg0: i32) -> (i32, i32, i32) {
    %c0_i32 = arith.constant 0 : i32
    %c0_i32_0 = arith.constant 0 : i32
    %c0_i32_1 = arith.constant 0 : i32
    return %arg0, %c0_i32, %c0_i32_0 : i32, i32, i32
  }
  func.func @transform_3(%arg0: i32) -> (i32, i32) {
    %c0_i32 = arith.constant 0 : i32
    %c0_i32_0 = arith.constant 0 : i32
    %c0_i32_1 = arith.constant 0 : i32
    return %c0_i32, %c0_i32_0 : i32, i32
  }
  func.func @transform_4(%arg0: i32) -> (i32, i32) {
    %c0_i32 = arith.constant 0 : i32
    %c0_i32_0 = arith.constant 0 : i32
    %c0_i32_1 = arith.constant 0 : i32
    return %c0_i32, %c0_i32_0 : i32, i32
  }
  func.func @transform_5(%arg0: i32) -> (i32, i32) {
    %c0_i32 = arith.constant 0 : i32
    %c0_i32_0 = arith.constant 0 : i32
    %c0_i32_1 = arith.constant 0 : i32
    return %c0_i32, %c0_i32_0 : i32, i32
  }
  func.func @transform_6(%arg0: i32) -> (i32, i32) {
    %c0_i32 = arith.constant 0 : i32
    %c0_i32_0 = arith.constant 0 : i32
    %c0_i32_1 = arith.constant 0 : i32
    return %c0_i32, %c0_i32_0 : i32, i32
  }
  func.func @transform_7(%arg0: i32) -> (i32, i32) {
    %c0_i32 = arith.constant 0 : i32
    %c0_i32_0 = arith.constant 0 : i32
    %c0_i32_1 = arith.constant 0 : i32
    return %c0_i32, %c0_i32_0 : i32, i32
  }
  func.func @transform_8(%arg0: i32) -> (i32, i32, i32) {
    %c0_i32 = arith.constant 0 : i32
    %c0_i32_0 = arith.constant 0 : i32
    %c0_i32_1 = arith.constant 0 : i32
    return %arg0, %c0_i32, %c0_i32_0 : i32, i32, i32
  }
}

</mosaic_0001>

<llo_original>
// kernel: tile.7
$region0: #{tile.7}
  %s0 = inlined_call_operand.vmem [shape: f32[4,8], index: 0, kind: input, shape index: {}]
  %s1 = inlined_call_operand.vmem [shape: f32[32], index: 1, kind: output, shape index: {}]
  $region1: #{tile.7} parent=0
    #allocation0 [shape = 'u8[4096]{0}', space=vmem, size = 0x1000, scoped, tag = 'scoped mem for output reshape']
    #allocation1 [shape = 'u8[4096]{0}', space=vmem, size = 0x1000, scoped, tag = 'scoped mem for input reshape']
    %s3 = sshll.u32 1, 4
    %s4 = ssub.s32 %s3, 1
    %v5 = vld [vmem:[%s0] sm:%s4]
    %6 = vst [vmem:[#allocation1] sm:%s4] %v5
    %v7 = vld [vmem:[#allocation1] sm:$0x1]
    %vm8 = vcmask 64512
    %9 = vst.msk [vmem:[#allocation0] sm:$0x1] %vm8, %v7
    %s10 = scalar_lea.vmem [#allocation1], 3
    %v11 = vld [vmem:[%s10] sm:$0x1]
    %12 = vrot.lane.b32.xlu0 %v11, 24
    %v13 = vpop.permute.xlu0 %12
    %vm14 = vcmask 261312
    %15 = vst.msk [vmem:[#allocation0] sm:$0x1] %vm14, %v13
    %s16 = scalar_lea.vmem [#allocation1], 2
    %v17 = vld [vmem:[%s16] sm:$0x1]
    %18 = vrot.lane.b32.xlu0 %v17, 16
    %v19 = vpop.permute.xlu0 %18
    %vm20 = vcmask 195712
    %21 = vst.msk [vmem:[#allocation0] sm:$0x1] %vm20, %v19
    %s22 = scalar_lea.vmem [#allocation1], 1
    %v23 = vld [vmem:[%s22] sm:$0x1]
    %24 = vrot.lane.b32.xlu0 %v23, 8
    %v25 = vpop.permute.xlu0 %24
    %vm26 = vcmask 130112
    %27 = vst.msk [vmem:[#allocation0] sm:$0x1] %vm26, %v25
    %s29 = sshll.u32 1, 1
    %s30 = ssub.s32 %s29, 1
    %v32 = vld [vmem:[#allocation0] sm:%s30]
    %s33 = sshll.u32 1, 1
    %s34 = ssub.s32 %s33, 1
    %35 = vst [vmem:[%s1] sm:%s34] %v32

// kernel: tile.6
$region0: #{tile.6}
  #allocation0 [shape = 's32[1]{0}', space=sflag, size = 0x4, scoped, tag = 'scoped memory for tile.6']
  %s0 = inlined_call_operand.vmem [shape: f32[8], index: 0, kind: input, shape index: {}]
  %s1 = inlined_call_operand.vmem [shape: f32[4,8], index: 1, kind: output, shape index: {}]
  // Predicated region
  $region2: #{tile.6} parent=0 // pred_check
    _
  $region3: #{tile.6} parent=0 // pred_check_branch
    %3 = sbr.rel (0) target = $region5
  $region4: #{tile.6} parent=0 // pred_region
    _
  $region5: #{tile.6} parent=0 // pred_fallthru
    _
  %v4 = vld [vmem:[%s0] ss:$0 sm:$0xff]
  %5 = vst [vmem:[%s1] sm:$0xf] %v4

// kernel: _lambda_.1
$region0: #{_lambda_.1}
  #allocation0 [shape = 'u32[]', space=smem, size = 0x4, offset = 0x4, fixed_abs, tag = 'smem constant byte address 0x4 - core index']
  #allocation1 [shape = 'u32[144,128]{1,0:T(1,128)}', space=vmem, size = 0x12000, scoped, tag = 'internal scratch']
  #allocation2 [shape = 'f32[432,256]{1,0:T(8,128)}', space=vmem, size = 0x6c000, scoped, tag = 'scratch operand']
  %s0 = inlined_call_operand.vmem [shape: f32[2,8,256], index: 0, kind: input, shape index: {}]
  %s1 = inlined_call_operand.vmem [shape: f32[2,8,256], index: 1, kind: input, shape index: {}]
  %s2 = inlined_call_operand.vmem [shape: f32[2,8,1], index: 2, kind: input, shape index: {}]
  %s3 = inlined_call_operand.vmem [shape: f32[88,1], index: 3, kind: input, shape index: {}]
  %s4 = inlined_call_operand.vmem [shape: bf16[8,432], index: 4, kind: input, shape index: {}]
  %s5 = inlined_call_operand.vmem [shape: bf16[8,232], index: 5, kind: input, shape index: {}]
  %s6 = inlined_call_operand.vmem [shape: bf16[32,216], index: 6, kind: input, shape index: {}]
  %s7 = inlined_call_operand.vmem [shape: f32[27,256], index: 7, kind: input, shape index: {}]
  %s8 = inlined_call_operand.vmem [shape: f32[2,32,256], index: 8, kind: output, shape index: {}]
  %s9 = sld [smem:[#allocation0]]
  $region65: #{_lambda_.1} parent=0
    _
  %s11 = ssub.s32 1, %s9
  %s12 = scalar_select 0, %s11, %s9
  loop: start=0, step=1, limit=4
  $region2: #{_lambda_.1} parent=0 // loop_pre_header
    _
  $region3: #{_lambda_.1} parent=0 // loop_header
    %s14 = sphi 0, %s18
    %p15 = scmp.ge.s32.totalorder %s14, 4
    %s24 = sphi 0, %s26
    %s27 = sphi 0, %s24
    %s28 = sphi 0, %s27
    %s44 = sphi 0, %s28
    %s50 = sphi 0, %s52
    %s53 = sphi 0, %s50
    %s54 = sphi 0, %s53
    %s70 = sphi 0, %s54
    %s76 = sphi 0, %s78
    %s79 = sphi 0, %s76
    %s80 = sphi 0, %s79
    %s96 = sphi 0, %s80
    %s100 = sphi 0, %s100
    %s102 = sphi 0, %s100
    %s103 = sphi 0, %s102
    %s117 = sphi 0, %s103
    %s121 = sphi 0, %s121
    %s123 = sphi 0, %s121
    %s124 = sphi 0, %s123
    %s138 = sphi 0, %s124
    %s142 = sphi 0, %s142
    %s144 = sphi 0, %s142
    %s145 = sphi 0, %s144
    %s159 = sphi 0, %s145
    %s163 = sphi 0, %s163
    %s165 = sphi 0, %s163
    %s166 = sphi 0, %s165
    %s180 = sphi 0, %s166
    %s184 = sphi 0, %s184
    %s186 = sphi 0, %s184
    %s187 = sphi 0, %s186
    %s201 = sphi 0, %s187
    %s207 = sphi 0, %s209
    %s210 = sphi 0, %s207
    %s211 = sphi 0, %s210
    %s227 = sphi 0, %s211
  $region4: #{_lambda_.1} parent=0 // loop_header_branch
    %17 = sbr.rel (%p15) target = $region8
  $region5: #{_lambda_.1} parent=0 // loop_body
    %s19 = ssub.s32 %s14, 1
    %s20 = ssub.s32 %s14, 2
    %s21 = sadd.s32 %s14, 1
    %s22 = ssub.s32 %s14, %s21
    %p23 = scmp.eq.s32.totalorder %s22, 0
    %s25 = sadd.s32 %s24, 1
    %s26 = scalar_select %p23, %s24, %s25
    %p29 = pneg %p23
    %p30 = scmp.eq.s32.totalorder %s14, 1
    %p31 = por %p29, %p30
    %p32 = scmp.ne.s32.totalorder %s24, %s27
    %p33 = scmp.eq.s32.totalorder %s14, 0
    %p34 = por %p32, %p33
    %p35 = scmp.ne.s32.totalorder %s24, %s27
    %p36 = scmp.eq.s32.totalorder %s19, 1
    %p37 = por %p35, %p36
    %p38 = scmp.ne.s32.totalorder %s27, %s28
    %p39 = scmp.eq.s32.totalorder %s19, 0
    %p40 = por %p38, %p39
    %p41 = scmp.ne.s32.totalorder %s27, %s28
    %p42 = scmp.eq.s32.totalorder %s20, 1
    %p43 = por %p41, %p42
    %p45 = scmp.ne.s32.totalorder %s28, %s44
    %p46 = scmp.eq.s32.totalorder %s20, 0
    %p47 = por %p45, %p46
    %s48 = ssub.s32 %s14, %s21
    %p49 = scmp.eq.s32.totalorder %s48, 0
    %s51 = sadd.s32 %s50, 1
    %s52 = scalar_select %p49, %s50, %s51
    %p55 = pneg %p49
    %p56 = scmp.eq.s32.totalorder %s14, 1
    %p57 = por %p55, %p56
    %p58 = scmp.ne.s32.totalorder %s50, %s53
    %p59 = scmp.eq.s32.totalorder %s14, 0
    %p60 = por %p58, %p59
    %p61 = scmp.ne.s32.totalorder %s50, %s53
    %p62 = scmp.eq.s32.totalorder %s19, 1
    %p63 = por %p61, %p62
    %p64 = scmp.ne.s32.totalorder %s53, %s54
    %p65 = scmp.eq.s32.totalorder %s19, 0
    %p66 = por %p64, %p65
    %p67 = scmp.ne.s32.totalorder %s53, %s54
    %p68 = scmp.eq.s32.totalorder %s20, 1
    %p69 = por %p67, %p68
    %p71 = scmp.ne.s32.totalorder %s54, %s70
    %p72 = scmp.eq.s32.totalorder %s20, 0
    %p73 = por %p71, %p72
    %s74 = ssub.s32 %s14, %s21
    %p75 = scmp.eq.s32.totalorder %s74, 0
    %s77 = sadd.s32 %s76, 1
    %s78 = scalar_select %p75, %s76, %s77
    %p81 = pneg %p75
    %p82 = scmp.eq.s32.totalorder %s14, 1
    %p83 = por %p81, %p82
    %p84 = scmp.ne.s32.totalorder %s76, %s79
    %p85 = scmp.eq.s32.totalorder %s14, 0
    %p86 = por %p84, %p85
    %p87 = scmp.ne.s32.totalorder %s76, %s79
    %p88 = scmp.eq.s32.totalorder %s19, 1
    %p89 = por %p87, %p88
    %p90 = scmp.ne.s32.totalorder %s79, %s80
    %p91 = scmp.eq.s32.totalorder %s19, 0
    %p92 = por %p90, %p91
    %p93 = scmp.ne.s32.totalorder %s79, %s80
    %p94 = scmp.eq.s32.totalorder %s20, 1
    %p95 = por %p93, %p94
    %p97 = scmp.ne.s32.totalorder %s80, %s96
    %p98 = scmp.eq.s32.totalorder %s20, 0
    %p99 = por %p97, %p98
    %s101 = sadd.s32 %s100, 1
    %p104 = scmp.eq.s32.totalorder %s14, 1
    %p105 = scmp.ne.s32.totalorder %s100, %s102
    %p106 = scmp.eq.s32.totalorder %s14, 0
    %p107 = por %p105, %p106
    %p108 = scmp.ne.s32.totalorder %s100, %s102
    %p109 = scmp.eq.s32.totalorder %s19, 1
    %p110 = por %p108, %p109
    %p111 = scmp.ne.s32.totalorder %s102, %s103
    %p112 = scmp.eq.s32.totalorder %s19, 0
    %p113 = por %p111, %p112
    %p114 = scmp.ne.s32.totalorder %s102, %s103
    %p115 = scmp.eq.s32.totalorder %s20, 1
    %p116 = por %p114, %p115
    %p118 = scmp.ne.s32.totalorder %s103, %s117
    %p119 = scmp.eq.s32.totalorder %s20, 0
    %p120 = por %p118, %p119
    %s122 = sadd.s32 %s121, 1
    %p125 = scmp.eq.s32.totalorder %s14, 1
    %p126 = scmp.ne.s32.totalorder %s121, %s123
    %p127 = scmp.eq.s32.totalorder %s14, 0
    %p128 = por %p126, %p127
    %p129 = scmp.ne.s32.totalorder %s121, %s123
    %p130 = scmp.eq.s32.totalorder %s19, 1
    %p131 = por %p129, %p130
    %p132 = scmp.ne.s32.totalorder %s123, %s124
    %p133 = scmp.eq.s32.totalorder %s19, 0
    %p134 = por %p132, %p133
    %p135 = scmp.ne.s32.totalorder %s123, %s124
    %p136 = scmp.eq.s32.totalorder %s20, 1
    %p137 = por %p135, %p136
    %p139 = scmp.ne.s32.totalorder %s124, %s138
    %p140 = scmp.eq.s32.totalorder %s20, 0
    %p141 = por %p139, %p140
    %s143 = sadd.s32 %s142, 1
    %p146 = scmp.eq.s32.totalorder %s14, 1
    %p147 = scmp.ne.s32.totalorder %s142, %s144
    %p148 = scmp.eq.s32.totalorder %s14, 0
    %p149 = por %p147, %p148
    %p150 = scmp.ne.s32.totalorder %s142, %s144
    %p151 = scmp.eq.s32.totalorder %s19, 1
    %p152 = por %p150, %p151
    %p153 = scmp.ne.s32.totalorder %s144, %s145
    %p154 = scmp.eq.s32.totalorder %s19, 0
    %p155 = por %p153, %p154
    %p156 = scmp.ne.s32.totalorder %s144, %s145
    %p157 = scmp.eq.s32.totalorder %s20, 1
    %p158 = por %p156, %p157
    %p160 = scmp.ne.s32.totalorder %s145, %s159
    %p161 = scmp.eq.s32.totalorder %s20, 0
    %p162 = por %p160, %p161
    %s164 = sadd.s32 %s163, 1
    %p167 = scmp.eq.s32.totalorder %s14, 1
    %p168 = scmp.ne.s32.totalorder %s163, %s165
    %p169 = scmp.eq.s32.totalorder %s14, 0
    %p170 = por %p168, %p169
    %p171 = scmp.ne.s32.totalorder %s163, %s165
    %p172 = scmp.eq.s32.totalorder %s19, 1
    %p173 = por %p171, %p172
    %p174 = scmp.ne.s32.totalorder %s165, %s166
    %p175 = scmp.eq.s32.totalorder %s19, 0
    %p176 = por %p174, %p175
    %p177 = scmp.ne.s32.totalorder %s165, %s166
    %p178 = scmp.eq.s32.totalorder %s20, 1
    %p179 = por %p177, %p178
    %p181 = scmp.ne.s32.totalorder %s166, %s180
    %p182 = scmp.eq.s32.totalorder %s20, 0
    %p183 = por %p181, %p182
    %s185 = sadd.s32 %s184, 1
    %p188 = scmp.eq.s32.totalorder %s14, 1
    %p189 = scmp.ne.s32.totalorder %s184, %s186
    %p190 = scmp.eq.s32.totalorder %s14, 0
    %p191 = por %p189, %p190
    %p192 = scmp.ne.s32.totalorder %s184, %s186
    %p193 = scmp.eq.s32.totalorder %s19, 1
    %p194 = por %p192, %p193
    %p195 = scmp.ne.s32.totalorder %s186, %s187
    %p196 = scmp.eq.s32.totalorder %s19, 0
    %p197 = por %p195, %p196
    %p198 = scmp.ne.s32.totalorder %s186, %s187
    %p199 = scmp.eq.s32.totalorder %s20, 1
    %p200 = por %p198, %p199
    %p202 = scmp.ne.s32.totalorder %s187, %s201
    %p203 = scmp.eq.s32.totalorder %s20, 0
    %p204 = por %p202, %p203
    %s205 = ssub.s32 %s14, %s21
    %p206 = scmp.eq.s32.totalorder %s205, 0
    %s208 = sadd.s32 %s207, 1
    %s209 = scalar_select %p206, %s207, %s208
    %p212 = pneg %p206
    %p213 = scmp.eq.s32.totalorder %s14, 1
    %p214 = por %p212, %p213
    %p215 = scmp.ne.s32.totalorder %s207, %s210
    %p216 = scmp.eq.s32.totalorder %s14, 0
    %p217 = por %p215, %p216
    %p218 = scmp.ne.s32.totalorder %s207, %s210
    %p219 = scmp.eq.s32.totalorder %s19, 1
    %p220 = por %p218, %p219
    %p221 = scmp.ne.s32.totalorder %s210, %s211
    %p222 = scmp.eq.s32.totalorder %s19, 0
    %p223 = por %p221, %p222
    %p224 = scmp.ne.s32.totalorder %s210, %s211
    %p225 = scmp.eq.s32.totalorder %s20, 1
    %p226 = por %p224, %p225
    %p228 = scmp.ne.s32.totalorder %s211, %s227
    %p229 = scmp.eq.s32.totalorder %s20, 0
    %p230 = por %p228, %p229
    %p231 = scmp.le.s32.totalorder 1, %s14
    %p232 = scmp.lt.s32.totalorder %s14, 3
    %p233 = pnand %p231, %p232
    %p234 = pneg %p233
    // Predicated region
    $region9: #{_lambda_.1} parent=5 // pred_check
      _
    $region10: #{_lambda_.1} parent=5 // pred_check_branch
      %236 = sbr.rel (%p233) target = $region12
    $region11: #{_lambda_.1} parent=5 // pred_region
      %s237 = ssub.s32 %s14, 1
      // Predicated region
      $region13: #{_lambda_.1} parent=11 // pred_check
        %p238 = pneg %p113
      $region14: #{_lambda_.1} parent=11 // pred_check_branch
        %240 = sbr.rel (%p238) target = $region16
      $region15: #{_lambda_.1} parent=11 // pred_region
        _
      $region16: #{_lambda_.1} parent=11 // pred_fallthru
        _
      // Predicated region
      $region17: #{_lambda_.1} parent=11 // pred_check
        %p241 = pneg %p134
      $region18: #{_lambda_.1} parent=11 // pred_check_branch
        %243 = sbr.rel (%p241) target = $region20
      $region19: #{_lambda_.1} parent=11 // pred_region
        _
      $region20: #{_lambda_.1} parent=11 // pred_fallthru
        _
      // Predicated region
      $region21: #{_lambda_.1} parent=11 // pred_check
        %p244 = pneg %p155
      $region22: #{_lambda_.1} parent=11 // pred_check_branch
        %246 = sbr.rel (%p244) target = $region24
      $region23: #{_lambda_.1} parent=11 // pred_region
        _
      $region24: #{_lambda_.1} parent=11 // pred_fallthru
        _
      // Predicated region
      $region25: #{_lambda_.1} parent=11 // pred_check
        %p247 = pneg %p176
      $region26: #{_lambda_.1} parent=11 // pred_check_branch
        %249 = sbr.rel (%p247) target = $region28
      $region27: #{_lambda_.1} parent=11 // pred_region
        _
      $region28: #{_lambda_.1} parent=11 // pred_fallthru
        _
      // Predicated region
      $region29: #{_lambda_.1} parent=11 // pred_check
        %p250 = pneg %p197
      $region30: #{_lambda_.1} parent=11 // pred_check_branch
        %252 = sbr.rel (%p250) target = $region32
      $region31: #{_lambda_.1} parent=11 // pred_region
        _
      $region32: #{_lambda_.1} parent=11 // pred_fallthru
        _
    $region12: #{_lambda_.1} parent=5 // pred_fallthru
      _
    %p253 = scmp.lt.s32.totalorder %s14, 2
    // Predicated region
    $region33: #{_lambda_.1} parent=5 // pred_check
      %p254 = pneg %p253
    $region34: #{_lambda_.1} parent=5 // pred_check_branch
      %256 = sbr.rel (%p254) target = $region36
    $region35: #{_lambda_.1} parent=5 // pred_region
      // Predicated region
      $region37: #{_lambda_.1} parent=35 // pred_check
        %p257 = pneg %p34
      $region38: #{_lambda_.1} parent=35 // pred_check_branch
        %259 = sbr.rel (%p257) target = $region40
      $region39: #{_lambda_.1} parent=35 // pred_region
        %p260 = scmp.lt.s32.totalorder %s14, 1
        %s261 = scalar_select %p260, %s14, 1
        %s262 = smul.addr %s261, 2
        %s263 = smul.addr %s262, 8
        %s264 = scalar_lea.vmem %s0, %s263
      $region40: #{_lambda_.1} parent=35 // pred_fallthru
        _
      // Predicated region
      $region41: #{_lambda_.1} parent=35 // pred_check
        %p265 = pneg %p60
      $region42: #{_lambda_.1} parent=35 // pred_check_branch
        %267 = sbr.rel (%p265) target = $region44
      $region43: #{_lambda_.1} parent=35 // pred_region
        %p268 = scmp.lt.s32.totalorder %s14, 1
        %s269 = scalar_select %p268, %s14, 1
        %s270 = smul.addr %s269, 2
        %s271 = smul.addr %s270, 8
        %s272 = scalar_lea.vmem %s1, %s271
      $region44: #{_lambda_.1} parent=35 // pred_fallthru
        _
      // Predicated region
      $region45: #{_lambda_.1} parent=35 // pred_check
        %p273 = pneg %p86
      $region46: #{_lambda_.1} parent=35 // pred_check_branch
        %275 = sbr.rel (%p273) target = $region48
      $region47: #{_lambda_.1} parent=35 // pred_region
        %p276 = scmp.lt.s32.totalorder %s14, 1
        %s277 = scalar_select %p276, %s14, 1
        %s278 = smul.addr %s277, 8
        %s279 = scalar_lea.vmem %s2, %s278
      $region48: #{_lambda_.1} parent=35 // pred_fallthru
        _
    $region36: #{_lambda_.1} parent=5 // pred_fallthru
      _
    %p280 = scmp.le.s32.totalorder 1, %s14
    %p281 = scmp.lt.s32.totalorder %s14, 3
    %p282 = pnand %p280, %p281
    %p283 = pneg %p282
    // Predicated region
    $region49: #{_lambda_.1} parent=5 // pred_check
      _
    $region50: #{_lambda_.1} parent=5 // pred_check_branch
      %285 = sbr.rel (%p282) target = $region52
    $region51: #{_lambda_.1} parent=5 // pred_region
      %s286 = ssub.s32 %s14, 1
      %p287 = scmp.lt.s32.totalorder %s19, 1
      %s288 = scalar_select %p287, %s19, 1
      %s289 = smul.addr %s288, 2
      %s290 = smul.addr %s289, 8
      %s291 = scalar_lea.vmem %s0, %s290
      %p292 = pneg %p40
      %p293 = pneg %p37
      %p294 = scmp.lt.s32.totalorder %s19, 1
      %s295 = scalar_select %p294, %s19, 1
      %s296 = smul.addr %s295, 2
      %s297 = smul.addr %s296, 8
      %s298 = scalar_lea.vmem %s1, %s297
      %p299 = pneg %p66
      %p300 = pneg %p63
      %p301 = scmp.lt.s32.totalorder %s19, 1
      %s302 = scalar_select %p301, %s19, 1
      %s303 = smul.addr %s302, 8
      %s304 = scalar_lea.vmem %s2, %s303
      %p305 = pneg %p92
      %p306 = pneg %p89
      %p307 = pneg %p113
      %p308 = pneg %p110
      %p309 = pneg %p134
      %p310 = pneg %p131
      %p311 = pneg %p155
      %p312 = pneg %p152
      %p313 = pneg %p176
      %p314 = pneg %p173
      %p315 = pneg %p197
      %p316 = pneg %p194
      %p317 = pneg %p223
      %p318 = pneg %p220
      %p319 = scmp.lt.s32.totalorder %s19, 1
      %s320 = scalar_select %p319, %s19, 1
      %s321 = smul.addr %s320, 8
      %s322 = smul.addr %s321, 8
      %s323 = scalar_lea.vmem %s8, %s322
      %p324 = scmp.lt.s32.totalorder %s19, 1
      %s325 = scalar_select %p324, %s19, 1
      %s326 = smul.addr %s325, 2
      %s327 = smul.addr %s326, 8
      %s328 = scalar_lea.vmem %s0, %s327
      %p329 = scmp.lt.s32.totalorder %s19, 1
      %s330 = scalar_select %p329, %s19, 1
      %s331 = smul.addr %s330, 2
      %s332 = smul.addr %s331, 8
      %s333 = scalar_lea.vmem %s1, %s332
      %p334 = scmp.lt.s32.totalorder %s19, 1
      %s335 = scalar_select %p334, %s19, 1
      %s336 = smul.addr %s335, 8
      %s337 = scalar_lea.vmem %s2, %s336
      %p338 = scmp.lt.s32.totalorder %s19, 1
      %s339 = scalar_select %p338, %s19, 1
      %s340 = smul.addr %s339, 8
      %s341 = smul.addr %s340, 8
      %s342 = scalar_lea.vmem %s8, %s341
      %v344 = vld [vmem:[%s328] sm:$0xff]
      %v345 = vld [vmem:[%s328 + $0x8] sm:$0xff]
      %v346 = vld [vmem:[%s333] sm:$0xff]
      %v347 = vld [vmem:[%s333 + $0x8] sm:$0xff]
      %v348 = vld [vmem:[%s7] sm:$0xff]
      %v349 = vld [vmem:[%s7 + $0x8] sm:$0xff]
      %v350 = vld [vmem:[%s7 + $0x10] sm:$0xff]
      %v351 = vld [vmem:[%s7 + $0x18] sm:$0xff]
      %v352 = vld [vmem:[%s7 + $0x20] sm:$0xff]
      %v353 = vld [vmem:[%s7 + $0x28] sm:$0xff]
      %v354 = vld [vmem:[%s7 + $0x30] sm:$0x7]
      %v355 = vld [vmem:[%s7 + $0x38] sm:$0x7]
      %v356 = vld [vmem:[%s3] sm:$0xff]
      %v357 = vld [vmem:[%s3 + $0x8] sm:$0xff]
      %v358 = vld [vmem:[%s3 + $0x10] sm:$0xff]
      %v359 = vld [vmem:[%s3 + $0x18] sm:$0xff]
      %v360 = vld [vmem:[%s3 + $0x20] sm:$0xff]
      %v361 = vld [vmem:[%s3 + $0x28] sm:$0xff]
      %v362 = vld [vmem:[%s3 + $0x30] sm:$0xff]
      %v363 = vld [vmem:[%s3 + $0x38] sm:$0xff]
      %v364 = vld [vmem:[%s3 + $0x40] sm:$0xff]
      %v365 = vld [vmem:[%s3 + $0x48] sm:$0xff]
      %v366 = vld [vmem:[%s3 + $0x50] sm:$0xff]
      %v367 = vadd.f32 %v344, %v345
      %368 = vadd.xlane.f32.xlu0 %v367
      %v369 = vpop.xlane.xlu0 %368
      %v370 = vadd.f32 %v346, %v347
      %371 = vadd.xlane.f32.xlu0 %v370
      %v372 = vpop.xlane.xlu0 %371
      %vm373 = vcmask 3072
      %v374 = vsel %vm373, %v369, 0.0
      %375 = vadd.xlane.f32.xlu0 %v374
      %v376 = vpop.xlane.xlu0 %375
      %v377 = vrot.slane %v376, 4
      %v378 = vadd.f32 %v376, %v377
      %v379 = vrot.slane %v378, 2
      %v380 = vadd.f32 %v378, %v379
      %v381 = vrot.slane %v380, 1
      %v382 = vadd.f32 %v380, %v381
      %s383 = vtos %v382
      %v384 = vrcp.pop 1024.0
      %s385 = vtos %v384
      %s386 = smul.f32 %s383, %s385
      %v387 = vstv %s386
      %v389 = vrot.slane %v369, 4
      %v391 = vsel %vm373, %v389, 0.0
      %392 = vadd.xlane.f32.xlu0 %v391
      %v393 = vpop.xlane.xlu0 %392
      %v394 = vrot.slane %v393, 4
      %v395 = vadd.f32 %v393, %v394
      %v396 = vrot.slane %v395, 2
      %v397 = vadd.f32 %v395, %v396
      %v398 = vrot.slane %v397, 1
      %v399 = vadd.f32 %v397, %v398
      %s400 = vtos %v399
      %v401 = vrcp.pop 1024.0
      %s402 = vtos %v401
      %s403 = smul.f32 %s400, %s402
      %v404 = vstv %s403
      %v405 = vsel %vm373, %v372, 0.0
      %406 = vadd.xlane.f32.xlu0 %v405
      %v407 = vpop.xlane.xlu0 %406
      %v408 = vrot.slane %v407, 4
      %v409 = vadd.f32 %v407, %v408
      %v410 = vrot.slane %v409, 2
      %v411 = vadd.f32 %v409, %v410
      %v412 = vrot.slane %v411, 1
      %v413 = vadd.f32 %v411, %v412
      %s414 = vtos %v413
      %v415 = vrcp.pop 1024.0
      %s416 = vtos %v415
      %s417 = smul.f32 %s414, %s416
      %v418 = vstv %s417
      %v420 = vrot.slane %v372, 4
      %v422 = vsel %vm373, %v420, 0.0
      %423 = vadd.xlane.f32.xlu0 %v422
      %v424 = vpop.xlane.xlu0 %423
      %v425 = vrot.slane %v424, 4
      %v426 = vadd.f32 %v424, %v425
      %v427 = vrot.slane %v426, 2
      %v428 = vadd.f32 %v426, %v427
      %v429 = vrot.slane %v428, 1
      %v430 = vadd.f32 %v428, %v429
      %s431 = vtos %v430
      %v432 = vrcp.pop 1024.0
      %s433 = vtos %v432
      %s434 = smul.f32 %s431, %s433
      %v435 = vstv %s434
      %vm436 = vcmask 1043456
      %v437 = vsel %vm436, %v387, %v404
      %v438 = vsel %vm436, %v418, %v435
      %440 = vset.pattern.permute.xlu0 0
      %441 = vperm.xlu0 %440, %v437
      %v442 = vpop.permute.xlu0 %441
      %445 = vset.pattern.permute.xlu0 0
      %446 = vperm.xlu0 %445, %v438
      %v447 = vpop.permute.xlu0 %446
      %v449 = vsub.f32 %v344, %v442
      %v450 = vsub.f32 %v345, %v442
      %v451 = vsub.f32 %v346, %v447
      %v452 = vsub.f32 %v347, %v447
      %v453 = vmul.f32 %v449, %v449
      %v454 = vmul.f32 %v450, %v450
      %v455 = vmul.f32 %v451, %v451
      %v456 = vmul.f32 %v452, %v452
      %v457 = vadd.f32 %v453, %v454
      %458 = vadd.xlane.f32.xlu0 %v457
      %v459 = vpop.xlane.xlu0 %458
      %v460 = vadd.f32 %v455, %v456
      %461 = vadd.xlane.f32.xlu0 %v460
      %v462 = vpop.xlane.xlu0 %461
      %v463 = vsel %vm373, %v459, 0.0
      %464 = vadd.xlane.f32.xlu0 %v463
      %v465 = vpop.xlane.xlu0 %464
      %v466 = vrot.slane %v465, 4
      %v467 = vadd.f32 %v465, %v466
      %v468 = vrot.slane %v467, 2
      %v469 = vadd.f32 %v467, %v468
      %v470 = vrot.slane %v469, 1
      %v471 = vadd.f32 %v469, %v470
      %s472 = vtos %v471
      %v473 = vrcp.pop 1024.0
      %s474 = vtos %v473
      %s475 = smul.f32 %s472, %s474
      %s476 = sadd.f32 %s475, 1e-06
      %v477 = vstv %s476
      %v478 = vrsqrt.pop %v477
      %s479 = vtos %v478
      %v480 = vstv %s479
      %v482 = vrot.slane %v459, 4
      %v484 = vsel %vm373, %v482, 0.0
      %485 = vadd.xlane.f32.xlu0 %v484
      %v486 = vpop.xlane.xlu0 %485
      %v487 = vrot.slane %v486, 4
      %v488 = vadd.f32 %v486, %v487
      %v489 = vrot.slane %v488, 2
      %v490 = vadd.f32 %v488, %v489
      %v491 = vrot.slane %v490, 1
      %v492 = vadd.f32 %v490, %v491
      %s493 = vtos %v492
      %v494 = vrcp.pop 1024.0
      %s495 = vtos %v494
      %s496 = smul.f32 %s493, %s495
      %s497 = sadd.f32 %s496, 1e-06
      %v498 = vstv %s497
      %v499 = vrsqrt.pop %v498
      %s500 = vtos %v499
      %v501 = vstv %s500
      %v502 = vsel %vm373, %v462, 0.0
      %503 = vadd.xlane.f32.xlu0 %v502
      %v504 = vpop.xlane.xlu0 %503
      %v505 = vrot.slane %v504, 4
      %v506 = vadd.f32 %v504, %v505
      %v507 = vrot.slane %v506, 2
      %v508 = vadd.f32 %v506, %v507
      %v509 = vrot.slane %v508, 1
      %v510 = vadd.f32 %v508, %v509
      %s511 = vtos %v510
      %v512 = vrcp.pop 1024.0
      %s513 = vtos %v512
      %s514 = smul.f32 %s511, %s513
      %s515 = sadd.f32 %s514, 1e-06
      %v516 = vstv %s515
      %v517 = vrsqrt.pop %v516
      %s518 = vtos %v517
      %v519 = vstv %s518
      %v521 = vrot.slane %v462, 4
      %v523 = vsel %vm373, %v521, 0.0
      %524 = vadd.xlane.f32.xlu0 %v523
      %v525 = vpop.xlane.xlu0 %524
      %v526 = vrot.slane %v525, 4
      %v527 = vadd.f32 %v525, %v526
      %v528 = vrot.slane %v527, 2
      %v529 = vadd.f32 %v527, %v528
      %v530 = vrot.slane %v529, 1
      %v531 = vadd.f32 %v529, %v530
      %s532 = vtos %v531
      %v533 = vrcp.pop 1024.0
      %s534 = vtos %v533
      %s535 = smul.f32 %s532, %s534
      %s536 = sadd.f32 %s535, 1e-06
      %v537 = vstv %s536
      %v538 = vrsqrt.pop %v537
      %s539 = vtos %v538
      %v540 = vstv %s539
      %v541 = vsel %vm436, %v480, %v501
      %v542 = vsel %vm436, %v519, %v540
      %v543 = vmul.f32 %v541, %v356
      %v544 = vmul.f32 %v542, %v357
      %546 = vset.pattern.permute.xlu0 0
      %547 = vperm.xlu0 %546, %v543
      %v548 = vpop.permute.xlu0 %547
      %551 = vset.pattern.permute.xlu0 0
      %552 = vperm.xlu0 %551, %v544
      %v553 = vpop.permute.xlu0 %552
      %v555 = vmul.f32 %v449, %v548
      %v556 = vmul.f32 %v450, %v548
      %v557 = vmul.f32 %v451, %v553
      %v558 = vmul.f32 %v452, %v553
      %560 = vset.pattern.permute.xlu0 0
      %561 = vperm.xlu0 %560, %v358
      %v562 = vpop.permute.xlu0 %561
      %565 = vset.pattern.permute.xlu0 0
      %566 = vperm.xlu0 %565, %v359
      %v567 = vpop.permute.xlu0 %566
      %v569 = vadd.f32 %v555, %v562
      %v570 = vadd.f32 %v556, %v562
      %v571 = vadd.f32 %v557, %v567
      %v572 = vadd.f32 %v558, %v567
      %v573 = vxor.u32 %v569, 2147483648
      %v574 = vxor.u32 %v570, 2147483648
      %v575 = vxor.u32 %v571, 2147483648
      %v576 = vxor.u32 %v572, 2147483648
      %v577 = vmul.f32 %v573, 1.442695
      %v578 = vpow.pop %v577
      %v579 = vmul.f32 %v574, 1.442695
      %v580 = vpow.pop %v579
      %v581 = vmul.f32 %v575, 1.442695
      %v582 = vpow.pop %v581
      %v583 = vmul.f32 %v576, 1.442695
      %v584 = vpow.pop %v583
      %v585 = vadd.f32 %v578, 1.0
      %v586 = vadd.f32 %v580, 1.0
      %v587 = vadd.f32 %v582, 1.0
      %v588 = vadd.f32 %v584, 1.0
      %v589 = vrcp.pop %v585
      %v590 = vmul.f32 1.0, %v589
      %v591 = vrcp.pop %v586
      %v592 = vmul.f32 1.0, %v591
      %v593 = vrcp.pop %v587
      %v594 = vmul.f32 1.0, %v593
      %v595 = vrcp.pop %v588
      %v596 = vmul.f32 1.0, %v595
      %v597 = vmul.f32 %v569, %v590
      %v598 = vmul.f32 %v570, %v592
      %v599 = vmul.f32 %v571, %v594
      %v600 = vmul.f32 %v572, %v596
      %601 = vrot.lane.b32.xlu0 %v597, 73
      %v602 = vpop.permute.xlu0 %601
      %603 = vrot.lane.b32.xlu0 %v599, 73
      %v604 = vpop.permute.xlu0 %603
      %605 = vrot.lane.b32.xlu0 %v598, 73
      %v606 = vpop.permute.xlu0 %605
      %607 = vrot.lane.b32.xlu0 %v600, 73
      %v608 = vpop.permute.xlu0 %607
      %v609 = vlaneseq
      %v610 = vand.u32 %v609, 127
      %vm611 = vcmp.lt.s32.totalorder %v610, 73
      %v612 = vsel %vm611, %v602, %v606
      %v613 = vsel %vm611, %v604, %v608
      %v614 = vsel %vm611, %v606, %v602
      %v615 = vsel %vm611, %v608, %v604
      %v616 = vlaneseq
      %v617 = vshrl.u32 %v616, 7
      %v618 = vsub.s32 0, %v617
      %v619 = vrot.slane %v348, %v618
      %v620 = vlaneseq
      %v621 = vshrl.u32 %v620, 7
      %v622 = vsub.s32 0, %v621
      %v623 = vrot.slane %v349, %v622
      %v624 = vmul.f32 %v614, %v619
      %v625 = vmul.f32 %v612, %v623
      %v626 = vmul.f32 %v615, %v619
      %v627 = vmul.f32 %v613, %v623
      %628 = vst [vmem:[#allocation2] sm:$0xff] %v624
      %629 = vst [vmem:[#allocation2 + $0x8] sm:$0xff] %v625
      %630 = vst [vmem:[#allocation2 + $0x10] sm:$0xff] %v626
      %631 = vst [vmem:[#allocation2 + $0x18] sm:$0xff] %v627
      %632 = vrot.lane.b32.xlu0 %v597, 72
      %v633 = vpop.permute.xlu0 %632
      %634 = vrot.lane.b32.xlu0 %v599, 72
      %v635 = vpop.permute.xlu0 %634
      %636 = vrot.lane.b32.xlu0 %v598, 72
      %v637 = vpop.permute.xlu0 %636
      %638 = vrot.lane.b32.xlu0 %v600, 72
      %v639 = vpop.permute.xlu0 %638
      %vm640 = vcmp.lt.s32.totalorder %v610, 72
      %v641 = vsel %vm640, %v633, %v637
      %v642 = vsel %vm640, %v635, %v639
      %v643 = vsel %vm640, %v637, %v633
      %v644 = vsel %vm640, %v639, %v635
      %v645 = vlaneseq
      %v646 = vshrl.u32 %v645, 7
      %v647 = vsub.s32 1, %v646
      %v648 = vrot.slane %v348, %v647
      %v649 = vlaneseq
      %v650 = vshrl.u32 %v649, 7
      %v651 = vsub.s32 1, %v650
      %v652 = vrot.slane %v349, %v651
      %v653 = vmul.f32 %v643, %v648
      %v654 = vmul.f32 %v641, %v652
      %v655 = vmul.f32 %v644, %v648
      %v656 = vmul.f32 %v642, %v652
      %657 = vst [vmem:[#allocation2 + $0x20] sm:$0xff] %v653
      %658 = vst [vmem:[#allocation2 + $0x28] sm:$0xff] %v654
      %659 = vst [vmem:[#allocation2 + $0x30] sm:$0xff] %v655
      %660 = vst [vmem:[#allocation2 + $0x38] sm:$0xff] %v656
      %661 = vrot.lane.b32.xlu0 %v597, 71
      %v662 = vpop.permute.xlu0 %661
      %663 = vrot.lane.b32.xlu0 %v599, 71
      %v664 = vpop.permute.xlu0 %663
      %665 = vrot.lane.b32.xlu0 %v598, 71
      %v666 = vpop.permute.xlu0 %665
      %667 = vrot.lane.b32.xlu0 %v600, 71
      %v668 = vpop.permute.xlu0 %667
      %vm669 = vcmp.lt.s32.totalorder %v610, 71
      %v670 = vsel %vm669, %v662, %v666
      %v671 = vsel %vm669, %v664, %v668
      %v672 = vsel %vm669, %v666, %v662
      %v673 = vsel %vm669, %v668, %v664
      %v674 = vlaneseq
      %v675 = vshrl.u32 %v674, 7
      %v676 = vsub.s32 2, %v675
      %v677 = vrot.slane %v348, %v676
      %v678 = vlaneseq
      %v679 = vshrl.u32 %v678, 7
      %v680 = vsub.s32 2, %v679
      %v681 = vrot.slane %v349, %v680
      %v682 = vmul.f32 %v672, %v677
      %v683 = vmul.f32 %v670, %v681
      %v684 = vmul.f32 %v673, %v677
      %v685 = vmul.f32 %v671, %v681
      %686 = vst [vmem:[#allocation2 + $0x40] sm:$0xff] %v682
      %687 = vst [vmem:[#allocation2 + $0x48] sm:$0xff] %v683
      %688 = vst [vmem:[#allocation2 + $0x50] sm:$0xff] %v684
      %689 = vst [vmem:[#allocation2 + $0x58] sm:$0xff] %v685
      %690 = vrot.lane.b32.xlu0 %v597, 65
      %v691 = vpop.permute.xlu0 %690
      %692 = vrot.lane.b32.xlu0 %v599, 65
      %v693 = vpop.permute.xlu0 %692
      %694 = vrot.lane.b32.xlu0 %v598, 65
      %v695 = vpop.permute.xlu0 %694
      %696 = vrot.lane.b32.xlu0 %v600, 65
      %v697 = vpop.permute.xlu0 %696
      %vm698 = vcmp.lt.s32.totalorder %v610, 65
      %v699 = vsel %vm698, %v691, %v695
      %v700 = vsel %vm698, %v693, %v697
      %v701 = vsel %vm698, %v695, %v691
      %v702 = vsel %vm698, %v697, %v693
      %v703 = vlaneseq
      %v704 = vshrl.u32 %v703, 7
      %v705 = vsub.s32 3, %v704
      %v706 = vrot.slane %v348, %v705
      %v707 = vlaneseq
      %v708 = vshrl.u32 %v707, 7
      %v709 = vsub.s32 3, %v708
      %v710 = vrot.slane %v349, %v709
      %v711 = vmul.f32 %v701, %v706
      %v712 = vmul.f32 %v699, %v710
      %v713 = vmul.f32 %v702, %v706
      %v714 = vmul.f32 %v700, %v710
      %715 = vst [vmem:[#allocation2 + $0x60] sm:$0xff] %v711
      %716 = vst [vmem:[#allocation2 + $0x68] sm:$0xff] %v712
      %717 = vst [vmem:[#allocation2 + $0x70] sm:$0xff] %v713
      %718 = vst [vmem:[#allocation2 + $0x78] sm:$0xff] %v714
      %719 = vrot.lane.b32.xlu0 %v597, 64
      %v720 = vpop.permute.xlu0 %719
      %721 = vrot.lane.b32.xlu0 %v599, 64
      %v722 = vpop.permute.xlu0 %721
      %723 = vrot.lane.b32.xlu0 %v598, 64
      %v724 = vpop.permute.xlu0 %723
      %725 = vrot.lane.b32.xlu0 %v600, 64
      %v726 = vpop.permute.xlu0 %725
      %vm727 = vcmp.lt.s32.totalorder %v610, 64
      %v728 = vsel %vm727, %v720, %v724
      %v729 = vsel %vm727, %v722, %v726
      %v730 = vsel %vm727, %v724, %v720
      %v731 = vsel %vm727, %v726, %v722
      %v732 = vlaneseq
      %v733 = vshrl.u32 %v732, 7
      %v734 = vsub.s32 4, %v733
      %v735 = vrot.slane %v348, %v734
      %v736 = vlaneseq
      %v737 = vshrl.u32 %v736, 7
      %v738 = vsub.s32 4, %v737
      %v739 = vrot.slane %v349, %v738
      %v740 = vmul.f32 %v730, %v735
      %v741 = vmul.f32 %v728, %v739
      %v742 = vmul.f32 %v731, %v735
      %v743 = vmul.f32 %v729, %v739
      %744 = vst [vmem:[#allocation2 + $0x80] sm:$0xff] %v740
      %745 = vst [vmem:[#allocation2 + $0x88] sm:$0xff] %v741
      %746 = vst [vmem:[#allocation2 + $0x90] sm:$0xff] %v742
      %747 = vst [vmem:[#allocation2 + $0x98] sm:$0xff] %v743
      %748 = vrot.lane.b32.xlu0 %v597, 63
      %v749 = vpop.permute.xlu0 %748
      %750 = vrot.lane.b32.xlu0 %v599, 63
      %v751 = vpop.permute.xlu0 %750
      %752 = vrot.lane.b32.xlu0 %v598, 63
      %v753 = vpop.permute.xlu0 %752
      %754 = vrot.lane.b32.xlu0 %v600, 63
      %v755 = vpop.permute.xlu0 %754
      %vm756 = vcmp.lt.s32.totalorder %v610, 63
      %v757 = vsel %vm756, %v749, %v753
      %v758 = vsel %vm756, %v751, %v755
      %v759 = vsel %vm756, %v753, %v749
      %v760 = vsel %vm756, %v755, %v751
      %v761 = vlaneseq
      %v762 = vshrl.u32 %v761, 7
      %v763 = vsub.s32 5, %v762
      %v764 = vrot.slane %v348, %v763
      %v765 = vlaneseq
      %v766 = vshrl.u32 %v765, 7
      %v767 = vsub.s32 5, %v766
      %v768 = vrot.slane %v349, %v767
      %v769 = vmul.f32 %v759, %v764
      %v770 = vmul.f32 %v757, %v768
      %v771 = vmul.f32 %v760, %v764
      %v772 = vmul.f32 %v758, %v768
      %773 = vst [vmem:[#allocation2 + $0xa0] sm:$0xff] %v769
      %774 = vst [vmem:[#allocation2 + $0xa8] sm:$0xff] %v770
      %775 = vst [vmem:[#allocation2 + $0xb0] sm:$0xff] %v771
      %776 = vst [vmem:[#allocation2 + $0xb8] sm:$0xff] %v772
      %777 = vrot.lane.b32.xlu0 %v597, 57
      %v778 = vpop.permute.xlu0 %777
      %779 = vrot.lane.b32.xlu0 %v599, 57
      %v780 = vpop.permute.xlu0 %779
      %781 = vrot.lane.b32.xlu0 %v598, 57
      %v782 = vpop.permute.xlu0 %781
      %783 = vrot.lane.b32.xlu0 %v600, 57
      %v784 = vpop.permute.xlu0 %783
      %vm785 = vcmp.lt.s32.totalorder %v610, 57
      %v786 = vsel %vm785, %v778, %v782
      %v787 = vsel %vm785, %v780, %v784
      %v788 = vsel %vm785, %v782, %v778
      %v789 = vsel %vm785, %v784, %v780
      %v790 = vlaneseq
      %v791 = vshrl.u32 %v790, 7
      %v792 = vsub.s32 6, %v791
      %v793 = vrot.slane %v348, %v792
      %v794 = vlaneseq
      %v795 = vshrl.u32 %v794, 7
      %v796 = vsub.s32 6, %v795
      %v797 = vrot.slane %v349, %v796
      %v798 = vmul.f32 %v788, %v793
      %v799 = vmul.f32 %v786, %v797
      %v800 = vmul.f32 %v789, %v793
      %v801 = vmul.f32 %v787, %v797
      %802 = vst [vmem:[#allocation2 + $0xc0] sm:$0xff] %v798
      %803 = vst [vmem:[#allocation2 + $0xc8] sm:$0xff] %v799
      %804 = vst [vmem:[#allocation2 + $0xd0] sm:$0xff] %v800
      %805 = vst [vmem:[#allocation2 + $0xd8] sm:$0xff] %v801
      %806 = vrot.lane.b32.xlu0 %v597, 56
      %v807 = vpop.permute.xlu0 %806
      %808 = vrot.lane.b32.xlu0 %v599, 56
      %v809 = vpop.permute.xlu0 %808
      %810 = vrot.lane.b32.xlu0 %v598, 56
      %v811 = vpop.permute.xlu0 %810
      %812 = vrot.lane.b32.xlu0 %v600, 56
      %v813 = vpop.permute.xlu0 %812
      %vm814 = vcmp.lt.s32.totalorder %v610, 56
      %v815 = vsel %vm814, %v807, %v811
      %v816 = vsel %vm814, %v809, %v813
      %v817 = vsel %vm814, %v811, %v807
      %v818 = vsel %vm814, %v813, %v809
      %v819 = vlaneseq
      %v820 = vshrl.u32 %v819, 7
      %v821 = vsub.s32 7, %v820
      %v822 = vrot.slane %v348, %v821
      %v823 = vlaneseq
      %v824 = vshrl.u32 %v823, 7
      %v825 = vsub.s32 7, %v824
      %v826 = vrot.slane %v349, %v825
      %v827 = vmul.f32 %v817, %v822
      %v828 = vmul.f32 %v815, %v826
      %v829 = vmul.f32 %v818, %v822
      %v830 = vmul.f32 %v816, %v826
      %831 = vst [vmem:[#allocation2 + $0xe0] sm:$0xff] %v827
      %832 = vst [vmem:[#allocation2 + $0xe8] sm:$0xff] %v828
      %833 = vst [vmem:[#allocation2 + $0xf0] sm:$0xff] %v829
      %834 = vst [vmem:[#allocation2 + $0xf8] sm:$0xff] %v830
      %835 = vrot.lane.b32.xlu0 %v597, 55
      %v836 = vpop.permute.xlu0 %835
      %837 = vrot.lane.b32.xlu0 %v599, 55
      %v838 = vpop.permute.xlu0 %837
      %839 = vrot.lane.b32.xlu0 %v598, 55
      %v840 = vpop.permute.xlu0 %839
      %841 = vrot.lane.b32.xlu0 %v600, 55
      %v842 = vpop.permute.xlu0 %841
      %vm843 = vcmp.lt.s32.totalorder %v610, 55
      %v844 = vsel %vm843, %v836, %v840
      %v845 = vsel %vm843, %v838, %v842
      %v846 = vsel %vm843, %v840, %v836
      %v847 = vsel %vm843, %v842, %v838
      %v848 = vlaneseq
      %v849 = vshrl.u32 %v848, 7
      %v850 = vsub.s32 0, %v849
      %v851 = vrot.slane %v350, %v850
      %v852 = vlaneseq
      %v853 = vshrl.u32 %v852, 7
      %v854 = vsub.s32 0, %v853
      %v855 = vrot.slane %v351, %v854
      %v856 = vmul.f32 %v846, %v851
      %v857 = vmul.f32 %v844, %v855
      %v858 = vmul.f32 %v847, %v851
      %v859 = vmul.f32 %v845, %v855
      %860 = vst [vmem:[#allocation2 + $0x100] sm:$0xff] %v856
      %861 = vst [vmem:[#allocation2 + $0x108] sm:$0xff] %v857
      %862 = vst [vmem:[#allocation2 + $0x110] sm:$0xff] %v858
      %863 = vst [vmem:[#allocation2 + $0x118] sm:$0xff] %v859
      %864 = vrot.lane.b32.xlu0 %v597, 9
      %v865 = vpop.permute.xlu0 %864
      %866 = vrot.lane.b32.xlu0 %v599, 9
      %v867 = vpop.permute.xlu0 %866
      %868 = vrot.lane.b32.xlu0 %v598, 9
      %v869 = vpop.permute.xlu0 %868
      %870 = vrot.lane.b32.xlu0 %v600, 9
      %v871 = vpop.permute.xlu0 %870
      %vm872 = vcmp.lt.s32.totalorder %v610, 9
      %v873 = vsel %vm872, %v865, %v869
      %v874 = vsel %vm872, %v867, %v871
      %v875 = vsel %vm872, %v869, %v865
      %v876 = vsel %vm872, %v871, %v867
      %v877 = vlaneseq
      %v878 = vshrl.u32 %v877, 7
      %v879 = vsub.s32 1, %v878
      %v880 = vrot.slane %v350, %v879
      %v881 = vlaneseq
      %v882 = vshrl.u32 %v881, 7
      %v883 = vsub.s32 1, %v882
      %v884 = vrot.slane %v351, %v883
      %v885 = vmul.f32 %v875, %v880
      %v886 = vmul.f32 %v873, %v884
      %v887 = vmul.f32 %v876, %v880
      %v888 = vmul.f32 %v874, %v884
      %889 = vst [vmem:[#allocation2 + $0x120] sm:$0xff] %v885
      %890 = vst [vmem:[#allocation2 + $0x128] sm:$0xff] %v886
      %891 = vst [vmem:[#allocation2 + $0x130] sm:$0xff] %v887
      %892 = vst [vmem:[#allocation2 + $0x138] sm:$0xff] %v888
      %893 = vrot.lane.b32.xlu0 %v597, 8
      %v894 = vpop.permute.xlu0 %893
      %895 = vrot.lane.b32.xlu0 %v599, 8
      %v896 = vpop.permute.xlu0 %895
      %897 = vrot.lane.b32.xlu0 %v598, 8
      %v898 = vpop.permute.xlu0 %897
      %899 = vrot.lane.b32.xlu0 %v600, 8
      %v900 = vpop.permute.xlu0 %899
      %vm901 = vcmp.lt.s32.totalorder %v610, 8
      %v902 = vsel %vm901, %v894, %v898
      %v903 = vsel %vm901, %v896, %v900
      %v904 = vsel %vm901, %v898, %v894
      %v905 = vsel %vm901, %v900, %v896
      %v906 = vlaneseq
      %v907 = vshrl.u32 %v906, 7
      %v908 = vsub.s32 2, %v907
      %v909 = vrot.slane %v350, %v908
      %v910 = vlaneseq
      %v911 = vshrl.u32 %v910, 7
      %v912 = vsub.s32 2, %v911
      %v913 = vrot.slane %v351, %v912
      %v914 = vmul.f32 %v904, %v909
      %v915 = vmul.f32 %v902, %v913
      %v916 = vmul.f32 %v905, %v909
      %v917 = vmul.f32 %v903, %v913
      %918 = vst [vmem:[#allocation2 + $0x140] sm:$0xff] %v914
      %919 = vst [vmem:[#allocation2 + $0x148] sm:$0xff] %v915
      %920 = vst [vmem:[#allocation2 + $0x150] sm:$0xff] %v916
      %921 = vst [vmem:[#allocation2 + $0x158] sm:$0xff] %v917
      %922 = vrot.lane.b32.xlu0 %v597, 7
      %v923 = vpop.permute.xlu0 %922
      %924 = vrot.lane.b32.xlu0 %v599, 7
      %v925 = vpop.permute.xlu0 %924
      %926 = vrot.lane.b32.xlu0 %v598, 7
      %v927 = vpop.permute.xlu0 %926
      %928 = vrot.lane.b32.xlu0 %v600, 7
      %v929 = vpop.permute.xlu0 %928
      %vm930 = vcmp.lt.s32.totalorder %v610, 7
      %v931 = vsel %vm930, %v923, %v927
      %v932 = vsel %vm930, %v925, %v929
      %v933 = vsel %vm930, %v927, %v923
      %v934 = vsel %vm930, %v929, %v925
      %v935 = vlaneseq
      %v936 = vshrl.u32 %v935, 7
      %v937 = vsub.s32 3, %v936
      %v938 = vrot.slane %v350, %v937
      %v939 = vlaneseq
      %v940 = vshrl.u32 %v939, 7
      %v941 = vsub.s32 3, %v940
      %v942 = vrot.slane %v351, %v941
      %v943 = vmul.f32 %v933, %v938
      %v944 = vmul.f32 %v931, %v942
      %v945 = vmul.f32 %v934, %v938
      %v946 = vmul.f32 %v932, %v942
      %947 = vst [vmem:[#allocation2 + $0x160] sm:$0xff] %v943
      %948 = vst [vmem:[#allocation2 + $0x168] sm:$0xff] %v944
      %949 = vst [vmem:[#allocation2 + $0x170] sm:$0xff] %v945
      %950 = vst [vmem:[#allocation2 + $0x178] sm:$0xff] %v946
      %951 = vrot.lane.b32.xlu0 %v597, 1
      %v952 = vpop.permute.xlu0 %951
      %953 = vrot.lane.b32.xlu0 %v599, 1
      %v954 = vpop.permute.xlu0 %953
      %955 = vrot.lane.b32.xlu0 %v598, 1
      %v956 = vpop.permute.xlu0 %955
      %957 = vrot.lane.b32.xlu0 %v600, 1
      %v958 = vpop.permute.xlu0 %957
      %vm959 = vcmp.lt.s32.totalorder %v610, 1
      %v960 = vsel %vm959, %v952, %v956
      %v961 = vsel %vm959, %v954, %v958
      %v962 = vsel %vm959, %v956, %v952
      %v963 = vsel %vm959, %v958, %v954
      %v964 = vlaneseq
      %v965 = vshrl.u32 %v964, 7
      %v966 = vsub.s32 4, %v965
      %v967 = vrot.slane %v350, %v966
      %v968 = vlaneseq
      %v969 = vshrl.u32 %v968, 7
      %v970 = vsub.s32 4, %v969
      %v971 = vrot.slane %v351, %v970
      %v972 = vmul.f32 %v962, %v967
      %v973 = vmul.f32 %v960, %v971
      %v974 = vmul.f32 %v963, %v967
      %v975 = vmul.f32 %v961, %v971
      %976 = vst [vmem:[#allocation2 + $0x180] sm:$0xff] %v972
      %977 = vst [vmem:[#allocation2 + $0x188] sm:$0xff] %v973
      %978 = vst [vmem:[#allocation2 + $0x190] sm:$0xff] %v974
      %979 = vst [vmem:[#allocation2 + $0x198] sm:$0xff] %v975
      %980 = vst [vmem:[#allocation2 + $0x1a0] sm:$0xff] %v597
      %981 = vst [vmem:[#allocation2 + $0x1a8] sm:$0xff] %v598
      %982 = vst [vmem:[#allocation2 + $0x1b0] sm:$0xff] %v599
      %983 = vst [vmem:[#allocation2 + $0x1b8] sm:$0xff] %v600
      %984 = vrot.lane.b32.xlu0 %v597, 127
      %v985 = vpop.permute.xlu0 %984
      %986 = vrot.lane.b32.xlu0 %v599, 127
      %v987 = vpop.permute.xlu0 %986
      %988 = vrot.lane.b32.xlu0 %v598, 127
      %v989 = vpop.permute.xlu0 %988
      %990 = vrot.lane.b32.xlu0 %v600, 127
      %v991 = vpop.permute.xlu0 %990
      %vm992 = vcmp.lt.s32.totalorder %v610, 127
      %v993 = vsel %vm992, %v985, %v989
      %v994 = vsel %vm992, %v987, %v991
      %v995 = vsel %vm992, %v989, %v985
      %v996 = vsel %vm992, %v991, %v987
      %v997 = vlaneseq
      %v998 = vshrl.u32 %v997, 7
      %v999 = vsub.s32 6, %v998
      %v1000 = vrot.slane %v350, %v999
      %v1001 = vlaneseq
      %v1002 = vshrl.u32 %v1001, 7
      %v1003 = vsub.s32 6, %v1002
      %v1004 = vrot.slane %v351, %v1003
      %v1005 = vmul.f32 %v993, %v1000
      %v1006 = vmul.f32 %v995, %v1004
      %v1007 = vmul.f32 %v994, %v1000
      %v1008 = vmul.f32 %v996, %v1004
      %1009 = vst [vmem:[#allocation2 + $0x1c0] sm:$0xff] %v1005
      %1010 = vst [vmem:[#allocation2 + $0x1c8] sm:$0xff] %v1006
      %1011 = vst [vmem:[#allocation2 + $0x1d0] sm:$0xff] %v1007
      %1012 = vst [vmem:[#allocation2 + $0x1d8] sm:$0xff] %v1008
      %1013 = vrot.lane.b32.xlu0 %v597, 121
      %v1014 = vpop.permute.xlu0 %1013
      %1015 = vrot.lane.b32.xlu0 %v599, 121
      %v1016 = vpop.permute.xlu0 %1015
      %1017 = vrot.lane.b32.xlu0 %v598, 121
      %v1018 = vpop.permute.xlu0 %1017
      %1019 = vrot.lane.b32.xlu0 %v600, 121
      %v1020 = vpop.permute.xlu0 %1019
      %vm1021 = vcmp.lt.s32.totalorder %v610, 121
      %v1022 = vsel %vm1021, %v1014, %v1018
      %v1023 = vsel %vm1021, %v1016, %v1020
      %v1024 = vsel %vm1021, %v1018, %v1014
      %v1025 = vsel %vm1021, %v1020, %v1016
      %v1026 = vlaneseq
      %v1027 = vshrl.u32 %v1026, 7
      %v1028 = vsub.s32 7, %v1027
      %v1029 = vrot.slane %v350, %v1028
      %v1030 = vlaneseq
      %v1031 = vshrl.u32 %v1030, 7
      %v1032 = vsub.s32 7, %v1031
      %v1033 = vrot.slane %v351, %v1032
      %v1034 = vmul.f32 %v1022, %v1029
      %v1035 = vmul.f32 %v1024, %v1033
      %v1036 = vmul.f32 %v1023, %v1029
      %v1037 = vmul.f32 %v1025, %v1033
      %1038 = vst [vmem:[#allocation2 + $0x1e0] sm:$0xff] %v1034
      %1039 = vst [vmem:[#allocation2 + $0x1e8] sm:$0xff] %v1035
      %1040 = vst [vmem:[#allocation2 + $0x1f0] sm:$0xff] %v1036
      %1041 = vst [vmem:[#allocation2 + $0x1f8] sm:$0xff] %v1037
      %1042 = vrot.lane.b32.xlu0 %v597, 120
      %v1043 = vpop.permute.xlu0 %1042
      %1044 = vrot.lane.b32.xlu0 %v599, 120
      %v1045 = vpop.permute.xlu0 %1044
      %1046 = vrot.lane.b32.xlu0 %v598, 120
      %v1047 = vpop.permute.xlu0 %1046
      %1048 = vrot.lane.b32.xlu0 %v600, 120
      %v1049 = vpop.permute.xlu0 %1048
      %vm1050 = vcmp.lt.s32.totalorder %v610, 120
      %v1051 = vsel %vm1050, %v1043, %v1047
      %v1052 = vsel %vm1050, %v1045, %v1049
      %v1053 = vsel %vm1050, %v1047, %v1043
      %v1054 = vsel %vm1050, %v1049, %v1045
      %v1055 = vlaneseq
      %v1056 = vshrl.u32 %v1055, 7
      %v1057 = vsub.s32 0, %v1056
      %v1058 = vrot.slane %v352, %v1057
      %v1059 = vlaneseq
      %v1060 = vshrl.u32 %v1059, 7
      %v1061 = vsub.s32 0, %v1060
      %v1062 = vrot.slane %v353, %v1061
      %v1063 = vmul.f32 %v1051, %v1058
      %v1064 = vmul.f32 %v1053, %v1062
      %v1065 = vmul.f32 %v1052, %v1058
      %v1066 = vmul.f32 %v1054, %v1062
      %1067 = vst [vmem:[#allocation2 + $0x200] sm:$0xff] %v1063
      %1068 = vst [vmem:[#allocation2 + $0x208] sm:$0xff] %v1064
      %1069 = vst [vmem:[#allocation2 + $0x210] sm:$0xff] %v1065
      %1070 = vst [vmem:[#allocation2 + $0x218] sm:$0xff] %v1066
      %1071 = vrot.lane.b32.xlu0 %v597, 119
      %v1072 = vpop.permute.xlu0 %1071
      %1073 = vrot.lane.b32.xlu0 %v599, 119
      %v1074 = vpop.permute.xlu0 %1073
      %1075 = vrot.lane.b32.xlu0 %v598, 119
      %v1076 = vpop.permute.xlu0 %1075
      %1077 = vrot.lane.b32.xlu0 %v600, 119
      %v1078 = vpop.permute.xlu0 %1077
      %vm1079 = vcmp.lt.s32.totalorder %v610, 119
      %v1080 = vsel %vm1079, %v1072, %v1076
      %v1081 = vsel %vm1079, %v1074, %v1078
      %v1082 = vsel %vm1079, %v1076, %v1072
      %v1083 = vsel %vm1079, %v1078, %v1074
      %v1084 = vlaneseq
      %v1085 = vshrl.u32 %v1084, 7
      %v1086 = vsub.s32 1, %v1085
      %v1087 = vrot.slane %v352, %v1086
      %v1088 = vlaneseq
      %v1089 = vshrl.u32 %v1088, 7
      %v1090 = vsub.s32 1, %v1089
      %v1091 = vrot.slane %v353, %v1090
      %v1092 = vmul.f32 %v1080, %v1087
      %v1093 = vmul.f32 %v1082, %v1091
      %v1094 = vmul.f32 %v1081, %v1087
      %v1095 = vmul.f32 %v1083, %v1091
      %1096 = vst [vmem:[#allocation2 + $0x220] sm:$0xff] %v1092
      %1097 = vst [vmem:[#allocation2 + $0x228] sm:$0xff] %v1093
      %1098 = vst [vmem:[#allocation2 + $0x230] sm:$0xff] %v1094
      %1099 = vst [vmem:[#allocation2 + $0x238] sm:$0xff] %v1095
      %v1100 = vlaneseq
      %v1101 = vshrl.u32 %v1100, 7
      %v1102 = vsub.s32 2, %v1101
      %v1103 = vrot.slane %v352, %v1102
      %v1104 = vlaneseq
      %v1105 = vshrl.u32 %v1104, 7
      %v1106 = vsub.s32 2, %v1105
      %v1107 = vrot.slane %v353, %v1106
      %v1108 = vmul.f32 %v612, %v1103
      %v1109 = vmul.f32 %v614, %v1107
      %v1110 = vmul.f32 %v613, %v1103
      %v1111 = vmul.f32 %v615, %v1107
      %1112 = vst [vmem:[#allocation2 + $0x240] sm:$0xff] %v1108
      %1113 = vst [vmem:[#allocation2 + $0x248] sm:$0xff] %v1109
      %1114 = vst [vmem:[#allocation2 + $0x250] sm:$0xff] %v1110
      %1115 = vst [vmem:[#allocation2 + $0x258] sm:$0xff] %v1111
      %v1116 = vlaneseq
      %v1117 = vshrl.u32 %v1116, 7
      %v1118 = vsub.s32 3, %v1117
      %v1119 = vrot.slane %v352, %v1118
      %v1120 = vlaneseq
      %v1121 = vshrl.u32 %v1120, 7
      %v1122 = vsub.s32 3, %v1121
      %v1123 = vrot.slane %v353, %v1122
      %v1124 = vmul.f32 %v641, %v1119
      %v1125 = vmul.f32 %v643, %v1123
      %v1126 = vmul.f32 %v642, %v1119
      %v1127 = vmul.f32 %v644, %v1123
      %1128 = vst [vmem:[#allocation2 + $0x260] sm:$0xff] %v1124
      %1129 = vst [vmem:[#allocation2 + $0x268] sm:$0xff] %v1125
      %1130 = vst [vmem:[#allocation2 + $0x270] sm:$0xff] %v1126
      %1131 = vst [vmem:[#allocation2 + $0x278] sm:$0xff] %v1127
      %v1132 = vlaneseq
      %v1133 = vshrl.u32 %v1132, 7
      %v1134 = vsub.s32 4, %v1133
      %v1135 = vrot.slane %v352, %v1134
      %v1136 = vlaneseq
      %v1137 = vshrl.u32 %v1136, 7
      %v1138 = vsub.s32 4, %v1137
      %v1139 = vrot.slane %v353, %v1138
      %v1140 = vmul.f32 %v670, %v1135
      %v1141 = vmul.f32 %v672, %v1139
      %v1142 = vmul.f32 %v671, %v1135
      %v1143 = vmul.f32 %v673, %v1139
      %1144 = vst [vmem:[#allocation2 + $0x280] sm:$0xff] %v1140
      %1145 = vst [vmem:[#allocation2 + $0x288] sm:$0xff] %v1141
      %1146 = vst [vmem:[#allocation2 + $0x290] sm:$0xff] %v1142
      %1147 = vst [vmem:[#allocation2 + $0x298] sm:$0xff] %v1143
      %v1148 = vlaneseq
      %v1149 = vshrl.u32 %v1148, 7
      %v1150 = vsub.s32 5, %v1149
      %v1151 = vrot.slane %v352, %v1150
      %v1152 = vlaneseq
      %v1153 = vshrl.u32 %v1152, 7
      %v1154 = vsub.s32 5, %v1153
      %v1155 = vrot.slane %v353, %v1154
      %v1156 = vmul.f32 %v699, %v1151
      %v1157 = vmul.f32 %v701, %v1155
      %v1158 = vmul.f32 %v700, %v1151
      %v1159 = vmul.f32 %v702, %v1155
      %1160 = vst [vmem:[#allocation2 + $0x2a0] sm:$0xff] %v1156
      %1161 = vst [vmem:[#allocation2 + $0x2a8] sm:$0xff] %v1157
      %1162 = vst [vmem:[#allocation2 + $0x2b0] sm:$0xff] %v1158
      %1163 = vst [vmem:[#allocation2 + $0x2b8] sm:$0xff] %v1159
      %v1164 = vlaneseq
      %v1165 = vshrl.u32 %v1164, 7
      %v1166 = vsub.s32 6, %v1165
      %v1167 = vrot.slane %v352, %v1166
      %v1168 = vlaneseq
      %v1169 = vshrl.u32 %v1168, 7
      %v1170 = vsub.s32 6, %v1169
      %v1171 = vrot.slane %v353, %v1170
      %v1172 = vmul.f32 %v728, %v1167
      %v1173 = vmul.f32 %v730, %v1171
      %v1174 = vmul.f32 %v729, %v1167
      %v1175 = vmul.f32 %v731, %v1171
      %1176 = vst [vmem:[#allocation2 + $0x2c0] sm:$0xff] %v1172
      %1177 = vst [vmem:[#allocation2 + $0x2c8] sm:$0xff] %v1173
      %1178 = vst [vmem:[#allocation2 + $0x2d0] sm:$0xff] %v1174
      %1179 = vst [vmem:[#allocation2 + $0x2d8] sm:$0xff] %v1175
      %v1180 = vlaneseq
      %v1181 = vshrl.u32 %v1180, 7
      %v1182 = vsub.s32 7, %v1181
      %v1183 = vrot.slane %v352, %v1182
      %v1184 = vlaneseq
      %v1185 = vshrl.u32 %v1184, 7
      %v1186 = vsub.s32 7, %v1185
      %v1187 = vrot.slane %v353, %v1186
      %v1188 = vmul.f32 %v757, %v1183
      %v1189 = vmul.f32 %v759, %v1187
      %v1190 = vmul.f32 %v758, %v1183
      %v1191 = vmul.f32 %v760, %v1187
      %1192 = vst [vmem:[#allocation2 + $0x2e0] sm:$0xff] %v1188
      %1193 = vst [vmem:[#allocation2 + $0x2e8] sm:$0xff] %v1189
      %1194 = vst [vmem:[#allocation2 + $0x2f0] sm:$0xff] %v1190
      %1195 = vst [vmem:[#allocation2 + $0x2f8] sm:$0xff] %v1191
      %v1196 = vlaneseq
      %v1197 = vshrl.u32 %v1196, 7
      %v1198 = vsub.s32 0, %v1197
      %v1199 = vrot.slane %v354, %v1198
      %v1200 = vlaneseq
      %v1201 = vshrl.u32 %v1200, 7
      %v1202 = vsub.s32 0, %v1201
      %v1203 = vrot.slane %v355, %v1202
      %v1204 = vmul.f32 %v786, %v1199
      %v1205 = vmul.f32 %v788, %v1203
      %v1206 = vmul.f32 %v787, %v1199
      %v1207 = vmul.f32 %v789, %v1203
      %1208 = vst [vmem:[#allocation2 + $0x300] sm:$0xff] %v1204
      %1209 = vst [vmem:[#allocation2 + $0x308] sm:$0xff] %v1205
      %1210 = vst [vmem:[#allocation2 + $0x310] sm:$0xff] %v1206
      %1211 = vst [vmem:[#allocation2 + $0x318] sm:$0xff] %v1207
      %v1212 = vlaneseq
      %v1213 = vshrl.u32 %v1212, 7
      %v1214 = vsub.s32 1, %v1213
      %v1215 = vrot.slane %v354, %v1214
      %v1216 = vlaneseq
      %v1217 = vshrl.u32 %v1216, 7
      %v1218 = vsub.s32 1, %v1217
      %v1219 = vrot.slane %v355, %v1218
      %v1220 = vmul.f32 %v815, %v1215
      %v1221 = vmul.f32 %v817, %v1219
      %v1222 = vmul.f32 %v816, %v1215
      %v1223 = vmul.f32 %v818, %v1219
      %1224 = vst [vmem:[#allocation2 + $0x320] sm:$0xff] %v1220
      %1225 = vst [vmem:[#allocation2 + $0x328] sm:$0xff] %v1221
      %1226 = vst [vmem:[#allocation2 + $0x330] sm:$0xff] %v1222
      %1227 = vst [vmem:[#allocation2 + $0x338] sm:$0xff] %v1223
      %v1228 = vlaneseq
      %v1229 = vshrl.u32 %v1228, 7
      %v1230 = vsub.s32 2, %v1229
      %v1231 = vrot.slane %v354, %v1230
      %v1232 = vlaneseq
      %v1233 = vshrl.u32 %v1232, 7
      %v1234 = vsub.s32 2, %v1233
      %v1235 = vrot.slane %v355, %v1234
      %v1236 = vmul.f32 %v844, %v1231
      %v1237 = vmul.f32 %v846, %v1235
      %v1238 = vmul.f32 %v845, %v1231
      %v1239 = vmul.f32 %v847, %v1235
      %1240 = vst [vmem:[#allocation2 + $0x340] sm:$0xff] %v1236
      %1241 = vst [vmem:[#allocation2 + $0x348] sm:$0xff] %v1237
      %1242 = vst [vmem:[#allocation2 + $0x350] sm:$0xff] %v1238
      %1243 = vst [vmem:[#allocation2 + $0x358] sm:$0xff] %v1239
      %v1244 = vld [vmem:[%s337] sm:$0xff]
      %v1245 = vld [vmem:[#allocation2] sm:$0xff]
      %v1246 = vld [vmem:[#allocation2 + $0x8] sm:$0xff]
      %v1247 = vld [vmem:[#allocation2 + $0x10] sm:$0xff]
      %v1248 = vld [vmem:[#allocation2 + $0x18] sm:$0xff]
      %v1249 = vld [vmem:[#allocation2 + $0x20] sm:$0xff]
      %v1250 = vld [vmem:[#allocation2 + $0x28] sm:$0xff]
      %v1251 = vld [vmem:[#allocation2 + $0x30] sm:$0xff]
      %v1252 = vld [vmem:[#allocation2 + $0x38] sm:$0xff]
      %v1253 = vld [vmem:[#allocation2 + $0x40] sm:$0xff]
      %v1254 = vld [vmem:[#allocation2 + $0x48] sm:$0xff]
      %v1255 = vld [vmem:[#allocation2 + $0x50] sm:$0xff]
      %v1256 = vld [vmem:[#allocation2 + $0x58] sm:$0xff]
      %v1257 = vld [vmem:[#allocation2 + $0x60] sm:$0xff]
      %v1258 = vld [vmem:[#allocation2 + $0x68] sm:$0xff]
      %v1259 = vld [vmem:[#allocation2 + $0x70] sm:$0xff]
      %v1260 = vld [vmem:[#allocation2 + $0x78] sm:$0xff]
      %v1261 = vld [vmem:[#allocation2 + $0x80] sm:$0xff]
      %v1262 = vld [vmem:[#allocation2 + $0x88] sm:$0xff]
      %v1263 = vld [vmem:[#allocation2 + $0x90] sm:$0xff]
      %v1264 = vld [vmem:[#allocation2 + $0x98] sm:$0xff]
      %v1265 = vld [vmem:[#allocation2 + $0xa0] sm:$0xff]
      %v1266 = vld [vmem:[#allocation2 + $0xa8] sm:$0xff]
      %v1267 = vld [vmem:[#allocation2 + $0xb0] sm:$0xff]
      %v1268 = vld [vmem:[#allocation2 + $0xb8] sm:$0xff]
      %v1269 = vld [vmem:[#allocation2 + $0xc0] sm:$0xff]
      %v1270 = vld [vmem:[#allocation2 + $0xc8] sm:$0xff]
      %v1271 = vld [vmem:[#allocation2 + $0xd0] sm:$0xff]
      %v1272 = vld [vmem:[#allocation2 + $0xd8] sm:$0xff]
      %v1273 = vld [vmem:[#allocation2 + $0xe0] sm:$0xff]
      %v1274 = vld [vmem:[#allocation2 + $0xe8] sm:$0xff]
      %v1275 = vld [vmem:[#allocation2 + $0xf0] sm:$0xff]
      %v1276 = vld [vmem:[#allocation2 + $0xf8] sm:$0xff]
      %v1277 = vld [vmem:[#allocation2 + $0x100] sm:$0xff]
      %v1278 = vld [vmem:[#allocation2 + $0x108] sm:$0xff]
      %v1279 = vld [vmem:[#allocation2 + $0x110] sm:$0xff]
      %v1280 = vld [vmem:[#allocation2 + $0x118] sm:$0xff]
      %v1281 = vld [vmem:[#allocation2 + $0x120] sm:$0xff]
      %v1282 = vld [vmem:[#allocation2 + $0x128] sm:$0xff]
      %v1283 = vld [vmem:[#allocation2 + $0x130] sm:$0xff]
      %v1284 = vld [vmem:[#allocation2 + $0x138] sm:$0xff]
      %v1285 = vld [vmem:[#allocation2 + $0x140] sm:$0xff]
      %v1286 = vld [vmem:[#allocation2 + $0x148] sm:$0xff]
      %v1287 = vld [vmem:[#allocation2 + $0x150] sm:$0xff]
      %v1288 = vld [vmem:[#allocation2 + $0x158] sm:$0xff]
      %v1289 = vld [vmem:[#allocation2 + $0x160] sm:$0xff]
      %v1290 = vld [vmem:[#allocation2 + $0x168] sm:$0xff]
      %v1291 = vld [vmem:[#allocation2 + $0x170] sm:$0xff]
      %v1292 = vld [vmem:[#allocation2 + $0x178] sm:$0xff]
      %v1293 = vld [vmem:[#allocation2 + $0x180] sm:$0xff]
      %v1294 = vld [vmem:[#allocation2 + $0x188] sm:$0xff]
      %v1295 = vld [vmem:[#allocation2 + $0x190] sm:$0xff]
      %v1296 = vld [vmem:[#allocation2 + $0x198] sm:$0xff]
      %v1297 = vld [vmem:[#allocation2 + $0x1a0] sm:$0xff]
      %v1298 = vld [vmem:[#allocation2 + $0x1a8] sm:$0xff]
      %v1299 = vld [vmem:[#allocation2 + $0x1b0] sm:$0xff]
      %v1300 = vld [vmem:[#allocation2 + $0x1b8] sm:$0xff]
      %v1301 = vld [vmem:[#allocation2 + $0x1c0] sm:$0xff]
      %v1302 = vld [vmem:[#allocation2 + $0x1c8] sm:$0xff]
      %v1303 = vld [vmem:[#allocation2 + $0x1d0] sm:$0xff]
      %v1304 = vld [vmem:[#allocation2 + $0x1d8] sm:$0xff]
      %v1305 = vld [vmem:[#allocation2 + $0x1e0] sm:$0xff]
      %v1306 = vld [vmem:[#allocation2 + $0x1e8] sm:$0xff]
      %v1307 = vld [vmem:[#allocation2 + $0x1f0] sm:$0xff]
      %v1308 = vld [vmem:[#allocation2 + $0x1f8] sm:$0xff]
      %v1309 = vld [vmem:[#allocation2 + $0x200] sm:$0xff]
      %v1310 = vld [vmem:[#allocation2 + $0x208] sm:$0xff]
      %v1311 = vld [vmem:[#allocation2 + $0x210] sm:$0xff]
      %v1312 = vld [vmem:[#allocation2 + $0x218] sm:$0xff]
      %v1313 = vld [vmem:[#allocation2 + $0x220] sm:$0xff]
      %v1314 = vld [vmem:[#allocation2 + $0x228] sm:$0xff]
      %v1315 = vld [vmem:[#allocation2 + $0x230] sm:$0xff]
      %v1316 = vld [vmem:[#allocation2 + $0x238] sm:$0xff]
      %v1317 = vld [vmem:[#allocation2 + $0x240] sm:$0xff]
      %v1318 = vld [vmem:[#allocation2 + $0x248] sm:$0xff]
      %v1319 = vld [vmem:[#allocation2 + $0x250] sm:$0xff]
      %v1320 = vld [vmem:[#allocation2 + $0x258] sm:$0xff]
      %v1321 = vld [vmem:[#allocation2 + $0x260] sm:$0xff]
      %v1322 = vld [vmem:[#allocation2 + $0x268] sm:$0xff]
      %v1323 = vld [vmem:[#allocation2 + $0x270] sm:$0xff]
      %v1324 = vld [vmem:[#allocation2 + $0x278] sm:$0xff]
      %v1325 = vld [vmem:[#allocation2 + $0x280] sm:$0xff]
      %v1326 = vld [vmem:[#allocation2 + $0x288] sm:$0xff]
      %v1327 = vld [vmem:[#allocation2 + $0x290] sm:$0xff]
      %v1328 = vld [vmem:[#allocation2 + $0x298] sm:$0xff]
      %v1329 = vld [vmem:[#allocation2 + $0x2a0] sm:$0xff]
      %v1330 = vld [vmem:[#allocation2 + $0x2a8] sm:$0xff]
      %v1331 = vld [vmem:[#allocation2 + $0x2b0] sm:$0xff]
      %v1332 = vld [vmem:[#allocation2 + $0x2b8] sm:$0xff]
      %v1333 = vld [vmem:[#allocation2 + $0x2c0] sm:$0xff]
      %v1334 = vld [vmem:[#allocation2 + $0x2c8] sm:$0xff]
      %v1335 = vld [vmem:[#allocation2 + $0x2d0] sm:$0xff]
      %v1336 = vld [vmem:[#allocation2 + $0x2d8] sm:$0xff]
      %v1337 = vld [vmem:[#allocation2 + $0x2e0] sm:$0xff]
      %v1338 = vld [vmem:[#allocation2 + $0x2e8] sm:$0xff]
      %v1339 = vld [vmem:[#allocation2 + $0x2f0] sm:$0xff]
      %v1340 = vld [vmem:[#allocation2 + $0x2f8] sm:$0xff]
      %v1341 = vld [vmem:[#allocation2 + $0x300] sm:$0xff]
      %v1342 = vld [vmem:[#allocation2 + $0x308] sm:$0xff]
      %v1343 = vld [vmem:[#allocation2 + $0x310] sm:$0xff]
      %v1344 = vld [vmem:[#allocation2 + $0x318] sm:$0xff]
      %v1345 = vld [vmem:[#allocation2 + $0x320] sm:$0xff]
      %v1346 = vld [vmem:[#allocation2 + $0x328] sm:$0xff]
      %v1347 = vld [vmem:[#allocation2 + $0x330] sm:$0xff]
      %v1348 = vld [vmem:[#allocation2 + $0x338] sm:$0xff]
      %v1349 = vld [vmem:[#allocation2 + $0x340] sm:$0xff]
      %v1350 = vld [vmem:[#allocation2 + $0x348] sm:$0xff]
      %v1351 = vld [vmem:[#allocation2 + $0x350] sm:$0xff]
      %v1352 = vld [vmem:[#allocation2 + $0x358] sm:$0xff]
      %v1353 = vpack.c.bf16 %v1247, %v1245
      %v1354 = vpack.c.bf16 %v1248, %v1246
      %v1355 = vpack.c.bf16 %v1251, %v1249
      %v1356 = vpack.c.bf16 %v1252, %v1250
      %v1357 = vpack.c.bf16 %v1255, %v1253
      %v1358 = vpack.c.bf16 %v1256, %v1254
      %v1359 = vpack.c.bf16 %v1259, %v1257
      %v1360 = vpack.c.bf16 %v1260, %v1258
      %v1361 = vpack.c.bf16 %v1263, %v1261
      %v1362 = vpack.c.bf16 %v1264, %v1262
      %v1363 = vpack.c.bf16 %v1267, %v1265
      %v1364 = vpack.c.bf16 %v1268, %v1266
      %v1365 = vpack.c.bf16 %v1271, %v1269
      %v1366 = vpack.c.bf16 %v1272, %v1270
      %v1367 = vpack.c.bf16 %v1275, %v1273
      %v1368 = vpack.c.bf16 %v1276, %v1274
      %v1369 = vpack.c.bf16 %v1279, %v1277
      %v1370 = vpack.c.bf16 %v1280, %v1278
      %v1371 = vpack.c.bf16 %v1283, %v1281
      %v1372 = vpack.c.bf16 %v1284, %v1282
      %v1373 = vpack.c.bf16 %v1287, %v1285
      %v1374 = vpack.c.bf16 %v1288, %v1286
      %v1375 = vpack.c.bf16 %v1291, %v1289
      %v1376 = vpack.c.bf16 %v1292, %v1290
      %v1377 = vpack.c.bf16 %v1295, %v1293
      %v1378 = vpack.c.bf16 %v1296, %v1294
      %v1379 = vpack.c.bf16 %v1299, %v1297
      %v1380 = vpack.c.bf16 %v1300, %v1298
      %v1381 = vpack.c.bf16 %v1303, %v1301
      %v1382 = vpack.c.bf16 %v1304, %v1302
      %v1383 = vpack.c.bf16 %v1307, %v1305
      %v1384 = vpack.c.bf16 %v1308, %v1306
      %v1385 = vpack.c.bf16 %v1311, %v1309
      %v1386 = vpack.c.bf16 %v1312, %v1310
      %v1387 = vpack.c.bf16 %v1315, %v1313
      %v1388 = vpack.c.bf16 %v1316, %v1314
      %v1389 = vpack.c.bf16 %v1319, %v1317
      %v1390 = vpack.c.bf16 %v1320, %v1318
      %v1391 = vpack.c.bf16 %v1323, %v1321
      %v1392 = vpack.c.bf16 %v1324, %v1322
      %v1393 = vpack.c.bf16 %v1327, %v1325
      %v1394 = vpack.c.bf16 %v1328, %v1326
      %v1395 = vpack.c.bf16 %v1331, %v1329
      %v1396 = vpack.c.bf16 %v1332, %v1330
      %v1397 = vpack.c.bf16 %v1335, %v1333
      %v1398 = vpack.c.bf16 %v1336, %v1334
      %v1399 = vpack.c.bf16 %v1339, %v1337
      %v1400 = vpack.c.bf16 %v1340, %v1338
      %v1401 = vpack.c.bf16 %v1343, %v1341
      %v1402 = vpack.c.bf16 %v1344, %v1342
      %v1403 = vpack.c.bf16 %v1347, %v1345
      %v1404 = vpack.c.bf16 %v1348, %v1346
      %v1405 = vpack.c.bf16 %v1351, %v1349
      %v1406 = vpack.c.bf16 %v1352, %v1350
      %v1407 = vld [vmem:[%s4] sm:$0xff]
      %v1408 = vld [vmem:[%s4 + $0x8] sm:$0xff]
      %1410 = vset.pattern.permute.xlu0 0
      %1411 = vperm.xlu0 %1410, %v1244
      %v1412 = vpop.permute.xlu0 %1411
      %v1416 = vunpack.c.l.b16 %v1407
      %v1417 = vunpack.c.h.b16 %v1407
      %v1418 = vunpack.c.l.b16 %v1408
      %v1419 = vunpack.c.h.b16 %v1408
      %v1420 = vpack.c.b16 %v1416, %v1416
      %v1421 = vpack.c.b16 %v1417, %v1417
      %v1422 = vpack.c.b16 %v1418, %v1418
      %v1423 = vpack.c.b16 %v1419, %v1419
      %vm1427 = vcmask 392192
      %v1429 = vsel %vm1427, %v1423, 0
      %1431 = vmatprep.subr.bf16.mxu0 %v1368
      %1432 = vmatpush1.bf16.msra.mxu0 %v1367
      %1433 = vmatprep.subr.bf16.mxu0 %v1366
      %1434 = vmatpush1.bf16.msra.mxu0 %v1365
      %1435 = vmatprep.subr.bf16.mxu0 %v1364
      %1436 = vmatpush1.bf16.msra.mxu0 %v1363
      %1437 = vmatprep.subr.bf16.mxu0 %v1362
      %1438 = vmatpush1.bf16.msra.mxu0 %v1361
      %1439 = vmatprep.subr.bf16.mxu0 %v1360
      %1440 = vmatpush1.bf16.msra.mxu0 %v1359
      %1441 = vmatprep.subr.bf16.mxu0 %v1358
      %1442 = vmatpush1.bf16.msra.mxu0 %v1357
      %1443 = vmatprep.subr.bf16.mxu0 %v1356
      %1444 = vmatpush1.bf16.msra.mxu0 %v1355
      %1445 = vmatprep.subr.bf16.mxu0 %v1354
      %1446 = vmatpush1.bf16.msra.mxu0 %v1353
      %1447 = vmatprep.subr.bf16.mxu0 %v1384
      %1448 = vmatpush2.bf16.msra.mxu0 %v1383
      %1449 = vmatprep.subr.bf16.mxu0 %v1382
      %1450 = vmatpush2.bf16.msra.mxu0 %v1381
      %1451 = vmatprep.subr.bf16.mxu0 %v1380
      %1452 = vmatpush2.bf16.msra.mxu0 %v1379
      %1453 = vmatprep.subr.bf16.mxu0 %v1378
      %1454 = vmatpush2.bf16.msra.mxu0 %v1377
      %1455 = vmatprep.subr.bf16.mxu0 %v1376
      %1456 = vmatpush2.bf16.msra.mxu0 %v1375
      %1457 = vmatprep.subr.bf16.mxu0 %v1374
      %1458 = vmatpush2.bf16.msra.mxu0 %v1373
      %1459 = vmatprep.subr.bf16.mxu0 %v1372
      %1460 = vmatpush2.bf16.msra.mxu0 %v1371
      %1461 = vmatprep.subr.bf16.mxu0 %v1370
      %1462 = vmatpush2.bf16.msra.mxu0 %v1369
      %1463 = vmatprep.mubr.bf16.mxu0 %v1421
      %1464 = vmatmul.mubr.bf16.gmra.mxu0 %v1420
      %v1465 = vpop.f32.mrf.mxu0
      %v1466 = vadd.f32 %v1412, %v1465
      %v1467 = vpop.f32.mrf.mxu0
      %v1468 = vadd.f32 %v1412, %v1467
      %v1469 = vpop.f32.mrf.mxu0
      %v1470 = vpop.f32.mrf.mxu0
      %1471 = vdwg.mxu0
      %1472 = vmatprep.subr.bf16.mxu0 %v1400
      %1473 = vmatpush1.bf16.msra.mxu0 %v1399
      %1474 = vmatprep.subr.bf16.mxu0 %v1398
      %1475 = vmatpush1.bf16.msra.mxu0 %v1397
      %1476 = vmatprep.subr.bf16.mxu0 %v1396
      %1477 = vmatpush1.bf16.msra.mxu0 %v1395
      %1478 = vmatprep.subr.bf16.mxu0 %v1394
      %1479 = vmatpush1.bf16.msra.mxu0 %v1393
      %1480 = vmatprep.subr.bf16.mxu0 %v1392
      %1481 = vmatpush1.bf16.msra.mxu0 %v1391
      %1482 = vmatprep.subr.bf16.mxu0 %v1390
      %1483 = vmatpush1.bf16.msra.mxu0 %v1389
      %1484 = vmatprep.subr.bf16.mxu0 %v1388
      %1485 = vmatpush1.bf16.msra.mxu0 %v1387
      %1486 = vmatprep.subr.bf16.mxu0 %v1386
      %1487 = vmatpush1.bf16.msra.mxu0 %v1385
      %1488 = vmatprep.subr.bf16.mxu0 0
      %1489 = vmatpush2.bf16.msra.mxu0 0
      %1490 = vmatprep.subr.bf16.mxu0 0
      %1491 = vmatpush2.bf16.msra.mxu0 0
      %1492 = vmatprep.subr.bf16.mxu0 0
      %1493 = vmatpush2.bf16.msra.mxu0 0
      %1494 = vmatprep.subr.bf16.mxu0 0
      %1495 = vmatpush2.bf16.msra.mxu0 0
      %1496 = vmatprep.subr.bf16.mxu0 0
      %1497 = vmatpush2.bf16.msra.mxu0 0
      %1498 = vmatprep.subr.bf16.mxu0 %v1406
      %1499 = vmatpush2.bf16.msra.mxu0 %v1405
      %1500 = vmatprep.subr.bf16.mxu0 %v1404
      %1501 = vmatpush2.bf16.msra.mxu0 %v1403
      %1502 = vmatprep.subr.bf16.mxu0 %v1402
      %1503 = vmatpush2.bf16.msra.mxu0 %v1401
      %1504 = vmatprep.mubr.bf16.mxu0 %v1429
      %1505 = vmatmul.mubr.bf16.gmra.mxu0 %v1422
      %v1506 = vpop.f32.mrf.mxu0
      %v1507 = vadd.f32 %v1466, %v1506
      %v1508 = vpop.f32.mrf.mxu0
      %v1509 = vadd.f32 %v1468, %v1508
      %v1510 = vpop.f32.mrf.mxu0
      %v1511 = vpop.f32.mrf.mxu0
      %1512 = vdwg.mxu0
      %v1513 = vadd.f32 %v1507, %v1509
      %1514 = vadd.xlane.f32.xlu0 %v1513
      %v1515 = vpop.xlane.xlu0 %1514
      %vm1516 = vcmask 1024
      %v1517 = vsel %vm1516, %v1515, 0.0
      %1518 = vadd.xlane.f32.xlu0 %v1517
      %v1519 = vpop.xlane.xlu0 %1518
      %v1520 = vrot.slane %v1519, 4
      %v1521 = vadd.f32 %v1519, %v1520
      %v1522 = vrot.slane %v1521, 2
      %v1523 = vadd.f32 %v1521, %v1522
      %v1524 = vrot.slane %v1523, 1
      %v1525 = vadd.f32 %v1523, %v1524
      %s1526 = vtos %v1525
      %v1527 = vrcp.pop 512.0
      %s1528 = vtos %v1527
      %s1529 = smul.f32 %s1526, %s1528
      %v1530 = vstv %s1529
      %v1532 = vrot.slane %v1515, 2
      %v1534 = vsel %vm1516, %v1532, 0.0
      %1535 = vadd.xlane.f32.xlu0 %v1534
      %v1536 = vpop.xlane.xlu0 %1535
      %v1537 = vrot.slane %v1536, 4
      %v1538 = vadd.f32 %v1536, %v1537
      %v1539 = vrot.slane %v1538, 2
      %v1540 = vadd.f32 %v1538, %v1539
      %v1541 = vrot.slane %v1540, 1
      %v1542 = vadd.f32 %v1540, %v1541
      %s1543 = vtos %v1542
      %v1544 = vrcp.pop 512.0
      %s1545 = vtos %v1544
      %s1546 = smul.f32 %s1543, %s1545
      %v1547 = vstv %s1546
      %v1548 = vrot.slane %v1515, 4
      %v1550 = vsel %vm1516, %v1548, 0.0
      %1551 = vadd.xlane.f32.xlu0 %v1550
      %v1552 = vpop.xlane.xlu0 %1551
      %v1553 = vrot.slane %v1552, 4
      %v1554 = vadd.f32 %v1552, %v1553
      %v1555 = vrot.slane %v1554, 2
      %v1556 = vadd.f32 %v1554, %v1555
      %v1557 = vrot.slane %v1556, 1
      %v1558 = vadd.f32 %v1556, %v1557
      %s1559 = vtos %v1558
      %v1560 = vrcp.pop 512.0
      %s1561 = vtos %v1560
      %s1562 = smul.f32 %s1559, %s1561
      %v1563 = vstv %s1562
      %v1564 = vrot.slane %v1515, 6
      %v1566 = vsel %vm1516, %v1564, 0.0
      %1567 = vadd.xlane.f32.xlu0 %v1566
      %v1568 = vpop.xlane.xlu0 %1567
      %v1569 = vrot.slane %v1568, 4
      %v1570 = vadd.f32 %v1568, %v1569
      %v1571 = vrot.slane %v1570, 2
      %v1572 = vadd.f32 %v1570, %v1571
      %v1573 = vrot.slane %v1572, 1
      %v1574 = vadd.f32 %v1572, %v1573
      %s1575 = vtos %v1574
      %v1576 = vrcp.pop 512.0
      %s1577 = vtos %v1576
      %s1578 = smul.f32 %s1575, %s1577
      %v1579 = vstv %s1578
      %vm1580 = vcmask 1041408
      %v1581 = vsel %vm1580, %v1530, %v1547
      %v1582 = vsel %vm436, %v1581, %v1563
      %vm1583 = vcmask 1045504
      %v1584 = vsel %vm1583, %v1582, %v1579
      %1586 = vset.pattern.permute.xlu0 0
      %1587 = vperm.xlu0 %1586, %v1584
      %v1588 = vpop.permute.xlu0 %1587
      %v1590 = vsub.f32 %v1507, %v1588
      %v1591 = vsub.f32 %v1509, %v1588
      %v1592 = vmul.f32 %v1590, %v1590
      %v1593 = vmul.f32 %v1591, %v1591
      %v1594 = vadd.f32 %v1592, %v1593
      %1595 = vadd.xlane.f32.xlu0 %v1594
      %v1596 = vpop.xlane.xlu0 %1595
      %v1597 = vsel %vm1516, %v1596, 0.0
      %1598 = vadd.xlane.f32.xlu0 %v1597
      %v1599 = vpop.xlane.xlu0 %1598
      %v1600 = vrot.slane %v1599, 4
      %v1601 = vadd.f32 %v1599, %v1600
      %v1602 = vrot.slane %v1601, 2
      %v1603 = vadd.f32 %v1601, %v1602
      %v1604 = vrot.slane %v1603, 1
      %v1605 = vadd.f32 %v1603, %v1604
      %s1606 = vtos %v1605
      %v1607 = vrcp.pop 512.0
      %s1608 = vtos %v1607
      %s1609 = smul.f32 %s1606, %s1608
      %s1610 = sadd.f32 %s1609, 1e-06
      %v1611 = vstv %s1610
      %v1612 = vrsqrt.pop %v1611
      %s1613 = vtos %v1612
      %v1614 = vstv %s1613
      %v1616 = vrot.slane %v1596, 2
      %v1618 = vsel %vm1516, %v1616, 0.0
      %1619 = vadd.xlane.f32.xlu0 %v1618
      %v1620 = vpop.xlane.xlu0 %1619
      %v1621 = vrot.slane %v1620, 4
      %v1622 = vadd.f32 %v1620, %v1621
      %v1623 = vrot.slane %v1622, 2
      %v1624 = vadd.f32 %v1622, %v1623
      %v1625 = vrot.slane %v1624, 1
      %v1626 = vadd.f32 %v1624, %v1625
      %s1627 = vtos %v1626
      %v1628 = vrcp.pop 512.0
      %s1629 = vtos %v1628
      %s1630 = smul.f32 %s1627, %s1629
      %s1631 = sadd.f32 %s1630, 1e-06
      %v1632 = vstv %s1631
      %v1633 = vrsqrt.pop %v1632
      %s1634 = vtos %v1633
      %v1635 = vstv %s1634
      %v1636 = vrot.slane %v1596, 4
      %v1638 = vsel %vm1516, %v1636, 0.0
      %1639 = vadd.xlane.f32.xlu0 %v1638
      %v1640 = vpop.xlane.xlu0 %1639
      %v1641 = vrot.slane %v1640, 4
      %v1642 = vadd.f32 %v1640, %v1641
      %v1643 = vrot.slane %v1642, 2
      %v1644 = vadd.f32 %v1642, %v1643
      %v1645 = vrot.slane %v1644, 1
      %v1646 = vadd.f32 %v1644, %v1645
      %s1647 = vtos %v1646
      %v1648 = vrcp.pop 512.0
      %s1649 = vtos %v1648
      %s1650 = smul.f32 %s1647, %s1649
      %s1651 = sadd.f32 %s1650, 1e-06
      %v1652 = vstv %s1651
      %v1653 = vrsqrt.pop %v1652
      %s1654 = vtos %v1653
      %v1655 = vstv %s1654
      %v1656 = vrot.slane %v1596, 6
      %v1658 = vsel %vm1516, %v1656, 0.0
      %1659 = vadd.xlane.f32.xlu0 %v1658
      %v1660 = vpop.xlane.xlu0 %1659
      %v1661 = vrot.slane %v1660, 4
      %v1662 = vadd.f32 %v1660, %v1661
      %v1663 = vrot.slane %v1662, 2
      %v1664 = vadd.f32 %v1662, %v1663
      %v1665 = vrot.slane %v1664, 1
      %v1666 = vadd.f32 %v1664, %v1665
      %s1667 = vtos %v1666
      %v1668 = vrcp.pop 512.0
      %s1669 = vtos %v1668
      %s1670 = smul.f32 %s1667, %s1669
      %s1671 = sadd.f32 %s1670, 1e-06
      %v1672 = vstv %s1671
      %v1673 = vrsqrt.pop %v1672
      %s1674 = vtos %v1673
      %v1675 = vstv %s1674
      %v1676 = vsel %vm1580, %v1614, %v1635
      %v1677 = vsel %vm436, %v1676, %v1655
      %v1678 = vsel %vm1583, %v1677, %v1675
      %v1679 = vmul.f32 %v1678, %v360
      %1681 = vset.pattern.permute.xlu0 0
      %1682 = vperm.xlu0 %1681, %v1679
      %v1683 = vpop.permute.xlu0 %1682
      %v1685 = vmul.f32 %v1590, %v1683
      %v1686 = vmul.f32 %v1591, %v1683
      %1688 = vset.pattern.permute.xlu0 0
      %1689 = vperm.xlu0 %1688, %v361
      %v1690 = vpop.permute.xlu0 %1689
      %v1692 = vadd.f32 %v1685, %v1690
      %v1693 = vadd.f32 %v1686, %v1690
      %v1694 = vxor.u32 %v1692, 2147483648
      %v1695 = vxor.u32 %v1693, 2147483648
      %v1696 = vmul.f32 %v1694, 1.442695
      %v1697 = vpow.pop %v1696
      %v1698 = vmul.f32 %v1695, 1.442695
      %v1699 = vpow.pop %v1698
      %v1700 = vadd.f32 %v1697, 1.0
      %v1701 = vadd.f32 %v1699, 1.0
      %v1702 = vrcp.pop %v1700
      %v1703 = vmul.f32 1.0, %v1702
      %v1704 = vrcp.pop %v1701
      %v1705 = vmul.f32 1.0, %v1704
      %v1706 = vmul.f32 %v1692, %v1703
      %v1707 = vmul.f32 %v1693, %v1705
      %1708 = vrot.lane.b32.xlu0 %v1706, 73
      %v1709 = vpop.permute.xlu0 %1708
      %1710 = vrot.lane.b32.xlu0 %v1707, 73
      %v1711 = vpop.permute.xlu0 %1710
      %v1712 = vsel %vm611, %v1709, %v1711
      %v1713 = vsel %vm611, %v1711, %v1709
      %v1714 = vmul.f32 %v1713, %v619
      %v1715 = vmul.f32 %v1712, %v623
      %1716 = vst [vmem:[#allocation2] sm:$0xff] %v1714
      %1717 = vst [vmem:[#allocation2 + $0x8] sm:$0xff] %v1715
      %1718 = vrot.lane.b32.xlu0 %v1706, 72
      %v1719 = vpop.permute.xlu0 %1718
      %1720 = vrot.lane.b32.xlu0 %v1707, 72
      %v1721 = vpop.permute.xlu0 %1720
      %v1722 = vsel %vm640, %v1719, %v1721
      %v1723 = vsel %vm640, %v1721, %v1719
      %v1724 = vmul.f32 %v1723, %v648
      %v1725 = vmul.f32 %v1722, %v652
      %1726 = vst [vmem:[#allocation2 + $0x10] sm:$0xff] %v1724
      %1727 = vst [vmem:[#allocation2 + $0x18] sm:$0xff] %v1725
      %1728 = vrot.lane.b32.xlu0 %v1706, 71
      %v1729 = vpop.permute.xlu0 %1728
      %1730 = vrot.lane.b32.xlu0 %v1707, 71
      %v1731 = vpop.permute.xlu0 %1730
      %v1732 = vsel %vm669, %v1729, %v1731
      %v1733 = vsel %vm669, %v1731, %v1729
      %v1734 = vmul.f32 %v1733, %v677
      %v1735 = vmul.f32 %v1732, %v681
      %1736 = vst [vmem:[#allocation2 + $0x20] sm:$0xff] %v1734
      %1737 = vst [vmem:[#allocation2 + $0x28] sm:$0xff] %v1735
      %1738 = vrot.lane.b32.xlu0 %v1706, 65
      %v1739 = vpop.permute.xlu0 %1738
      %1740 = vrot.lane.b32.xlu0 %v1707, 65
      %v1741 = vpop.permute.xlu0 %1740
      %v1742 = vsel %vm698, %v1739, %v1741
      %v1743 = vsel %vm698, %v1741, %v1739
      %v1744 = vmul.f32 %v1743, %v706
      %v1745 = vmul.f32 %v1742, %v710
      %1746 = vst [vmem:[#allocation2 + $0x30] sm:$0xff] %v1744
      %1747 = vst [vmem:[#allocation2 + $0x38] sm:$0xff] %v1745
      %1748 = vrot.lane.b32.xlu0 %v1706, 64
      %v1749 = vpop.permute.xlu0 %1748
      %1750 = vrot.lane.b32.xlu0 %v1707, 64
      %v1751 = vpop.permute.xlu0 %1750
      %v1752 = vsel %vm727, %v1749, %v1751
      %v1753 = vsel %vm727, %v1751, %v1749
      %v1754 = vmul.f32 %v1753, %v735
      %v1755 = vmul.f32 %v1752, %v739
      %1756 = vst [vmem:[#allocation2 + $0x40] sm:$0xff] %v1754
      %1757 = vst [vmem:[#allocation2 + $0x48] sm:$0xff] %v1755
      %1758 = vrot.lane.b32.xlu0 %v1706, 63
      %v1759 = vpop.permute.xlu0 %1758
      %1760 = vrot.lane.b32.xlu0 %v1707, 63
      %v1761 = vpop.permute.xlu0 %1760
      %v1762 = vsel %vm756, %v1759, %v1761
      %v1763 = vsel %vm756, %v1761, %v1759
      %v1764 = vmul.f32 %v1763, %v764
      %v1765 = vmul.f32 %v1762, %v768
      %1766 = vst [vmem:[#allocation2 + $0x50] sm:$0xff] %v1764
      %1767 = vst [vmem:[#allocation2 + $0x58] sm:$0xff] %v1765
      %1768 = vrot.lane.b32.xlu0 %v1706, 57
      %v1769 = vpop.permute.xlu0 %1768
      %1770 = vrot.lane.b32.xlu0 %v1707, 57
      %v1771 = vpop.permute.xlu0 %1770
      %v1772 = vsel %vm785, %v1769, %v1771
      %v1773 = vsel %vm785, %v1771, %v1769
      %v1774 = vmul.f32 %v1773, %v793
      %v1775 = vmul.f32 %v1772, %v797
      %1776 = vst [vmem:[#allocation2 + $0x60] sm:$0xff] %v1774
      %1777 = vst [vmem:[#allocation2 + $0x68] sm:$0xff] %v1775
      %1778 = vrot.lane.b32.xlu0 %v1706, 56
      %v1779 = vpop.permute.xlu0 %1778
      %1780 = vrot.lane.b32.xlu0 %v1707, 56
      %v1781 = vpop.permute.xlu0 %1780
      %v1782 = vsel %vm814, %v1779, %v1781
      %v1783 = vsel %vm814, %v1781, %v1779
      %v1784 = vmul.f32 %v1783, %v822
      %v1785 = vmul.f32 %v1782, %v826
      %1786 = vst [vmem:[#allocation2 + $0x70] sm:$0xff] %v1784
      %1787 = vst [vmem:[#allocation2 + $0x78] sm:$0xff] %v1785
      %1788 = vrot.lane.b32.xlu0 %v1706, 55
      %v1789 = vpop.permute.xlu0 %1788
      %1790 = vrot.lane.b32.xlu0 %v1707, 55
      %v1791 = vpop.permute.xlu0 %1790
      %v1792 = vsel %vm843, %v1789, %v1791
      %v1793 = vsel %vm843, %v1791, %v1789
      %v1794 = vmul.f32 %v1793, %v851
      %v1795 = vmul.f32 %v1792, %v855
      %1796 = vst [vmem:[#allocation2 + $0x80] sm:$0xff] %v1794
      %1797 = vst [vmem:[#allocation2 + $0x88] sm:$0xff] %v1795
      %1798 = vrot.lane.b32.xlu0 %v1706, 9
      %v1799 = vpop.permute.xlu0 %1798
      %1800 = vrot.lane.b32.xlu0 %v1707, 9
      %v1801 = vpop.permute.xlu0 %1800
      %v1802 = vsel %vm872, %v1799, %v1801
      %v1803 = vsel %vm872, %v1801, %v1799
      %v1804 = vmul.f32 %v1803, %v880
      %v1805 = vmul.f32 %v1802, %v884
      %1806 = vst [vmem:[#allocation2 + $0x90] sm:$0xff] %v1804
      %1807 = vst [vmem:[#allocation2 + $0x98] sm:$0xff] %v1805
      %1808 = vrot.lane.b32.xlu0 %v1706, 8
      %v1809 = vpop.permute.xlu0 %1808
      %1810 = vrot.lane.b32.xlu0 %v1707, 8
      %v1811 = vpop.permute.xlu0 %1810
      %v1812 = vsel %vm901, %v1809, %v1811
      %v1813 = vsel %vm901, %v1811, %v1809
      %v1814 = vmul.f32 %v1813, %v909
      %v1815 = vmul.f32 %v1812, %v913
      %1816 = vst [vmem:[#allocation2 + $0xa0] sm:$0xff] %v1814
      %1817 = vst [vmem:[#allocation2 + $0xa8] sm:$0xff] %v1815
      %1818 = vrot.lane.b32.xlu0 %v1706, 7
      %v1819 = vpop.permute.xlu0 %1818
      %1820 = vrot.lane.b32.xlu0 %v1707, 7
      %v1821 = vpop.permute.xlu0 %1820
      %v1822 = vsel %vm930, %v1819, %v1821
      %v1823 = vsel %vm930, %v1821, %v1819
      %v1824 = vmul.f32 %v1823, %v938
      %v1825 = vmul.f32 %v1822, %v942
      %1826 = vst [vmem:[#allocation2 + $0xb0] sm:$0xff] %v1824
      %1827 = vst [vmem:[#allocation2 + $0xb8] sm:$0xff] %v1825
      %1828 = vrot.lane.b32.xlu0 %v1706, 1
      %v1829 = vpop.permute.xlu0 %1828
      %1830 = vrot.lane.b32.xlu0 %v1707, 1
      %v1831 = vpop.permute.xlu0 %1830
      %v1832 = vsel %vm959, %v1829, %v1831
      %v1833 = vsel %vm959, %v1831, %v1829
      %v1834 = vmul.f32 %v1833, %v967
      %v1835 = vmul.f32 %v1832, %v971
      %1836 = vst [vmem:[#allocation2 + $0xc0] sm:$0xff] %v1834
      %1837 = vst [vmem:[#allocation2 + $0xc8] sm:$0xff] %v1835
      %1838 = vst [vmem:[#allocation2 + $0xd0] sm:$0xff] %v1706
      %1839 = vst [vmem:[#allocation2 + $0xd8] sm:$0xff] %v1707
      %1840 = vrot.lane.b32.xlu0 %v1706, 127
      %v1841 = vpop.permute.xlu0 %1840
      %1842 = vrot.lane.b32.xlu0 %v1707, 127
      %v1843 = vpop.permute.xlu0 %1842
      %v1844 = vsel %vm992, %v1841, %v1843
      %v1845 = vsel %vm992, %v1843, %v1841
      %v1846 = vmul.f32 %v1844, %v1000
      %v1847 = vmul.f32 %v1845, %v1004
      %1848 = vst [vmem:[#allocation2 + $0xe0] sm:$0xff] %v1846
      %1849 = vst [vmem:[#allocation2 + $0xe8] sm:$0xff] %v1847
      %1850 = vrot.lane.b32.xlu0 %v1706, 121
      %v1851 = vpop.permute.xlu0 %1850
      %1852 = vrot.lane.b32.xlu0 %v1707, 121
      %v1853 = vpop.permute.xlu0 %1852
      %v1854 = vsel %vm1021, %v1851, %v1853
      %v1855 = vsel %vm1021, %v1853, %v1851
      %v1856 = vmul.f32 %v1854, %v1029
      %v1857 = vmul.f32 %v1855, %v1033
      %1858 = vst [vmem:[#allocation2 + $0xf0] sm:$0xff] %v1856
      %1859 = vst [vmem:[#allocation2 + $0xf8] sm:$0xff] %v1857
      %1860 = vrot.lane.b32.xlu0 %v1706, 120
      %v1861 = vpop.permute.xlu0 %1860
      %1862 = vrot.lane.b32.xlu0 %v1707, 120
      %v1863 = vpop.permute.xlu0 %1862
      %v1864 = vsel %vm1050, %v1861, %v1863
      %v1865 = vsel %vm1050, %v1863, %v1861
      %v1866 = vmul.f32 %v1864, %v1058
      %v1867 = vmul.f32 %v1865, %v1062
      %1868 = vst [vmem:[#allocation2 + $0x100] sm:$0xff] %v1866
      %1869 = vst [vmem:[#allocation2 + $0x108] sm:$0xff] %v1867
      %1870 = vrot.lane.b32.xlu0 %v1706, 119
      %v1871 = vpop.permute.xlu0 %1870
      %1872 = vrot.lane.b32.xlu0 %v1707, 119
      %v1873 = vpop.permute.xlu0 %1872
      %v1874 = vsel %vm1079, %v1871, %v1873
      %v1875 = vsel %vm1079, %v1873, %v1871
      %v1876 = vmul.f32 %v1874, %v1087
      %v1877 = vmul.f32 %v1875, %v1091
      %1878 = vst [vmem:[#allocation2 + $0x110] sm:$0xff] %v1876
      %1879 = vst [vmem:[#allocation2 + $0x118] sm:$0xff] %v1877
      %v1880 = vmul.f32 %v1712, %v1103
      %v1881 = vmul.f32 %v1713, %v1107
      %1882 = vst [vmem:[#allocation2 + $0x120] sm:$0xff] %v1880
      %1883 = vst [vmem:[#allocation2 + $0x128] sm:$0xff] %v1881
      %v1884 = vmul.f32 %v1722, %v1119
      %v1885 = vmul.f32 %v1723, %v1123
      %1886 = vst [vmem:[#allocation2 + $0x130] sm:$0xff] %v1884
      %1887 = vst [vmem:[#allocation2 + $0x138] sm:$0xff] %v1885
      %v1888 = vmul.f32 %v1732, %v1135
      %v1889 = vmul.f32 %v1733, %v1139
      %1890 = vst [vmem:[#allocation2 + $0x140] sm:$0xff] %v1888
      %1891 = vst [vmem:[#allocation2 + $0x148] sm:$0xff] %v1889
      %v1892 = vmul.f32 %v1742, %v1151
      %v1893 = vmul.f32 %v1743, %v1155
      %1894 = vst [vmem:[#allocation2 + $0x150] sm:$0xff] %v1892
      %1895 = vst [vmem:[#allocation2 + $0x158] sm:$0xff] %v1893
      %v1896 = vmul.f32 %v1752, %v1167
      %v1897 = vmul.f32 %v1753, %v1171
      %1898 = vst [vmem:[#allocation2 + $0x160] sm:$0xff] %v1896
      %1899 = vst [vmem:[#allocation2 + $0x168] sm:$0xff] %v1897
      %v1900 = vmul.f32 %v1762, %v1183
      %v1901 = vmul.f32 %v1763, %v1187
      %1902 = vst [vmem:[#allocation2 + $0x170] sm:$0xff] %v1900
      %1903 = vst [vmem:[#allocation2 + $0x178] sm:$0xff] %v1901
      %v1904 = vmul.f32 %v1772, %v1199
      %v1905 = vmul.f32 %v1773, %v1203
      %1906 = vst [vmem:[#allocation2 + $0x180] sm:$0xff] %v1904
      %1907 = vst [vmem:[#allocation2 + $0x188] sm:$0xff] %v1905
      %v1908 = vmul.f32 %v1782, %v1215
      %v1909 = vmul.f32 %v1783, %v1219
      %1910 = vst [vmem:[#allocation2 + $0x190] sm:$0xff] %v1908
      %1911 = vst [vmem:[#allocation2 + $0x198] sm:$0xff] %v1909
      %v1912 = vmul.f32 %v1792, %v1231
      %v1913 = vmul.f32 %v1793, %v1235
      %1914 = vst [vmem:[#allocation2 + $0x1a0] sm:$0xff] %v1912
      %1915 = vst [vmem:[#allocation2 + $0x1a8] sm:$0xff] %v1913
      %1916 = vst [vmem:[#allocation2 + $0x1b0] sm:$0xff] %v344
      %1917 = vst [vmem:[#allocation2 + $0x1b8] sm:$0xff] %v345
      %1918 = vst [vmem:[#allocation2 + $0x1c0] sm:$0xff] %v346
      %1919 = vst [vmem:[#allocation2 + $0x1c8] sm:$0xff] %v347
      %v1920 = vld [vmem:[#allocation2] sm:$0xff]
      %v1921 = vld [vmem:[#allocation2 + $0x8] sm:$0xff]
      %v1922 = vld [vmem:[#allocation2 + $0x10] sm:$0xff]
      %v1923 = vld [vmem:[#allocation2 + $0x18] sm:$0xff]
      %v1924 = vld [vmem:[#allocation2 + $0x20] sm:$0xff]
      %v1925 = vld [vmem:[#allocation2 + $0x28] sm:$0xff]
      %v1926 = vld [vmem:[#allocation2 + $0x30] sm:$0xff]
      %v1927 = vld [vmem:[#allocation2 + $0x38] sm:$0xff]
      %v1928 = vld [vmem:[#allocation2 + $0x40] sm:$0xff]
      %v1929 = vld [vmem:[#allocation2 + $0x48] sm:$0xff]
      %v1930 = vld [vmem:[#allocation2 + $0x50] sm:$0xff]
      %v1931 = vld [vmem:[#allocation2 + $0x58] sm:$0xff]
      %v1932 = vld [vmem:[#allocation2 + $0x60] sm:$0xff]
      %v1933 = vld [vmem:[#allocation2 + $0x68] sm:$0xff]
      %v1934 = vld [vmem:[#allocation2 + $0x70] sm:$0xff]
      %v1935 = vld [vmem:[#allocation2 + $0x78] sm:$0xff]
      %v1936 = vld [vmem:[#allocation2 + $0x80] sm:$0xff]
      %v1937 = vld [vmem:[#allocation2 + $0x88] sm:$0xff]
      %v1938 = vld [vmem:[#allocation2 + $0x90] sm:$0xff]
      %v1939 = vld [vmem:[#allocation2 + $0x98] sm:$0xff]
      %v1940 = vld [vmem:[#allocation2 + $0xa0] sm:$0xff]
      %v1941 = vld [vmem:[#allocation2 + $0xa8] sm:$0xff]
      %v1942 = vld [vmem:[#allocation2 + $0xb0] sm:$0xff]
      %v1943 = vld [vmem:[#allocation2 + $0xb8] sm:$0xff]
      %v1944 = vld [vmem:[#allocation2 + $0xc0] sm:$0xff]
      %v1945 = vld [vmem:[#allocation2 + $0xc8] sm:$0xff]
      %v1946 = vld [vmem:[#allocation2 + $0xd0] sm:$0xff]
      %v1947 = vld [vmem:[#allocation2 + $0xd8] sm:$0xff]
      %v1948 = vld [vmem:[#allocation2 + $0xe0] sm:$0xff]
      %v1949 = vld [vmem:[#allocation2 + $0xe8] sm:$0xff]
      %v1950 = vld [vmem:[#allocation2 + $0xf0] sm:$0xff]
      %v1951 = vld [vmem:[#allocation2 + $0xf8] sm:$0xff]
      %v1952 = vld [vmem:[#allocation2 + $0x100] sm:$0xff]
      %v1953 = vld [vmem:[#allocation2 + $0x108] sm:$0xff]
      %v1954 = vld [vmem:[#allocation2 + $0x110] sm:$0xff]
      %v1955 = vld [vmem:[#allocation2 + $0x118] sm:$0xff]
      %v1956 = vld [vmem:[#allocation2 + $0x120] sm:$0xff]
      %v1957 = vld [vmem:[#allocation2 + $0x128] sm:$0xff]
      %v1958 = vld [vmem:[#allocation2 + $0x130] sm:$0xff]
      %v1959 = vld [vmem:[#allocation2 + $0x138] sm:$0xff]
      %v1960 = vld [vmem:[#allocation2 + $0x140] sm:$0xff]
      %v1961 = vld [vmem:[#allocation2 + $0x148] sm:$0xff]
      %v1962 = vld [vmem:[#allocation2 + $0x150] sm:$0xff]
      %v1963 = vld [vmem:[#allocation2 + $0x158] sm:$0xff]
      %v1964 = vld [vmem:[#allocation2 + $0x160] sm:$0xff]
      %v1965 = vld [vmem:[#allocation2 + $0x168] sm:$0xff]
      %v1966 = vld [vmem:[#allocation2 + $0x170] sm:$0xff]
      %v1967 = vld [vmem:[#allocation2 + $0x178] sm:$0xff]
      %v1968 = vld [vmem:[#allocation2 + $0x180] sm:$0xff]
      %v1969 = vld [vmem:[#allocation2 + $0x188] sm:$0xff]
      %v1970 = vld [vmem:[#allocation2 + $0x190] sm:$0xff]
      %v1971 = vld [vmem:[#allocation2 + $0x198] sm:$0xff]
      %v1972 = vld [vmem:[#allocation2 + $0x1a0] sm:$0xff]
      %v1973 = vld [vmem:[#allocation2 + $0x1a8] sm:$0xff]
      %v1974 = vld [vmem:[#allocation2 + $0x1b0] sm:$0xff]
      %v1975 = vld [vmem:[#allocation2 + $0x1b8] sm:$0xff]
      %v1976 = vld [vmem:[#allocation2 + $0x1c0] sm:$0xff]
      %v1977 = vld [vmem:[#allocation2 + $0x1c8] sm:$0xff]
      %v1978 = vpack.c.bf16 %v1922, %v1920
      %v1979 = vpack.c.bf16 %v1923, %v1921
      %v1980 = vpack.c.bf16 %v1926, %v1924
      %v1981 = vpack.c.bf16 %v1927, %v1925
      %v1982 = vpack.c.bf16 %v1930, %v1928
      %v1983 = vpack.c.bf16 %v1931, %v1929
      %v1984 = vpack.c.bf16 %v1934, %v1932
      %v1985 = vpack.c.bf16 %v1935, %v1933
      %v1986 = vpack.c.bf16 %v1938, %v1936
      %v1987 = vpack.c.bf16 %v1939, %v1937
      %v1988 = vpack.c.bf16 %v1942, %v1940
      %v1989 = vpack.c.bf16 %v1943, %v1941
      %v1990 = vpack.c.bf16 %v1946, %v1944
      %v1991 = vpack.c.bf16 %v1947, %v1945
      %v1992 = vpack.c.bf16 %v1950, %v1948
      %v1993 = vpack.c.bf16 %v1951, %v1949
      %v1994 = vpack.c.bf16 %v1954, %v1952
      %v1995 = vpack.c.bf16 %v1955, %v1953
      %v1996 = vpack.c.bf16 %v1958, %v1956
      %v1997 = vpack.c.bf16 %v1959, %v1957
      %v1998 = vpack.c.bf16 %v1962, %v1960
      %v1999 = vpack.c.bf16 %v1963, %v1961
      %v2000 = vpack.c.bf16 %v1966, %v1964
      %v2001 = vpack.c.bf16 %v1967, %v1965
      %v2002 = vpack.c.bf16 %v1970, %v1968
      %v2003 = vpack.c.bf16 %v1971, %v1969
      %v2004 = vpack.c.bf16 %v1974, %v1972
      %v2005 = vpack.c.bf16 %v1975, %v1973
      %v2006 = vpack.c.bf16 %v1976, %v1976
      %v2007 = vpack.c.bf16 %v1977, %v1977
      %v2008 = vld [vmem:[%s5] sm:$0xff]
      %2010 = vset.pattern.permute.xlu0 0
      %2011 = vperm.xlu0 %2010, %v362
      %v2012 = vpop.permute.xlu0 %2011
      %v2015 = vunpack.c.l.b16 %v2008
      %v2016 = vunpack.c.h.b16 %v2008
      %v2017 = vpack.c.b16 %v2015, %v2015
      %v2018 = vpack.c.b16 %v2016, %v2016
      %vm2020 = vcmask 850944
      %v2022 = vsel %vm2020, %v2018, 0
      %v2025 = vsel %vm436, %v2006, 0
      %v2028 = vsel %vm436, %v2007, 0
      %2030 = vmatprep.subr.bf16.mxu0 %v1993
      %2031 = vmatpush1.bf16.msra.mxu0 %v1992
      %2032 = vmatprep.subr.bf16.mxu0 %v1991
      %2033 = vmatpush1.bf16.msra.mxu0 %v1990
      %2034 = vmatprep.subr.bf16.mxu0 %v1989
      %2035 = vmatpush1.bf16.msra.mxu0 %v1988
      %2036 = vmatprep.subr.bf16.mxu0 %v1987
      %2037 = vmatpush1.bf16.msra.mxu0 %v1986
      %2038 = vmatprep.subr.bf16.mxu0 %v1985
      %2039 = vmatpush1.bf16.msra.mxu0 %v1984
      %2040 = vmatprep.subr.bf16.mxu0 %v1983
      %2041 = vmatpush1.bf16.msra.mxu0 %v1982
      %2042 = vmatprep.subr.bf16.mxu0 %v1981
      %2043 = vmatpush1.bf16.msra.mxu0 %v1980
      %2044 = vmatprep.subr.bf16.mxu0 %v1979
      %2045 = vmatpush1.bf16.msra.mxu0 %v1978
      %2046 = vmatprep.subr.bf16.mxu0 0
      %2047 = vmatpush2.bf16.msra.mxu0 0
      %2048 = vmatprep.subr.bf16.mxu0 %v2028
      %2049 = vmatpush2.bf16.msra.mxu0 %v2025
      %2050 = vmatprep.subr.bf16.mxu0 %v2005
      %2051 = vmatpush2.bf16.msra.mxu0 %v2004
      %2052 = vmatprep.subr.bf16.mxu0 %v2003
      %2053 = vmatpush2.bf16.msra.mxu0 %v2002
      %2054 = vmatprep.subr.bf16.mxu0 %v2001
      %2055 = vmatpush2.bf16.msra.mxu0 %v2000
      %2056 = vmatprep.subr.bf16.mxu0 %v1999
      %2057 = vmatpush2.bf16.msra.mxu0 %v1998
      %2058 = vmatprep.subr.bf16.mxu0 %v1997
      %2059 = vmatpush2.bf16.msra.mxu0 %v1996
      %2060 = vmatprep.subr.bf16.mxu0 %v1995
      %2061 = vmatpush2.bf16.msra.mxu0 %v1994
      %2062 = vmatprep.mubr.bf16.mxu0 %v2022
      %2063 = vmatmul.mubr.bf16.gmra.mxu0 %v2017
      %v2064 = vpop.f32.mrf.mxu0
      %v2065 = vadd.f32 %v2012, %v2064
      %v2066 = vpop.f32.mrf.mxu0
      %v2067 = vadd.f32 %v2012, %v2066
      %v2068 = vpop.f32.mrf.mxu0
      %v2069 = vpop.f32.mrf.mxu0
      %2070 = vdwg.mxu0
      %2071 = vrot.lane.b32.xlu0 %v2065, 73
      %v2072 = vpop.permute.xlu0 %2071
      %2073 = vrot.lane.b32.xlu0 %v2067, 73
      %v2074 = vpop.permute.xlu0 %2073
      %v2075 = vsel %vm611, %v2072, %v2074
      %v2076 = vsel %vm611, %v2074, %v2072
      %v2077 = vmul.f32 %v2076, %v619
      %v2078 = vmul.f32 %v2075, %v623
      %2079 = vst [vmem:[#allocation2] sm:$0xff] %v2077
      %2080 = vst [vmem:[#allocation2 + $0x8] sm:$0xff] %v2078
      %2081 = vrot.lane.b32.xlu0 %v2065, 72
      %v2082 = vpop.permute.xlu0 %2081
      %2083 = vrot.lane.b32.xlu0 %v2067, 72
      %v2084 = vpop.permute.xlu0 %2083
      %v2085 = vsel %vm640, %v2082, %v2084
      %v2086 = vsel %vm640, %v2084, %v2082
      %v2087 = vmul.f32 %v2086, %v648
      %v2088 = vmul.f32 %v2085, %v652
      %2089 = vst [vmem:[#allocation2 + $0x10] sm:$0xff] %v2087
      %2090 = vst [vmem:[#allocation2 + $0x18] sm:$0xff] %v2088
      %2091 = vrot.lane.b32.xlu0 %v2065, 71
      %v2092 = vpop.permute.xlu0 %2091
      %2093 = vrot.lane.b32.xlu0 %v2067, 71
      %v2094 = vpop.permute.xlu0 %2093
      %v2095 = vsel %vm669, %v2092, %v2094
      %v2096 = vsel %vm669, %v2094, %v2092
      %v2097 = vmul.f32 %v2096, %v677
      %v2098 = vmul.f32 %v2095, %v681
      %2099 = vst [vmem:[#allocation2 + $0x20] sm:$0xff] %v2097
      %2100 = vst [vmem:[#allocation2 + $0x28] sm:$0xff] %v2098
      %2101 = vrot.lane.b32.xlu0 %v2065, 65
      %v2102 = vpop.permute.xlu0 %2101
      %2103 = vrot.lane.b32.xlu0 %v2067, 65
      %v2104 = vpop.permute.xlu0 %2103
      %v2105 = vsel %vm698, %v2102, %v2104
      %v2106 = vsel %vm698, %v2104, %v2102
      %v2107 = vmul.f32 %v2106, %v706
      %v2108 = vmul.f32 %v2105, %v710
      %2109 = vst [vmem:[#allocation2 + $0x30] sm:$0xff] %v2107
      %2110 = vst [vmem:[#allocation2 + $0x38] sm:$0xff] %v2108
      %2111 = vrot.lane.b32.xlu0 %v2065, 64
      %v2112 = vpop.permute.xlu0 %2111
      %2113 = vrot.lane.b32.xlu0 %v2067, 64
      %v2114 = vpop.permute.xlu0 %2113
      %v2115 = vsel %vm727, %v2112, %v2114
      %v2116 = vsel %vm727, %v2114, %v2112
      %v2117 = vmul.f32 %v2116, %v735
      %v2118 = vmul.f32 %v2115, %v739
      %2119 = vst [vmem:[#allocation2 + $0x40] sm:$0xff] %v2117
      %2120 = vst [vmem:[#allocation2 + $0x48] sm:$0xff] %v2118
      %2121 = vrot.lane.b32.xlu0 %v2065, 63
      %v2122 = vpop.permute.xlu0 %2121
      %2123 = vrot.lane.b32.xlu0 %v2067, 63
      %v2124 = vpop.permute.xlu0 %2123
      %v2125 = vsel %vm756, %v2122, %v2124
      %v2126 = vsel %vm756, %v2124, %v2122
      %v2127 = vmul.f32 %v2126, %v764
      %v2128 = vmul.f32 %v2125, %v768
      %2129 = vst [vmem:[#allocation2 + $0x50] sm:$0xff] %v2127
      %2130 = vst [vmem:[#allocation2 + $0x58] sm:$0xff] %v2128
      %2131 = vrot.lane.b32.xlu0 %v2065, 57
      %v2132 = vpop.permute.xlu0 %2131
      %2133 = vrot.lane.b32.xlu0 %v2067, 57
      %v2134 = vpop.permute.xlu0 %2133
      %v2135 = vsel %vm785, %v2132, %v2134
      %v2136 = vsel %vm785, %v2134, %v2132
      %v2137 = vmul.f32 %v2136, %v793
      %v2138 = vmul.f32 %v2135, %v797
      %2139 = vst [vmem:[#allocation2 + $0x60] sm:$0xff] %v2137
      %2140 = vst [vmem:[#allocation2 + $0x68] sm:$0xff] %v2138
      %2141 = vrot.lane.b32.xlu0 %v2065, 56
      %v2142 = vpop.permute.xlu0 %2141
      %2143 = vrot.lane.b32.xlu0 %v2067, 56
      %v2144 = vpop.permute.xlu0 %2143
      %v2145 = vsel %vm814, %v2142, %v2144
      %v2146 = vsel %vm814, %v2144, %v2142
      %v2147 = vmul.f32 %v2146, %v822
      %v2148 = vmul.f32 %v2145, %v826
      %2149 = vst [vmem:[#allocation2 + $0x70] sm:$0xff] %v2147
      %2150 = vst [vmem:[#allocation2 + $0x78] sm:$0xff] %v2148
      %2151 = vrot.lane.b32.xlu0 %v2065, 55
      %v2152 = vpop.permute.xlu0 %2151
      %2153 = vrot.lane.b32.xlu0 %v2067, 55
      %v2154 = vpop.permute.xlu0 %2153
      %v2155 = vsel %vm843, %v2152, %v2154
      %v2156 = vsel %vm843, %v2154, %v2152
      %v2157 = vmul.f32 %v2156, %v851
      %v2158 = vmul.f32 %v2155, %v855
      %2159 = vst [vmem:[#allocation2 + $0x80] sm:$0xff] %v2157
      %2160 = vst [vmem:[#allocation2 + $0x88] sm:$0xff] %v2158
      %2161 = vrot.lane.b32.xlu0 %v2065, 9
      %v2162 = vpop.permute.xlu0 %2161
      %2163 = vrot.lane.b32.xlu0 %v2067, 9
      %v2164 = vpop.permute.xlu0 %2163
      %v2165 = vsel %vm872, %v2162, %v2164
      %v2166 = vsel %vm872, %v2164, %v2162
      %v2167 = vmul.f32 %v2166, %v880
      %v2168 = vmul.f32 %v2165, %v884
      %2169 = vst [vmem:[#allocation2 + $0x90] sm:$0xff] %v2167
      %2170 = vst [vmem:[#allocation2 + $0x98] sm:$0xff] %v2168
      %2171 = vrot.lane.b32.xlu0 %v2065, 8
      %v2172 = vpop.permute.xlu0 %2171
      %2173 = vrot.lane.b32.xlu0 %v2067, 8
      %v2174 = vpop.permute.xlu0 %2173
      %v2175 = vsel %vm901, %v2172, %v2174
      %v2176 = vsel %vm901, %v2174, %v2172
      %v2177 = vmul.f32 %v2176, %v909
      %v2178 = vmul.f32 %v2175, %v913
      %2179 = vst [vmem:[#allocation2 + $0xa0] sm:$0xff] %v2177
      %2180 = vst [vmem:[#allocation2 + $0xa8] sm:$0xff] %v2178
      %2181 = vrot.lane.b32.xlu0 %v2065, 7
      %v2182 = vpop.permute.xlu0 %2181
      %2183 = vrot.lane.b32.xlu0 %v2067, 7
      %v2184 = vpop.permute.xlu0 %2183
      %v2185 = vsel %vm930, %v2182, %v2184
      %v2186 = vsel %vm930, %v2184, %v2182
      %v2187 = vmul.f32 %v2186, %v938
      %v2188 = vmul.f32 %v2185, %v942
      %2189 = vst [vmem:[#allocation2 + $0xb0] sm:$0xff] %v2187
      %2190 = vst [vmem:[#allocation2 + $0xb8] sm:$0xff] %v2188
      %2191 = vrot.lane.b32.xlu0 %v2065, 1
      %v2192 = vpop.permute.xlu0 %2191
      %2193 = vrot.lane.b32.xlu0 %v2067, 1
      %v2194 = vpop.permute.xlu0 %2193
      %v2195 = vsel %vm959, %v2192, %v2194
      %v2196 = vsel %vm959, %v2194, %v2192
      %v2197 = vmul.f32 %v2196, %v967
      %v2198 = vmul.f32 %v2195, %v971
      %2199 = vst [vmem:[#allocation2 + $0xc0] sm:$0xff] %v2197
      %2200 = vst [vmem:[#allocation2 + $0xc8] sm:$0xff] %v2198
      %2201 = vst [vmem:[#allocation2 + $0xd0] sm:$0xff] %v2065
      %2202 = vst [vmem:[#allocation2 + $0xd8] sm:$0xff] %v2067
      %2203 = vrot.lane.b32.xlu0 %v2065, 127
      %v2204 = vpop.permute.xlu0 %2203
      %2205 = vrot.lane.b32.xlu0 %v2067, 127
      %v2206 = vpop.permute.xlu0 %2205
      %v2207 = vsel %vm992, %v2204, %v2206
      %v2208 = vsel %vm992, %v2206, %v2204
      %v2209 = vmul.f32 %v2207, %v1000
      %v2210 = vmul.f32 %v2208, %v1004
      %2211 = vst [vmem:[#allocation2 + $0xe0] sm:$0xff] %v2209
      %2212 = vst [vmem:[#allocation2 + $0xe8] sm:$0xff] %v2210
      %2213 = vrot.lane.b32.xlu0 %v2065, 121
      %v2214 = vpop.permute.xlu0 %2213
      %2215 = vrot.lane.b32.xlu0 %v2067, 121
      %v2216 = vpop.permute.xlu0 %2215
      %v2217 = vsel %vm1021, %v2214, %v2216
      %v2218 = vsel %vm1021, %v2216, %v2214
      %v2219 = vmul.f32 %v2217, %v1029
      %v2220 = vmul.f32 %v2218, %v1033
      %2221 = vst [vmem:[#allocation2 + $0xf0] sm:$0xff] %v2219
      %2222 = vst [vmem:[#allocation2 + $0xf8] sm:$0xff] %v2220
      %2223 = vrot.lane.b32.xlu0 %v2065, 120
      %v2224 = vpop.permute.xlu0 %2223
      %2225 = vrot.lane.b32.xlu0 %v2067, 120
      %v2226 = vpop.permute.xlu0 %2225
      %v2227 = vsel %vm1050, %v2224, %v2226
      %v2228 = vsel %vm1050, %v2226, %v2224
      %v2229 = vmul.f32 %v2227, %v1058
      %v2230 = vmul.f32 %v2228, %v1062
      %2231 = vst [vmem:[#allocation2 + $0x100] sm:$0xff] %v2229
      %2232 = vst [vmem:[#allocation2 + $0x108] sm:$0xff] %v2230
      %2233 = vrot.lane.b32.xlu0 %v2065, 119
      %v2234 = vpop.permute.xlu0 %2233
      %2235 = vrot.lane.b32.xlu0 %v2067, 119
      %v2236 = vpop.permute.xlu0 %2235
      %v2237 = vsel %vm1079, %v2234, %v2236
      %v2238 = vsel %vm1079, %v2236, %v2234
      %v2239 = vmul.f32 %v2237, %v1087
      %v2240 = vmul.f32 %v2238, %v1091
      %2241 = vst [vmem:[#allocation2 + $0x110] sm:$0xff] %v2239
      %2242 = vst [vmem:[#allocation2 + $0x118] sm:$0xff] %v2240
      %v2243 = vmul.f32 %v2075, %v1103
      %v2244 = vmul.f32 %v2076, %v1107
      %2245 = vst [vmem:[#allocation2 + $0x120] sm:$0xff] %v2243
      %2246 = vst [vmem:[#allocation2 + $0x128] sm:$0xff] %v2244
      %v2247 = vmul.f32 %v2085, %v1119
      %v2248 = vmul.f32 %v2086, %v1123
      %2249 = vst [vmem:[#allocation2 + $0x130] sm:$0xff] %v2247
      %2250 = vst [vmem:[#allocation2 + $0x138] sm:$0xff] %v2248
      %v2251 = vmul.f32 %v2095, %v1135
      %v2252 = vmul.f32 %v2096, %v1139
      %2253 = vst [vmem:[#allocation2 + $0x140] sm:$0xff] %v2251
      %2254 = vst [vmem:[#allocation2 + $0x148] sm:$0xff] %v2252
      %v2255 = vmul.f32 %v2105, %v1151
      %v2256 = vmul.f32 %v2106, %v1155
      %2257 = vst [vmem:[#allocation2 + $0x150] sm:$0xff] %v2255
      %2258 = vst [vmem:[#allocation2 + $0x158] sm:$0xff] %v2256
      %v2259 = vmul.f32 %v2115, %v1167
      %v2260 = vmul.f32 %v2116, %v1171
      %2261 = vst [vmem:[#allocation2 + $0x160] sm:$0xff] %v2259
      %2262 = vst [vmem:[#allocation2 + $0x168] sm:$0xff] %v2260
      %v2263 = vmul.f32 %v2125, %v1183
      %v2264 = vmul.f32 %v2126, %v1187
      %2265 = vst [vmem:[#allocation2 + $0x170] sm:$0xff] %v2263
      %2266 = vst [vmem:[#allocation2 + $0x178] sm:$0xff] %v2264
      %v2267 = vmul.f32 %v2135, %v1199
      %v2268 = vmul.f32 %v2136, %v1203
      %2269 = vst [vmem:[#allocation2 + $0x180] sm:$0xff] %v2267
      %2270 = vst [vmem:[#allocation2 + $0x188] sm:$0xff] %v2268
      %v2271 = vmul.f32 %v2145, %v1215
      %v2272 = vmul.f32 %v2146, %v1219
      %2273 = vst [vmem:[#allocation2 + $0x190] sm:$0xff] %v2271
      %2274 = vst [vmem:[#allocation2 + $0x198] sm:$0xff] %v2272
      %v2275 = vmul.f32 %v2155, %v1231
      %v2276 = vmul.f32 %v2156, %v1235
      %2277 = vst [vmem:[#allocation2 + $0x1a0] sm:$0xff] %v2275
      %2278 = vst [vmem:[#allocation2 + $0x1a8] sm:$0xff] %v2276
      %v2279 = vld [vmem:[#allocation2] sm:$0xff]
      %v2280 = vld [vmem:[#allocation2 + $0x8] sm:$0xff]
      %v2281 = vld [vmem:[#allocation2 + $0x10] sm:$0xff]
      %v2282 = vld [vmem:[#allocation2 + $0x18] sm:$0xff]
      %v2283 = vld [vmem:[#allocation2 + $0x20] sm:$0xff]
      %v2284 = vld [vmem:[#allocation2 + $0x28] sm:$0xff]
      %v2285 = vld [vmem:[#allocation2 + $0x30] sm:$0xff]
      %v2286 = vld [vmem:[#allocation2 + $0x38] sm:$0xff]
      %v2287 = vld [vmem:[#allocation2 + $0x40] sm:$0xff]
      %v2288 = vld [vmem:[#allocation2 + $0x48] sm:$0xff]
      %v2289 = vld [vmem:[#allocation2 + $0x50] sm:$0xff]
      %v2290 = vld [vmem:[#allocation2 + $0x58] sm:$0xff]
      %v2291 = vld [vmem:[#allocation2 + $0x60] sm:$0xff]
      %v2292 = vld [vmem:[#allocation2 + $0x68] sm:$0xff]
      %v2293 = vld [vmem:[#allocation2 + $0x70] sm:$0xff]
      %v2294 = vld [vmem:[#allocation2 + $0x78] sm:$0xff]
      %v2295 = vld [vmem:[#allocation2 + $0x80] sm:$0xff]
      %v2296 = vld [vmem:[#allocation2 + $0x88] sm:$0xff]
      %v2297 = vld [vmem:[#allocation2 + $0x90] sm:$0xff]
      %v2298 = vld [vmem:[#allocation2 + $0x98] sm:$0xff]
      %v2299 = vld [vmem:[#allocation2 + $0xa0] sm:$0xff]
      %v2300 = vld [vmem:[#allocation2 + $0xa8] sm:$0xff]
      %v2301 = vld [vmem:[#allocation2 + $0xb0] sm:$0xff]
      %v2302 = vld [vmem:[#allocation2 + $0xb8] sm:$0xff]
      %v2303 = vld [vmem:[#allocation2 + $0xc0] sm:$0xff]
      %v2304 = vld [vmem:[#allocation2 + $0xc8] sm:$0xff]
      %v2305 = vld [vmem:[#allocation2 + $0xd0] sm:$0xff]
      %v2306 = vld [vmem:[#allocation2 + $0xd8] sm:$0xff]
      %v2307 = vld [vmem:[#allocation2 + $0xe0] sm:$0xff]
      %v2308 = vld [vmem:[#allocation2 + $0xe8] sm:$0xff]
      %v2309 = vld [vmem:[#allocation2 + $0xf0] sm:$0xff]
      %v2310 = vld [vmem:[#allocation2 + $0xf8] sm:$0xff]
      %v2311 = vld [vmem:[#allocation2 + $0x100] sm:$0xff]
      %v2312 = vld [vmem:[#allocation2 + $0x108] sm:$0xff]
      %v2313 = vld [vmem:[#allocation2 + $0x110] sm:$0xff]
      %v2314 = vld [vmem:[#allocation2 + $0x118] sm:$0xff]
      %v2315 = vld [vmem:[#allocation2 + $0x120] sm:$0xff]
      %v2316 = vld [vmem:[#allocation2 + $0x128] sm:$0xff]
      %v2317 = vld [vmem:[#allocation2 + $0x130] sm:$0xff]
      %v2318 = vld [vmem:[#allocation2 + $0x138] sm:$0xff]
      %v2319 = vld [vmem:[#allocation2 + $0x140] sm:$0xff]
      %v2320 = vld [vmem:[#allocation2 + $0x148] sm:$0xff]
      %v2321 = vld [vmem:[#allocation2 + $0x150] sm:$0xff]
      %v2322 = vld [vmem:[#allocation2 + $0x158] sm:$0xff]
      %v2323 = vld [vmem:[#allocation2 + $0x160] sm:$0xff]
      %v2324 = vld [vmem:[#allocation2 + $0x168] sm:$0xff]
      %v2325 = vld [vmem:[#allocation2 + $0x170] sm:$0xff]
      %v2326 = vld [vmem:[#allocation2 + $0x178] sm:$0xff]
      %v2327 = vld [vmem:[#allocation2 + $0x180] sm:$0xff]
      %v2328 = vld [vmem:[#allocation2 + $0x188] sm:$0xff]
      %v2329 = vld [vmem:[#allocation2 + $0x190] sm:$0xff]
      %v2330 = vld [vmem:[#allocation2 + $0x198] sm:$0xff]
      %v2331 = vld [vmem:[#allocation2 + $0x1a0] sm:$0xff]
      %v2332 = vld [vmem:[#allocation2 + $0x1a8] sm:$0xff]
      %v2333 = vpack.c.bf16 %v2281, %v2279
      %v2334 = vpack.c.bf16 %v2282, %v2280
      %v2335 = vpack.c.bf16 %v2285, %v2283
      %v2336 = vpack.c.bf16 %v2286, %v2284
      %v2337 = vpack.c.bf16 %v2289, %v2287
      %v2338 = vpack.c.bf16 %v2290, %v2288
      %v2339 = vpack.c.bf16 %v2293, %v2291
      %v2340 = vpack.c.bf16 %v2294, %v2292
      %v2341 = vpack.c.bf16 %v2297, %v2295
      %v2342 = vpack.c.bf16 %v2298, %v2296
      %v2343 = vpack.c.bf16 %v2301, %v2299
      %v2344 = vpack.c.bf16 %v2302, %v2300
      %v2345 = vpack.c.bf16 %v2305, %v2303
      %v2346 = vpack.c.bf16 %v2306, %v2304
      %v2347 = vpack.c.bf16 %v2309, %v2307
      %v2348 = vpack.c.bf16 %v2310, %v2308
      %v2349 = vpack.c.bf16 %v2313, %v2311
      %v2350 = vpack.c.bf16 %v2314, %v2312
      %v2351 = vpack.c.bf16 %v2317, %v2315
      %v2352 = vpack.c.bf16 %v2318, %v2316
      %v2353 = vpack.c.bf16 %v2321, %v2319
      %v2354 = vpack.c.bf16 %v2322, %v2320
      %v2355 = vpack.c.bf16 %v2325, %v2323
      %v2356 = vpack.c.bf16 %v2326, %v2324
      %v2357 = vpack.c.bf16 %v2329, %v2327
      %v2358 = vpack.c.bf16 %v2330, %v2328
      %v2359 = vpack.c.bf16 %v2331, %v2331
      %v2360 = vpack.c.bf16 %v2332, %v2332
      %v2361 = vld [vmem:[%s6] sm:$0xff]
      %v2362 = vld [vmem:[%s6 + $0x8] sm:$0xff]
      %v2363 = vld [vmem:[%s6 + $0x10] sm:$0xff]
      %v2364 = vld [vmem:[%s6 + $0x18] sm:$0xff]
      %2366 = vset.pattern.permute.xlu0 0
      %2367 = vperm.xlu0 %2366, %v363
      %v2368 = vpop.permute.xlu0 %2367
      %2371 = vset.pattern.permute.xlu0 0
      %2372 = vperm.xlu0 %2371, %v364
      %v2373 = vpop.permute.xlu0 %2372
      %2376 = vset.pattern.permute.xlu0 0
      %2377 = vperm.xlu0 %2376, %v365
      %v2378 = vpop.permute.xlu0 %2377
      %2381 = vset.pattern.permute.xlu0 0
      %2382 = vperm.xlu0 %2381, %v366
      %v2383 = vpop.permute.xlu0 %2382
      %v2389 = vunpack.c.l.b16 %v2361
      %v2390 = vunpack.c.h.b16 %v2361
      %v2391 = vunpack.c.l.b16 %v2362
      %v2392 = vunpack.c.h.b16 %v2362
      %v2393 = vunpack.c.l.b16 %v2363
      %v2394 = vunpack.c.h.b16 %v2363
      %v2395 = vunpack.c.l.b16 %v2364
      %v2396 = vunpack.c.h.b16 %v2364
      %v2397 = vpack.c.b16 %v2391, %v2389
      %v2398 = vpack.c.b16 %v2392, %v2390
      %v2399 = vpack.c.b16 %v2395, %v2393
      %v2400 = vpack.c.b16 %v2396, %v2394
      %vm2403 = vcmask 719872
      %v2405 = vsel %vm2403, %v2398, 0
      %v2408 = vsel %vm2403, %v2400, 0
      %v2411 = vsel %vm436, %v2359, 0
      %v2414 = vsel %vm436, %v2360, 0
      %2416 = vmatprep.subr.bf16.mxu0 %v2348
      %2417 = vmatpush1.bf16.msra.mxu0 %v2347
      %2418 = vmatprep.subr.bf16.mxu0 %v2346
      %2419 = vmatpush1.bf16.msra.mxu0 %v2345
      %2420 = vmatprep.subr.bf16.mxu0 %v2344
      %2421 = vmatpush1.bf16.msra.mxu0 %v2343
      %2422 = vmatprep.subr.bf16.mxu0 %v2342
      %2423 = vmatpush1.bf16.msra.mxu0 %v2341
      %2424 = vmatprep.subr.bf16.mxu0 %v2340
      %2425 = vmatpush1.bf16.msra.mxu0 %v2339
      %2426 = vmatprep.subr.bf16.mxu0 %v2338
      %2427 = vmatpush1.bf16.msra.mxu0 %v2337
      %2428 = vmatprep.subr.bf16.mxu0 %v2336
      %2429 = vmatpush1.bf16.msra.mxu0 %v2335
      %2430 = vmatprep.subr.bf16.mxu0 %v2334
      %2431 = vmatpush1.bf16.msra.mxu0 %v2333
      %2432 = vmatprep.subr.bf16.mxu0 0
      %2433 = vmatpush2.bf16.msra.mxu0 0
      %2434 = vmatprep.subr.bf16.mxu0 0
      %2435 = vmatpush2.bf16.msra.mxu0 0
      %2436 = vmatprep.subr.bf16.mxu0 %v2414
      %2437 = vmatpush2.bf16.msra.mxu0 %v2411
      %2438 = vmatprep.subr.bf16.mxu0 %v2358
      %2439 = vmatpush2.bf16.msra.mxu0 %v2357
      %2440 = vmatprep.subr.bf16.mxu0 %v2356
      %2441 = vmatpush2.bf16.msra.mxu0 %v2355
      %2442 = vmatprep.subr.bf16.mxu0 %v2354
      %2443 = vmatpush2.bf16.msra.mxu0 %v2353
      %2444 = vmatprep.subr.bf16.mxu0 %v2352
      %2445 = vmatpush2.bf16.msra.mxu0 %v2351
      %2446 = vmatprep.subr.bf16.mxu0 %v2350
      %2447 = vmatpush2.bf16.msra.mxu0 %v2349
      %2448 = vmatprep.mubr.bf16.mxu0 %v2405
      %2449 = vmatmul.mubr.bf16.gmra.mxu0 %v2397
      %v2450 = vpop.f32.mrf.mxu0
      %v2451 = vadd.f32 %v2368, %v2450
      %v2452 = vpop.f32.mrf.mxu0
      %v2453 = vadd.f32 %v2368, %v2452
      %v2454 = vpop.f32.mrf.mxu0
      %v2455 = vadd.f32 %v2373, %v2454
      %v2456 = vpop.f32.mrf.mxu0
      %v2457 = vadd.f32 %v2373, %v2456
      %2458 = vmatprep.mubr.bf16.mxu0 %v2408
      %2459 = vmatmul.mubr.bf16.gmra.mxu0 %v2399
      %v2460 = vpop.f32.mrf.mxu0
      %v2461 = vadd.f32 %v2378, %v2460
      %v2462 = vpop.f32.mrf.mxu0
      %v2463 = vadd.f32 %v2378, %v2462
      %v2464 = vpop.f32.mrf.mxu0
      %v2465 = vadd.f32 %v2383, %v2464
      %v2466 = vpop.f32.mrf.mxu0
      %v2467 = vadd.f32 %v2383, %v2466
      %2468 = vdwg.mxu0
      %2469 = vst [vmem:[%s342] sm:$0xff] %v2451
      %2470 = vst [vmem:[%s342 + $0x8] sm:$0xff] %v2453
      %2471 = vst [vmem:[%s342 + $0x10] sm:$0xff] %v2455
      %2472 = vst [vmem:[%s342 + $0x18] sm:$0xff] %v2457
      %2473 = vst [vmem:[%s342 + $0x20] sm:$0xff] %v2461
      %2474 = vst [vmem:[%s342 + $0x28] sm:$0xff] %v2463
      %2475 = vst [vmem:[%s342 + $0x30] sm:$0xff] %v2465
      %2476 = vst [vmem:[%s342 + $0x38] sm:$0xff] %v2467
      %p2477 = scmp.lt.s32.totalorder %s19, 1
      %s2478 = scalar_select %p2477, %s19, 1
      %s2479 = smul.addr %s2478, 8
      %s2480 = smul.addr %s2479, 8
      %s2481 = scalar_lea.vmem %s8, %s2480
      // Predicated region
      $region53: #{_lambda_.1} parent=51 // pred_check
        %p2482 = pneg %p220
      $region54: #{_lambda_.1} parent=51 // pred_check_branch
        %2484 = sbr.rel (%p2482) target = $region56
      $region55: #{_lambda_.1} parent=51 // pred_region
        _
      $region56: #{_lambda_.1} parent=51 // pred_fallthru
        _
    $region52: #{_lambda_.1} parent=5 // pred_fallthru
      _
    %p2485 = scmp.le.s32.totalorder 2, %s14
    // Predicated region
    $region57: #{_lambda_.1} parent=5 // pred_check
      %p2486 = pneg %p2485
    $region58: #{_lambda_.1} parent=5 // pred_check_branch
      %2488 = sbr.rel (%p2486) target = $region60
    $region59: #{_lambda_.1} parent=5 // pred_region
      %s2489 = ssub.s32 %s14, 2
      // Predicated region
      $region61: #{_lambda_.1} parent=59 // pred_check
        %p2490 = pneg %p226
      $region62: #{_lambda_.1} parent=59 // pred_check_branch
        %2492 = sbr.rel (%p2490) target = $region64
      $region63: #{_lambda_.1} parent=59 // pred_region
        %p2493 = scmp.lt.s32.totalorder %s20, 1
        %s2494 = scalar_select %p2493, %s20, 1
        %s2495 = smul.addr %s2494, 8
        %s2496 = smul.addr %s2495, 8
        %s2497 = scalar_lea.vmem %s8, %s2496
      $region64: #{_lambda_.1} parent=59 // pred_fallthru
        _
    $region60: #{_lambda_.1} parent=5 // pred_fallthru
      _
  $region6: #{_lambda_.1} parent=0 // loop_footer
    %s18 = sadd.s32 1, %s14
  $region7: #{_lambda_.1} parent=0 // loop_footer_branch
    %13 = sbr.rel target = $region3
  $region8: #{_lambda_.1} parent=0 // loop_exit
    _

</llo_original>
